<compile_context>
chip_gen: v5e
topology: v5e:2x2
jax: 0.10.0
libtpu: 0.0.40
codegen_flags: <defaults>
</compile_context>

<pallas_src>
import functools
import math

import jax
import jax.numpy as jnp
from jax.experimental import pallas as pl
from jax.experimental.pallas import tpu as pltpu

EPS = 1e-12
NEG_INF = -1e9

CFG = dict(vocab=100, hidden=32, n_layers=4, n_heads=4,
           intermediate=64, max_pos=16, type_vocab=2)


# ----------------------------- traced helpers -------------------------------

def _layernorm(h, g, b, eps):
    mu = jnp.mean(h, axis=-1, keepdims=True)
    var = jnp.mean((h - mu) ** 2, axis=-1, keepdims=True)
    return (h - mu) * jax.lax.rsqrt(var + eps) * g + b


def _rows_to_lanes(a, group):
    """[R, C] -> [R//group, group*C]: pack `group` consecutive rows onto the lane
    axis using static slices + lane concatenation (lane-dense output slab)."""
    R, _ = a.shape
    packed = []
    for r0 in range(0, R, group):
        packed.append(jnp.concatenate(
            [a[r0 + i:r0 + i + 1, :] for i in range(group)], axis=1))
    return jnp.concatenate(packed, axis=0)


# ------------------------------ fused kernel --------------------------------
# grid = (n_layers,), dimension_semantics=("arbitrary",).
#   step 0 : in-VMEM word-embedding gather + pos/ttype add + LayerNorm
#   step l : transformer layer l (weights streamed per step via BlockSpec)
#   last   : writes 0.25 * sum(last 4 hidden states) as a lane-dense slab.

def _bert_fwd_kernel(ids_ref, sl_ref,
                     wemb_ref, pemb_ref, temb_ref, eg_ref, eb_ref,
                     wqkv_ref, bqkv_ref, wo_ref, bo_ref, ln1g_ref, ln1b_ref,
                     w1_ref, b1_ref, w2_ref, b2_ref, ln2g_ref, ln2b_ref,
                     avg_ref, probs_ref,
                     x_scr, sum_scr,
                     *, B, T, nh, n_layers, eps):
    l = pl.program_id(0)
    H = x_scr.shape[-1]
    dh = H // nh
    scale = 1.0 / math.sqrt(dh)

    # ---- embeddings (first grid step only) ----------------------------------
    @pl.when(l == 0)
    def _():
        rows = [wemb_ref[pl.ds(ids_ref[r], 1), :] for r in range(B * T)]
        wrows = jnp.concatenate(rows, axis=0)                     # [B*T, H]
        pos = jnp.concatenate([pemb_ref[0:T, :]] * B, axis=0)     # positions 0..T-1
        emb = wrows + pos + temb_ref[0:1, :]                      # token_type_ids == 0
        xe = _layernorm(emb, eg_ref[...], eb_ref[...], eps)
        x_scr[...] = xe
        if n_layers <= 3:   # embedding output is itself among the last-4 states
            sum_scr[...] = xe
        else:
            sum_scr[...] = jnp.zeros_like(xe)

    x = x_scr[...]                                                 # [B*T, H] f32

    # ---- Q / K / V projections (batch-flattened M, bf16 MXU, f32 acc) -------
    wqkv = wqkv_ref[0]          # (3, H, H) bf16
    bqkv = bqkv_ref[0]          # (3, 1, H) f32
    xb = x.astype(jnp.bfloat16)
    q = jnp.dot(xb, wqkv[0], preferred_element_type=jnp.float32) + bqkv[0]
    k = jnp.dot(xb, wqkv[1], preferred_element_type=jnp.float32) + bqkv[1]
    v = jnp.dot(xb, wqkv[2], preferred_element_type=jnp.float32) + bqkv[2]
    qb, kb, vb = (t.astype(jnp.bfloat16) for t in (q, k, v))

    # ---- per-(batch, head) attention; mask built in-kernel from seq lengths -
    ctx_rows, prob_rows = [], []
    for b in range(B):
        r0 = b * T
        kpos = jax.lax.broadcasted_iota(jnp.int32, (1, T), 1)
        maskb = jnp.where(kpos < sl_ref[b], 0.0, NEG_INF)          # [1, T] f32
        h_ctx, h_prob = [], []
        for h in range(nh):
            c0 = h * dh
            qs = qb[r0:r0 + T, c0:c0 + dh]
            ks = kb[r0:r0 + T, c0:c0 + dh]
            vs = vb[r0:r0 + T, c0:c0 + dh]
            sc = jnp.einsum('qd,kd->qk', qs, ks,
                            preferred_element_type=jnp.float32) * scale + maskb
            m = jnp.max(sc, axis=-1, keepdims=True)
            e = jnp.exp(sc - m)                                     # f32 (v5e-safe)
            p = e / jnp.sum(e, axis=-1, keepdims=True)              # exact (user-visible)
            h_prob.append(p)
            h_ctx.append(jnp.dot(p.astype(jnp.bfloat16), vs,
                                 preferred_element_type=jnp.float32))
        ctx_rows.append(jnp.concatenate(h_ctx, axis=1))             # [T, H]
        prob_rows.append(jnp.concatenate(h_prob, axis=1))           # [T, nh*T]
    ctx = jnp.concatenate(ctx_rows, axis=0)                         # [B*T, H]
    probs = jnp.concatenate(prob_rows, axis=0)                      # [B*T, nh*T]

    # lane-dense probs slab (B, T*nh*T) per layer, bf16 writeback
    probs_ref[0] = _rows_to_lanes(probs, T).astype(jnp.bfloat16)

    # ---- output projection + residual LN1 + FFN + residual LN2 --------------
    attn = jnp.dot(ctx.astype(jnp.bfloat16), wo_ref[0],
                   preferred_element_type=jnp.float32) + bo_ref[0]
    h1 = _layernorm(attn + x, ln1g_ref[0], ln1b_ref[0], eps)

    ff = jnp.dot(h1.astype(jnp.bfloat16), w1_ref[0],
                 preferred_element_type=jnp.float32) + b1_ref[0]
    # TODO(synk): HF BERT uses the exact erf-based GELU; tanh approximation used here.
    ff = jax.nn.gelu(ff, approximate=True)
    out = jnp.dot(ff.astype(jnp.bfloat16), w2_ref[0],
                  preferred_element_type=jnp.float32) + b2_ref[0]
    out = _layernorm(out + h1, ln2g_ref[0], ln2b_ref[0], eps)

    x_scr[...] = out                                                # carry to next layer

    @pl.when(l >= n_layers - 4)        # hidden state (l+1) is among the last 4
    def _():
        sum_scr[...] = sum_scr[...] + out

    @pl.when(l == n_layers - 1)        # fused 0.25*(h[-1]+h[-2]+h[-3]+h[-4])
    def _():
        avg_ref[...] = _rows_to_lanes(0.25 * sum_scr[...], T)


# --------------------------------- wrapper ----------------------------------

def _const_spec(shape):
    nd = len(shape)
    return pl.BlockSpec(tuple(shape), lambda l, ids, sl, _nd=nd: (0,) * _nd)


def _layer_spec(shape):
    nd = len(shape)
    blk = (1,) + tuple(shape[1:])
    return pl.BlockSpec(blk, lambda l, ids, sl, _nd=nd: (l,) + (0,) * (_nd - 1))


_LAYER_PARAM_NAMES = ('wqkv', 'bqkv', 'wo', 'bo', 'ln1_g', 'ln1_b',
                      'w1', 'b1', 'w2', 'b2', 'ln2_g', 'ln2_b')


def bert_embedding_forward(params, word_ids, sequence_lengths, cfg=CFG):
    """Mirrors BertEmbedding.forward (fine_tune=False -> inference only)."""
    B, T = word_ids.shape
    H, nh, L = cfg['hidden'], cfg['n_heads'], cfg['n_layers']
    assert L >= 3 and H % nh == 0 and T <= cfg['max_pos']

    ids_flat = word_ids.reshape(-1).astype(jnp.int32)
    seq_lens = sequence_lengths.astype(jnp.int32)

    emb_args = (params['word_emb'], params['pos_emb'], params['ttype_emb'],
                params['emb_ln_g'], params['emb_ln_b'])
    layer_args = tuple(params[n] for n in _LAYER_PARAM_NAMES)

    in_specs = ([_const_spec(a.shape) for a in emb_args] +
                [_layer_spec(a.shape) for a in layer_args])

    grid_spec = pltpu.PrefetchScalarGridSpec(
        num_scalar_prefetch=2,
        grid=(L,),
        in_specs=in_specs,
        out_specs=[
            pl.BlockSpec((B, T * H), lambda l, ids, sl: (0, 0)),          # avg (resident)
            pl.BlockSpec((1, B, nh * T * T), lambda l, ids, sl: (l, 0, 0)),  # per-layer probs
        ],
        scratch_shapes=[pltpu.VMEM((B * T, H), jnp.float32),   # current hidden state
                        pltpu.VMEM((B * T, H), jnp.float32)],  # running last-4 sum
    )

    avg, probs = pl.pallas_call(
        functools.partial(_bert_fwd_kernel, B=B, T=T, nh=nh, n_layers=L, eps=EPS),
        grid_spec=grid_spec,
        out_shape=(jax.ShapeDtypeStruct((B, T * H), jnp.float32),
                   jax.ShapeDtypeStruct((L, B, nh * T * T), jnp.bfloat16)),
        compiler_params=pltpu.CompilerParams(dimension_semantics=("arbitrary",)),
    )(ids_flat, seq_lens, *emb_args, *layer_args)

    word_embeddings_new = avg.reshape(B, T, H)
    # kernel probs layout per (layer, batch) row is (q, head, k) on 256 lanes
    att = probs.reshape(L, B, T, nh, T).transpose(0, 1, 3, 2, 4)   # (L, B, nh, T, T)
    attentions = tuple(att[i] for i in range(L))
    return word_embeddings_new, attentions


# ---------------------------- synthetic BERT params -------------------------

def init_params(key, cfg=CFG):
    H, I, V, P, Tv, L = (cfg['hidden'], cfg['intermediate'], cfg['vocab'],
                         cfg['max_pos'], cfg['type_vocab'], cfg['n_layers'])
    std = 0.02
    ks = jax.random.split(key, 7)
    nrm = lambda k, s: (std * jax.random.normal(k, s)).astype(jnp.float32)
    ones = lambda s: jnp.ones(s, jnp.float32)
    zeros = lambda s: jnp.zeros(s, jnp.float32)
    return dict(
        word_emb=nrm(ks[0], (V, H)),
        pos_emb=nrm(ks[1], (P, H)),
        ttype_emb=nrm(ks[2], (Tv, H)),
        emb_ln_g=ones((1, H)), emb_ln_b=zeros((1, H)),
        # per-layer weights stacked on a leading [L] axis; bf16 for the MXU,
        # f32 accumulation in-kernel.
        wqkv=nrm(ks[3], (L, 3, H, H)).astype(jnp.bfloat16),
        bqkv=zeros((L, 3, 1, H)),
        wo=nrm(ks[4], (L, H, H)).astype(jnp.bfloat16),
        bo=zeros((L, 1, H)),
        ln1_g=ones((L, 1, H)), ln1_b=zeros((L, 1, H)),
        w1=nrm(ks[5], (L, H, I)).astype(jnp.bfloat16),
        b1=zeros((L, 1, I)),
        w2=nrm(ks[6], (L, I, H)).astype(jnp.bfloat16),
        b2=zeros((L, 1, H)),
        ln2_g=ones((L, 1, H)), ln2_b=zeros((L, 1, H)),
    )


# ----------------------------------- main ------------------------------------

if __name__ == "__main__":
    key = jax.random.PRNGKey(0)
    pkey, ikey = jax.random.split(key)
    params = init_params(pkey)

    B, T = 2, 8
    word_ids = jax.random.randint(ikey, (B, T), 0, CFG['vocab'], dtype=jnp.int32)
    sequence_lengths = jnp.array([8, 5], dtype=jnp.int32)

    fwd = jax.jit(functools.partial(bert_embedding_forward, params))
    word_embeddings_new, attentions = fwd(word_ids, sequence_lengths)
    jax.block_until_ready((word_embeddings_new, attentions))

    assert word_embeddings_new.shape == (B, T, CFG['hidden'])
    assert len(attentions) == CFG['n_layers']
    assert attentions[0].shape == (B, CFG['n_heads'], T, T)
    assert bool(jnp.all(jnp.isfinite(word_embeddings_new)))
    print("KERNEL_OK")
</pallas_src>

<mosaic_0001>
module attributes {stable_mosaic.version = 11 : i64} {
  func.func @_bert_fwd_kernel(%arg0: i32, %arg1: memref<16xi32, #tpu.memory_space<smem>>, %arg2: memref<2xi32, #tpu.memory_space<smem>>, %arg3: memref<100x32xf32, #tpu.memory_space<vmem>>, %arg4: memref<16x32xf32, #tpu.memory_space<vmem>>, %arg5: memref<2x32xf32, #tpu.memory_space<vmem>>, %arg6: memref<1x32xf32, #tpu.memory_space<vmem>>, %arg7: memref<1x32xf32, #tpu.memory_space<vmem>>, %arg8: memref<1x3x32x32xbf16, #tpu.memory_space<vmem>>, %arg9: memref<1x3x1x32xf32, #tpu.memory_space<vmem>>, %arg10: memref<1x32x32xbf16, #tpu.memory_space<vmem>>, %arg11: memref<1x1x32xf32, #tpu.memory_space<vmem>>, %arg12: memref<1x1x32xf32, #tpu.memory_space<vmem>>, %arg13: memref<1x1x32xf32, #tpu.memory_space<vmem>>, %arg14: memref<1x32x64xbf16, #tpu.memory_space<vmem>>, %arg15: memref<1x1x64xf32, #tpu.memory_space<vmem>>, %arg16: memref<1x64x32xbf16, #tpu.memory_space<vmem>>, %arg17: memref<1x1x32xf32, #tpu.memory_space<vmem>>, %arg18: memref<1x1x32xf32, #tpu.memory_space<vmem>>, %arg19: memref<1x1x32xf32, #tpu.memory_space<vmem>>, %arg20: memref<2x256xf32, #tpu.memory_space<vmem>>, %arg21: memref<1x2x256xbf16, #tpu.memory_space<vmem>>, %arg22: memref<16x32xf32, #tpu.memory_space<vmem>>, %arg23: memref<16x32xf32, #tpu.memory_space<vmem>>) attributes {dimension_semantics = [#tpu.dimension_semantics<arbitrary>], iteration_bounds = array<i64: 4>, scalar_prefetch = 2 : i64, scratch_operands = 2 : i64, tpu.core_type = #tpu.core_type<tc>, window_params = [{pipeline_mode = #tpu.pipeline_mode<synchronous>, transform_indices = @transform_0, window_bounds = array<i64: 100, 32>}, {pipeline_mode = #tpu.pipeline_mode<synchronous>, transform_indices = @transform_1, window_bounds = array<i64: 16, 32>}, {pipeline_mode = #tpu.pipeline_mode<synchronous>, transform_indices = @transform_2, window_bounds = array<i64: 2, 32>}, {pipeline_mode = #tpu.pipeline_mode<synchronous>, transform_indices = @transform_3, window_bounds = array<i64: 1, 32>}, {pipeline_mode = #tpu.pipeline_mode<synchronous>, transform_indices = @transform_4, window_bounds = array<i64: 1, 32>}, {transform_indices = @transform_5, window_bounds = array<i64: 1, 3, 32, 32>}, {transform_indices = @transform_6, window_bounds = array<i64: 1, 3, 1, 32>}, {transform_indices = @transform_7, window_bounds = array<i64: 1, 32, 32>}, {transform_indices = @transform_8, window_bounds = array<i64: 1, 1, 32>}, {transform_indices = @transform_9, window_bounds = array<i64: 1, 1, 32>}, {transform_indices = @transform_10, window_bounds = array<i64: 1, 1, 32>}, {transform_indices = @transform_11, window_bounds = array<i64: 1, 32, 64>}, {transform_indices = @transform_12, window_bounds = array<i64: 1, 1, 64>}, {transform_indices = @transform_13, window_bounds = array<i64: 1, 64, 32>}, {transform_indices = @transform_14, window_bounds = array<i64: 1, 1, 32>}, {transform_indices = @transform_15, window_bounds = array<i64: 1, 1, 32>}, {transform_indices = @transform_16, window_bounds = array<i64: 1, 1, 32>}, {pipeline_mode = #tpu.pipeline_mode<synchronous>, transform_indices = @transform_17, window_bounds = array<i64: 2, 256>}, {transform_indices = @transform_18, window_bounds = array<i64: 1, 2, 256>}]} {
    %c0_i32 = arith.constant 0 : i32
    %0 = arith.cmpi eq, %arg0, %c0_i32 : i32
    %1 = arith.extui %0 : i1 to i32
    %c0_i32_0 = arith.constant 0 : i32
    %2 = arith.cmpi ne, %1, %c0_i32_0 : i32
    scf.if %2 {
      %c0_112 = arith.constant 0 : index
      %326 = memref.load %arg1[%c0_112] : memref<16xi32, #tpu.memory_space<smem>>
      %327 = arith.index_cast %326 : i32 to index
      %c0_113 = arith.constant 0 : index
      %328 = vector.load %arg3[%327, %c0_113] : memref<100x32xf32, #tpu.memory_space<vmem>>, vector<1x32xf32>
      %c1_114 = arith.constant 1 : index
      %329 = memref.load %arg1[%c1_114] : memref<16xi32, #tpu.memory_space<smem>>
      %330 = arith.index_cast %329 : i32 to index
      %c0_115 = arith.constant 0 : index
      %331 = vector.load %arg3[%330, %c0_115] : memref<100x32xf32, #tpu.memory_space<vmem>>, vector<1x32xf32>
      %c2 = arith.constant 2 : index
      %332 = memref.load %arg1[%c2] : memref<16xi32, #tpu.memory_space<smem>>
      %333 = arith.index_cast %332 : i32 to index
      %c0_116 = arith.constant 0 : index
      %334 = vector.load %arg3[%333, %c0_116] : memref<100x32xf32, #tpu.memory_space<vmem>>, vector<1x32xf32>
      %c3 = arith.constant 3 : index
      %335 = memref.load %arg1[%c3] : memref<16xi32, #tpu.memory_space<smem>>
      %336 = arith.index_cast %335 : i32 to index
      %c0_117 = arith.constant 0 : index
      %337 = vector.load %arg3[%336, %c0_117] : memref<100x32xf32, #tpu.memory_space<vmem>>, vector<1x32xf32>
      %c4 = arith.constant 4 : index
      %338 = memref.load %arg1[%c4] : memref<16xi32, #tpu.memory_space<smem>>
      %339 = arith.index_cast %338 : i32 to index
      %c0_118 = arith.constant 0 : index
      %340 = vector.load %arg3[%339, %c0_118] : memref<100x32xf32, #tpu.memory_space<vmem>>, vector<1x32xf32>
      %c5 = arith.constant 5 : index
      %341 = memref.load %arg1[%c5] : memref<16xi32, #tpu.memory_space<smem>>
      %342 = arith.index_cast %341 : i32 to index
      %c0_119 = arith.constant 0 : index
      %343 = vector.load %arg3[%342, %c0_119] : memref<100x32xf32, #tpu.memory_space<vmem>>, vector<1x32xf32>
      %c6 = arith.constant 6 : index
      %344 = memref.load %arg1[%c6] : memref<16xi32, #tpu.memory_space<smem>>
      %345 = arith.index_cast %344 : i32 to index
      %c0_120 = arith.constant 0 : index
      %346 = vector.load %arg3[%345, %c0_120] : memref<100x32xf32, #tpu.memory_space<vmem>>, vector<1x32xf32>
      %c7 = arith.constant 7 : index
      %347 = memref.load %arg1[%c7] : memref<16xi32, #tpu.memory_space<smem>>
      %348 = arith.index_cast %347 : i32 to index
      %c0_121 = arith.constant 0 : index
      %349 = vector.load %arg3[%348, %c0_121] : memref<100x32xf32, #tpu.memory_space<vmem>>, vector<1x32xf32>
      %c8 = arith.constant 8 : index
      %350 = memref.load %arg1[%c8] : memref<16xi32, #tpu.memory_space<smem>>
      %351 = arith.index_cast %350 : i32 to index
      %c0_122 = arith.constant 0 : index
      %352 = vector.load %arg3[%351, %c0_122] : memref<100x32xf32, #tpu.memory_space<vmem>>, vector<1x32xf32>
      %c9 = arith.constant 9 : index
      %353 = memref.load %arg1[%c9] : memref<16xi32, #tpu.memory_space<smem>>
      %354 = arith.index_cast %353 : i32 to index
      %c0_123 = arith.constant 0 : index
      %355 = vector.load %arg3[%354, %c0_123] : memref<100x32xf32, #tpu.memory_space<vmem>>, vector<1x32xf32>
      %c10 = arith.constant 10 : index
      %356 = memref.load %arg1[%c10] : memref<16xi32, #tpu.memory_space<smem>>
      %357 = arith.index_cast %356 : i32 to index
      %c0_124 = arith.constant 0 : index
      %358 = vector.load %arg3[%357, %c0_124] : memref<100x32xf32, #tpu.memory_space<vmem>>, vector<1x32xf32>
      %c11 = arith.constant 11 : index
      %359 = memref.load %arg1[%c11] : memref<16xi32, #tpu.memory_space<smem>>
      %360 = arith.index_cast %359 : i32 to index
      %c0_125 = arith.constant 0 : index
      %361 = vector.load %arg3[%360, %c0_125] : memref<100x32xf32, #tpu.memory_space<vmem>>, vector<1x32xf32>
      %c12 = arith.constant 12 : index
      %362 = memref.load %arg1[%c12] : memref<16xi32, #tpu.memory_space<smem>>
      %363 = arith.index_cast %362 : i32 to index
      %c0_126 = arith.constant 0 : index
      %364 = vector.load %arg3[%363, %c0_126] : memref<100x32xf32, #tpu.memory_space<vmem>>, vector<1x32xf32>
      %c13 = arith.constant 13 : index
      %365 = memref.load %arg1[%c13] : memref<16xi32, #tpu.memory_space<smem>>
      %366 = arith.index_cast %365 : i32 to index
      %c0_127 = arith.constant 0 : index
      %367 = vector.load %arg3[%366, %c0_127] : memref<100x32xf32, #tpu.memory_space<vmem>>, vector<1x32xf32>
      %c14 = arith.constant 14 : index
      %368 = memref.load %arg1[%c14] : memref<16xi32, #tpu.memory_space<smem>>
      %369 = arith.index_cast %368 : i32 to index
      %c0_128 = arith.constant 0 : index
      %370 = vector.load %arg3[%369, %c0_128] : memref<100x32xf32, #tpu.memory_space<vmem>>, vector<1x32xf32>
      %c15 = arith.constant 15 : index
      %371 = memref.load %arg1[%c15] : memref<16xi32, #tpu.memory_space<smem>>
      %372 = arith.index_cast %371 : i32 to index
      %c0_129 = arith.constant 0 : index
      %373 = vector.load %arg3[%372, %c0_129] : memref<100x32xf32, #tpu.memory_space<vmem>>, vector<1x32xf32>
      %374 = tpu.concatenate %328, %331, %334, %337, %340, %343, %346, %349, %352, %355, %358, %361, %364, %367, %370, %373 in 0 : vector<1x32xf32>, vector<1x32xf32>, vector<1x32xf32>, vector<1x32xf32>, vector<1x32xf32>, vector<1x32xf32>, vector<1x32xf32>, vector<1x32xf32>, vector<1x32xf32>, vector<1x32xf32>, vector<1x32xf32>, vector<1x32xf32>, vector<1x32xf32>, vector<1x32xf32>, vector<1x32xf32>, vector<1x32xf32> -> vector<16x32xf32>
      %c0_130 = arith.constant 0 : index
      %c0_131 = arith.constant 0 : index
      %375 = vector.load %arg4[%c0_130, %c0_131] : memref<16x32xf32, #tpu.memory_space<vmem>>, vector<8x32xf32>
      %376 = tpu.concatenate %375, %375 in 0 : vector<8x32xf32>, vector<8x32xf32> -> vector<16x32xf32>
      %377 = arith.addf %374, %376 : vector<16x32xf32>
      %c0_132 = arith.constant 0 : index
      %c0_133 = arith.constant 0 : index
      %378 = vector.load %arg5[%c0_132, %c0_133] : memref<2x32xf32, #tpu.memory_space<vmem>>, vector<1x32xf32>
      %379 = vector.broadcast %378 : vector<1x32xf32> to vector<16x32xf32>
      %380 = arith.addf %377, %379 : vector<16x32xf32>
      %c0_134 = arith.constant 0 : index
      %c0_135 = arith.constant 0 : index
      %381 = vector.load %arg6[%c0_134, %c0_135] : memref<1x32xf32, #tpu.memory_space<vmem>>, vector<1x32xf32>
      %c0_136 = arith.constant 0 : index
      %c0_137 = arith.constant 0 : index
      %382 = vector.load %arg7[%c0_136, %c0_137] : memref<1x32xf32, #tpu.memory_space<vmem>>, vector<1x32xf32>
      %cst_138 = arith.constant dense<0.000000e+00> : vector<16xf32>
      %383 = vector.multi_reduction <add>, %380, %cst_138 [1] : vector<16x32xf32> to vector<16xf32>
      %384 = vector.shape_cast %383 : vector<16xf32> to vector<16x1xf32>
      %cst_139 = arith.constant 3.200000e+01 : f32
      %385 = vector.broadcast %cst_139 : f32 to vector<16x1xf32>
      %386 = arith.divf %384, %385 : vector<16x1xf32>
      %387 = vector.broadcast %386 : vector<16x1xf32> to vector<16x32xf32>
      %388 = arith.subf %380, %387 : vector<16x32xf32>
      %389 = arith.mulf %388, %388 : vector<16x32xf32>
      %cst_140 = arith.constant dense<0.000000e+00> : vector<16xf32>
      %390 = vector.multi_reduction <add>, %389, %cst_140 [1] : vector<16x32xf32> to vector<16xf32>
      %391 = vector.shape_cast %390 : vector<16xf32> to vector<16x1xf32>
      %cst_141 = arith.constant 3.200000e+01 : f32
      %392 = vector.broadcast %cst_141 : f32 to vector<16x1xf32>
      %393 = arith.divf %391, %392 : vector<16x1xf32>
      %394 = vector.broadcast %386 : vector<16x1xf32> to vector<16x32xf32>
      %395 = arith.subf %380, %394 : vector<16x32xf32>
      %cst_142 = arith.constant 9.99999996E-13 : f32
      %396 = vector.broadcast %cst_142 : f32 to vector<16x1xf32>
      %397 = arith.addf %393, %396 : vector<16x1xf32>
      %398 = math.rsqrt %397 : vector<16x1xf32>
      %399 = vector.broadcast %398 : vector<16x1xf32> to vector<16x32xf32>
      %400 = arith.mulf %395, %399 : vector<16x32xf32>
      %401 = vector.broadcast %381 : vector<1x32xf32> to vector<16x32xf32>
      %402 = arith.mulf %400, %401 : vector<16x32xf32>
      %403 = vector.broadcast %382 : vector<1x32xf32> to vector<16x32xf32>
      %404 = arith.addf %402, %403 : vector<16x32xf32>
      %c0_143 = arith.constant 0 : index
      %c0_144 = arith.constant 0 : index
      %405 = vector.load %arg22[%c0_143, %c0_144] : memref<16x32xf32, #tpu.memory_space<vmem>>, vector<16x32xf32>
      tpu.vector_store %arg22[%c0_143, %c0_144], %404 {strides = array<i32>} : memref<16x32xf32, #tpu.memory_space<vmem>>, vector<16x32xf32>,
      %cst_145 = arith.constant 0.000000e+00 : f32
      %406 = vector.broadcast %cst_145 : f32 to vector<16x32xf32>
      %c0_146 = arith.constant 0 : index
      %c0_147 = arith.constant 0 : index
      %407 = vector.load %arg23[%c0_146, %c0_147] : memref<16x32xf32, #tpu.memory_space<vmem>>, vector<16x32xf32>
      tpu.vector_store %arg23[%c0_146, %c0_147], %406 {strides = array<i32>} : memref<16x32xf32, #tpu.memory_space<vmem>>, vector<16x32xf32>,
    } else {
    }
    %c0 = arith.constant 0 : index
    %c0_1 = arith.constant 0 : index
    %3 = vector.load %arg22[%c0, %c0_1] : memref<16x32xf32, #tpu.memory_space<vmem>>, vector<16x32xf32>
    %c0_2 = arith.constant 0 : index
    %c0_3 = arith.constant 0 : index
    %c0_4 = arith.constant 0 : index
    %c0_5 = arith.constant 0 : index
    %4 = vector.load %arg8[%c0_2, %c0_3, %c0_4, %c0_5] : memref<1x3x32x32xbf16, #tpu.memory_space<vmem>>, vector<1x3x32x32xbf16>
    %5 = vector.shape_cast %4 : vector<1x3x32x32xbf16> to vector<3x32x32xbf16>
    %c0_6 = arith.constant 0 : index
    %c0_7 = arith.constant 0 : index
    %c0_8 = arith.constant 0 : index
    %c0_9 = arith.constant 0 : index
    %6 = vector.load %arg9[%c0_6, %c0_7, %c0_8, %c0_9] : memref<1x3x1x32xf32, #tpu.memory_space<vmem>>, vector<1x3x1x32xf32>
    %7 = vector.shape_cast %6 : vector<1x3x1x32xf32> to vector<3x1x32xf32>
    %8 = arith.truncf %3 : vector<16x32xf32> to vector<16x32xbf16>
    %9 = vector.extract_strided_slice %5 {offsets = [0, 0, 0], sizes = [1, 32, 32], strides = [1, 1, 1]} : vector<3x32x32xbf16> to vector<1x32x32xbf16>
    %10 = vector.shape_cast %9 : vector<1x32x32xbf16> to vector<32x32xbf16>
    %cst = arith.constant dense<0.000000e+00> : vector<16x32xf32>
    %11 = tpu.matmul %8, %10, %cst {dimension_numbers = #tpu.dot_dimension_numbers<[1], [0], [0], [1], [0, 0, 1, 1], [], []>} : vector<16x32xbf16>, vector<32x32xbf16>, vector<16x32xf32> -> vector<16x32xf32>
    %12 = vector.extract_strided_slice %7 {offsets = [0, 0, 0], sizes = [1, 1, 32], strides = [1, 1, 1]} : vector<3x1x32xf32> to vector<1x1x32xf32>
    %13 = vector.shape_cast %12 : vector<1x1x32xf32> to vector<1x32xf32>
    %14 = vector.broadcast %13 : vector<1x32xf32> to vector<16x32xf32>
    %15 = arith.addf %11, %14 : vector<16x32xf32>
    %16 = vector.extract_strided_slice %5 {offsets = [1, 0, 0], sizes = [1, 32, 32], strides = [1, 1, 1]} : vector<3x32x32xbf16> to vector<1x32x32xbf16>
    %17 = vector.shape_cast %16 : vector<1x32x32xbf16> to vector<32x32xbf16>
    %cst_10 = arith.constant dense<0.000000e+00> : vector<16x32xf32>
    %18 = tpu.matmul %8, %17, %cst_10 {dimension_numbers = #tpu.dot_dimension_numbers<[1], [0], [0], [1], [0, 0, 1, 1], [], []>} : vector<16x32xbf16>, vector<32x32xbf16>, vector<16x32xf32> -> vector<16x32xf32>
    %19 = vector.extract_strided_slice %7 {offsets = [1, 0, 0], sizes = [1, 1, 32], strides = [1, 1, 1]} : vector<3x1x32xf32> to vector<1x1x32xf32>
    %20 = vector.shape_cast %19 : vector<1x1x32xf32> to vector<1x32xf32>
    %21 = vector.broadcast %20 : vector<1x32xf32> to vector<16x32xf32>
    %22 = arith.addf %18, %21 : vector<16x32xf32>
    %23 = vector.extract_strided_slice %5 {offsets = [2, 0, 0], sizes = [1, 32, 32], strides = [1, 1, 1]} : vector<3x32x32xbf16> to vector<1x32x32xbf16>
    %24 = vector.shape_cast %23 : vector<1x32x32xbf16> to vector<32x32xbf16>
    %cst_11 = arith.constant dense<0.000000e+00> : vector<16x32xf32>
    %25 = tpu.matmul %8, %24, %cst_11 {dimension_numbers = #tpu.dot_dimension_numbers<[1], [0], [0], [1], [0, 0, 1, 1], [], []>} : vector<16x32xbf16>, vector<32x32xbf16>, vector<16x32xf32> -> vector<16x32xf32>
    %26 = vector.extract_strided_slice %7 {offsets = [2, 0, 0], sizes = [1, 1, 32], strides = [1, 1, 1]} : vector<3x1x32xf32> to vector<1x1x32xf32>
    %27 = vector.shape_cast %26 : vector<1x1x32xf32> to vector<1x32xf32>
    %28 = vector.broadcast %27 : vector<1x32xf32> to vector<16x32xf32>
    %29 = arith.addf %25, %28 : vector<16x32xf32>
    %30 = arith.truncf %15 : vector<16x32xf32> to vector<16x32xbf16>
    %31 = arith.truncf %22 : vector<16x32xf32> to vector<16x32xbf16>
    %32 = arith.truncf %29 : vector<16x32xf32> to vector<16x32xbf16>
    %33 = tpu.iota {dimensions = array<i32: 1>} : vector<1x8xi32>
    %c0_12 = arith.constant 0 : index
    %34 = memref.load %arg2[%c0_12] : memref<2xi32, #tpu.memory_space<smem>>
    %35 = vector.broadcast %34 : i32 to vector<1x8xi32>
    %36 = arith.cmpi slt, %33, %35 : vector<1x8xi32>
    %cst_13 = arith.constant 0.000000e+00 : f32
    %cst_14 = arith.constant -1.000000e+09 : f32
    %37 = vector.broadcast %cst_13 : f32 to vector<1x8xf32>
    %38 = vector.broadcast %cst_14 : f32 to vector<1x8xf32>
    %39 = arith.select %36, %37, %38 : vector<1x8xi1>, vector<1x8xf32>
    %40 = vector.extract_strided_slice %30 {offsets = [0, 0], sizes = [8, 8], strides = [1, 1]} : vector<16x32xbf16> to vector<8x8xbf16>
    %41 = vector.extract_strided_slice %31 {offsets = [0, 0], sizes = [8, 8], strides = [1, 1]} : vector<16x32xbf16> to vector<8x8xbf16>
    %42 = vector.extract_strided_slice %32 {offsets = [0, 0], sizes = [8, 8], strides = [1, 1]} : vector<16x32xbf16> to vector<8x8xbf16>
    "tpu.trace_start"() <{level = 10 : i32, message = "qd,kd->qk"}> : () -> ()
    %cst_15 = arith.constant dense<0.000000e+00> : vector<8x8xf32>
    %43 = tpu.matmul %40, %41, %cst_15 {dimension_numbers = #tpu.dot_dimension_numbers<[1], [1], [0], [0], [0, 0, 1, 0], [], []>} : vector<8x8xbf16>, vector<8x8xbf16>, vector<8x8xf32> -> vector<8x8xf32>
    "tpu.trace_stop"() : () -> ()
    %cst_16 = arith.constant 0.353553385 : f32
    %44 = vector.broadcast %cst_16 : f32 to vector<8x8xf32>
    %45 = arith.mulf %43, %44 : vector<8x8xf32>
    %46 = vector.broadcast %39 : vector<1x8xf32> to vector<8x8xf32>
    %47 = arith.addf %45, %46 : vector<8x8xf32>
    %cst_17 = arith.constant dense<0xFF800000> : vector<8xf32>
    %48 = vector.multi_reduction <maximumf>, %47, %cst_17 [1] : vector<8x8xf32> to vector<8xf32>
    %49 = vector.shape_cast %48 : vector<8xf32> to vector<8x1xf32>
    %50 = vector.broadcast %49 : vector<8x1xf32> to vector<8x8xf32>
    %51 = arith.subf %47, %50 : vector<8x8xf32>
    %52 = math.exp %51 : vector<8x8xf32>
    %cst_18 = arith.constant dense<0.000000e+00> : vector<8xf32>
    %53 = vector.multi_reduction <add>, %52, %cst_18 [1] : vector<8x8xf32> to vector<8xf32>
    %54 = vector.shape_cast %53 : vector<8xf32> to vector<8x1xf32>
    %55 = vector.broadcast %54 : vector<8x1xf32> to vector<8x8xf32>
    %56 = arith.divf %52, %55 : vector<8x8xf32>
    %57 = arith.truncf %56 : vector<8x8xf32> to vector<8x8xbf16>
    %cst_19 = arith.constant dense<0.000000e+00> : vector<8x8xf32>
    %58 = tpu.matmul %57, %42, %cst_19 {dimension_numbers = #tpu.dot_dimension_numbers<[1], [0], [0], [1], [0, 0, 1, 1], [], []>} : vector<8x8xbf16>, vector<8x8xbf16>, vector<8x8xf32> -> vector<8x8xf32>
    %59 = vector.extract_strided_slice %30 {offsets = [0, 8], sizes = [8, 8], strides = [1, 1]} : vector<16x32xbf16> to vector<8x8xbf16>
    %60 = vector.extract_strided_slice %31 {offsets = [0, 8], sizes = [8, 8], strides = [1, 1]} : vector<16x32xbf16> to vector<8x8xbf16>
    %61 = vector.extract_strided_slice %32 {offsets = [0, 8], sizes = [8, 8], strides = [1, 1]} : vector<16x32xbf16> to vector<8x8xbf16>
    "tpu.trace_start"() <{level = 10 : i32, message = "qd,kd->qk"}> : () -> ()
    %cst_20 = arith.constant dense<0.000000e+00> : vector<8x8xf32>
    %62 = tpu.matmul %59, %60, %cst_20 {dimension_numbers = #tpu.dot_dimension_numbers<[1], [1], [0], [0], [0, 0, 1, 0], [], []>} : vector<8x8xbf16>, vector<8x8xbf16>, vector<8x8xf32> -> vector<8x8xf32>
    "tpu.trace_stop"() : () -> ()
    %cst_21 = arith.constant 0.353553385 : f32
    %63 = vector.broadcast %cst_21 : f32 to vector<8x8xf32>
    %64 = arith.mulf %62, %63 : vector<8x8xf32>
    %65 = vector.broadcast %39 : vector<1x8xf32> to vector<8x8xf32>
    %66 = arith.addf %64, %65 : vector<8x8xf32>
    %cst_22 = arith.constant dense<0xFF800000> : vector<8xf32>
    %67 = vector.multi_reduction <maximumf>, %66, %cst_22 [1] : vector<8x8xf32> to vector<8xf32>
    %68 = vector.shape_cast %67 : vector<8xf32> to vector<8x1xf32>
    %69 = vector.broadcast %68 : vector<8x1xf32> to vector<8x8xf32>
    %70 = arith.subf %66, %69 : vector<8x8xf32>
    %71 = math.exp %70 : vector<8x8xf32>
    %cst_23 = arith.constant dense<0.000000e+00> : vector<8xf32>
    %72 = vector.multi_reduction <add>, %71, %cst_23 [1] : vector<8x8xf32> to vector<8xf32>
    %73 = vector.shape_cast %72 : vector<8xf32> to vector<8x1xf32>
    %74 = vector.broadcast %73 : vector<8x1xf32> to vector<8x8xf32>
    %75 = arith.divf %71, %74 : vector<8x8xf32>
    %76 = arith.truncf %75 : vector<8x8xf32> to vector<8x8xbf16>
    %cst_24 = arith.constant dense<0.000000e+00> : vector<8x8xf32>
    %77 = tpu.matmul %76, %61, %cst_24 {dimension_numbers = #tpu.dot_dimension_numbers<[1], [0], [0], [1], [0, 0, 1, 1], [], []>} : vector<8x8xbf16>, vector<8x8xbf16>, vector<8x8xf32> -> vector<8x8xf32>
    %78 = vector.extract_strided_slice %30 {offsets = [0, 16], sizes = [8, 8], strides = [1, 1]} : vector<16x32xbf16> to vector<8x8xbf16>
    %79 = vector.extract_strided_slice %31 {offsets = [0, 16], sizes = [8, 8], strides = [1, 1]} : vector<16x32xbf16> to vector<8x8xbf16>
    %80 = vector.extract_strided_slice %32 {offsets = [0, 16], sizes = [8, 8], strides = [1, 1]} : vector<16x32xbf16> to vector<8x8xbf16>
    "tpu.trace_start"() <{level = 10 : i32, message = "qd,kd->qk"}> : () -> ()
    %cst_25 = arith.constant dense<0.000000e+00> : vector<8x8xf32>
    %81 = tpu.matmul %78, %79, %cst_25 {dimension_numbers = #tpu.dot_dimension_numbers<[1], [1], [0], [0], [0, 0, 1, 0], [], []>} : vector<8x8xbf16>, vector<8x8xbf16>, vector<8x8xf32> -> vector<8x8xf32>
    "tpu.trace_stop"() : () -> ()
    %cst_26 = arith.constant 0.353553385 : f32
    %82 = vector.broadcast %cst_26 : f32 to vector<8x8xf32>
    %83 = arith.mulf %81, %82 : vector<8x8xf32>
    %84 = vector.broadcast %39 : vector<1x8xf32> to vector<8x8xf32>
    %85 = arith.addf %83, %84 : vector<8x8xf32>
    %cst_27 = arith.constant dense<0xFF800000> : vector<8xf32>
    %86 = vector.multi_reduction <maximumf>, %85, %cst_27 [1] : vector<8x8xf32> to vector<8xf32>
    %87 = vector.shape_cast %86 : vector<8xf32> to vector<8x1xf32>
    %88 = vector.broadcast %87 : vector<8x1xf32> to vector<8x8xf32>
    %89 = arith.subf %85, %88 : vector<8x8xf32>
    %90 = math.exp %89 : vector<8x8xf32>
    %cst_28 = arith.constant dense<0.000000e+00> : vector<8xf32>
    %91 = vector.multi_reduction <add>, %90, %cst_28 [1] : vector<8x8xf32> to vector<8xf32>
    %92 = vector.shape_cast %91 : vector<8xf32> to vector<8x1xf32>
    %93 = vector.broadcast %92 : vector<8x1xf32> to vector<8x8xf32>
    %94 = arith.divf %90, %93 : vector<8x8xf32>
    %95 = arith.truncf %94 : vector<8x8xf32> to vector<8x8xbf16>
    %cst_29 = arith.constant dense<0.000000e+00> : vector<8x8xf32>
    %96 = tpu.matmul %95, %80, %cst_29 {dimension_numbers = #tpu.dot_dimension_numbers<[1], [0], [0], [1], [0, 0, 1, 1], [], []>} : vector<8x8xbf16>, vector<8x8xbf16>, vector<8x8xf32> -> vector<8x8xf32>
    %97 = vector.extract_strided_slice %30 {offsets = [0, 24], sizes = [8, 8], strides = [1, 1]} : vector<16x32xbf16> to vector<8x8xbf16>
    %98 = vector.extract_strided_slice %31 {offsets = [0, 24], sizes = [8, 8], strides = [1, 1]} : vector<16x32xbf16> to vector<8x8xbf16>
    %99 = vector.extract_strided_slice %32 {offsets = [0, 24], sizes = [8, 8], strides = [1, 1]} : vector<16x32xbf16> to vector<8x8xbf16>
    "tpu.trace_start"() <{level = 10 : i32, message = "qd,kd->qk"}> : () -> ()
    %cst_30 = arith.constant dense<0.000000e+00> : vector<8x8xf32>
    %100 = tpu.matmul %97, %98, %cst_30 {dimension_numbers = #tpu.dot_dimension_numbers<[1], [1], [0], [0], [0, 0, 1, 0], [], []>} : vector<8x8xbf16>, vector<8x8xbf16>, vector<8x8xf32> -> vector<8x8xf32>
    "tpu.trace_stop"() : () -> ()
    %cst_31 = arith.constant 0.353553385 : f32
    %101 = vector.broadcast %cst_31 : f32 to vector<8x8xf32>
    %102 = arith.mulf %100, %101 : vector<8x8xf32>
    %103 = vector.broadcast %39 : vector<1x8xf32> to vector<8x8xf32>
    %104 = arith.addf %102, %103 : vector<8x8xf32>
    %cst_32 = arith.constant dense<0xFF800000> : vector<8xf32>
    %105 = vector.multi_reduction <maximumf>, %104, %cst_32 [1] : vector<8x8xf32> to vector<8xf32>
    %106 = vector.shape_cast %105 : vector<8xf32> to vector<8x1xf32>
    %107 = vector.broadcast %106 : vector<8x1xf32> to vector<8x8xf32>
    %108 = arith.subf %104, %107 : vector<8x8xf32>
    %109 = math.exp %108 : vector<8x8xf32>
    %cst_33 = arith.constant dense<0.000000e+00> : vector<8xf32>
    %110 = vector.multi_reduction <add>, %109, %cst_33 [1] : vector<8x8xf32> to vector<8xf32>
    %111 = vector.shape_cast %110 : vector<8xf32> to vector<8x1xf32>
    %112 = vector.broadcast %111 : vector<8x1xf32> to vector<8x8xf32>
    %113 = arith.divf %109, %112 : vector<8x8xf32>
    %114 = arith.truncf %113 : vector<8x8xf32> to vector<8x8xbf16>
    %cst_34 = arith.constant dense<0.000000e+00> : vector<8x8xf32>
    %115 = tpu.matmul %114, %99, %cst_34 {dimension_numbers = #tpu.dot_dimension_numbers<[1], [0], [0], [1], [0, 0, 1, 1], [], []>} : vector<8x8xbf16>, vector<8x8xbf16>, vector<8x8xf32> -> vector<8x8xf32>
    %116 = tpu.concatenate %58, %77, %96, %115 in 1 : vector<8x8xf32>, vector<8x8xf32>, vector<8x8xf32>, vector<8x8xf32> -> vector<8x32xf32>
    %117 = tpu.concatenate %56, %75, %94, %113 in 1 : vector<8x8xf32>, vector<8x8xf32>, vector<8x8xf32>, vector<8x8xf32> -> vector<8x32xf32>
    %118 = tpu.iota {dimensions = array<i32: 1>} : vector<1x8xi32>
    %c1 = arith.constant 1 : index
    %119 = memref.load %arg2[%c1] : memref<2xi32, #tpu.memory_space<smem>>
    %120 = vector.broadcast %119 : i32 to vector<1x8xi32>
    %121 = arith.cmpi slt, %118, %120 : vector<1x8xi32>
    %cst_35 = arith.constant 0.000000e+00 : f32
    %cst_36 = arith.constant -1.000000e+09 : f32
    %122 = vector.broadcast %cst_35 : f32 to vector<1x8xf32>
    %123 = vector.broadcast %cst_36 : f32 to vector<1x8xf32>
    %124 = arith.select %121, %122, %123 : vector<1x8xi1>, vector<1x8xf32>
    %125 = vector.extract_strided_slice %30 {offsets = [8, 0], sizes = [8, 8], strides = [1, 1]} : vector<16x32xbf16> to vector<8x8xbf16>
    %126 = vector.extract_strided_slice %31 {offsets = [8, 0], sizes = [8, 8], strides = [1, 1]} : vector<16x32xbf16> to vector<8x8xbf16>
    %127 = vector.extract_strided_slice %32 {offsets = [8, 0], sizes = [8, 8], strides = [1, 1]} : vector<16x32xbf16> to vector<8x8xbf16>
    "tpu.trace_start"() <{level = 10 : i32, message = "qd,kd->qk"}> : () -> ()
    %cst_37 = arith.constant dense<0.000000e+00> : vector<8x8xf32>
    %128 = tpu.matmul %125, %126, %cst_37 {dimension_numbers = #tpu.dot_dimension_numbers<[1], [1], [0], [0], [0, 0, 1, 0], [], []>} : vector<8x8xbf16>, vector<8x8xbf16>, vector<8x8xf32> -> vector<8x8xf32>
    "tpu.trace_stop"() : () -> ()
    %cst_38 = arith.constant 0.353553385 : f32
    %129 = vector.broadcast %cst_38 : f32 to vector<8x8xf32>
    %130 = arith.mulf %128, %129 : vector<8x8xf32>
    %131 = vector.broadcast %124 : vector<1x8xf32> to vector<8x8xf32>
    %132 = arith.addf %130, %131 : vector<8x8xf32>
    %cst_39 = arith.constant dense<0xFF800000> : vector<8xf32>
    %133 = vector.multi_reduction <maximumf>, %132, %cst_39 [1] : vector<8x8xf32> to vector<8xf32>
    %134 = vector.shape_cast %133 : vector<8xf32> to vector<8x1xf32>
    %135 = vector.broadcast %134 : vector<8x1xf32> to vector<8x8xf32>
    %136 = arith.subf %132, %135 : vector<8x8xf32>
    %137 = math.exp %136 : vector<8x8xf32>
    %cst_40 = arith.constant dense<0.000000e+00> : vector<8xf32>
    %138 = vector.multi_reduction <add>, %137, %cst_40 [1] : vector<8x8xf32> to vector<8xf32>
    %139 = vector.shape_cast %138 : vector<8xf32> to vector<8x1xf32>
    %140 = vector.broadcast %139 : vector<8x1xf32> to vector<8x8xf32>
    %141 = arith.divf %137, %140 : vector<8x8xf32>
    %142 = arith.truncf %141 : vector<8x8xf32> to vector<8x8xbf16>
    %cst_41 = arith.constant dense<0.000000e+00> : vector<8x8xf32>
    %143 = tpu.matmul %142, %127, %cst_41 {dimension_numbers = #tpu.dot_dimension_numbers<[1], [0], [0], [1], [0, 0, 1, 1], [], []>} : vector<8x8xbf16>, vector<8x8xbf16>, vector<8x8xf32> -> vector<8x8xf32>
    %144 = vector.extract_strided_slice %30 {offsets = [8, 8], sizes = [8, 8], strides = [1, 1]} : vector<16x32xbf16> to vector<8x8xbf16>
    %145 = vector.extract_strided_slice %31 {offsets = [8, 8], sizes = [8, 8], strides = [1, 1]} : vector<16x32xbf16> to vector<8x8xbf16>
    %146 = vector.extract_strided_slice %32 {offsets = [8, 8], sizes = [8, 8], strides = [1, 1]} : vector<16x32xbf16> to vector<8x8xbf16>
    "tpu.trace_start"() <{level = 10 : i32, message = "qd,kd->qk"}> : () -> ()
    %cst_42 = arith.constant dense<0.000000e+00> : vector<8x8xf32>
    %147 = tpu.matmul %144, %145, %cst_42 {dimension_numbers = #tpu.dot_dimension_numbers<[1], [1], [0], [0], [0, 0, 1, 0], [], []>} : vector<8x8xbf16>, vector<8x8xbf16>, vector<8x8xf32> -> vector<8x8xf32>
    "tpu.trace_stop"() : () -> ()
    %cst_43 = arith.constant 0.353553385 : f32
    %148 = vector.broadcast %cst_43 : f32 to vector<8x8xf32>
    %149 = arith.mulf %147, %148 : vector<8x8xf32>
    %150 = vector.broadcast %124 : vector<1x8xf32> to vector<8x8xf32>
    %151 = arith.addf %149, %150 : vector<8x8xf32>
    %cst_44 = arith.constant dense<0xFF800000> : vector<8xf32>
    %152 = vector.multi_reduction <maximumf>, %151, %cst_44 [1] : vector<8x8xf32> to vector<8xf32>
    %153 = vector.shape_cast %152 : vector<8xf32> to vector<8x1xf32>
    %154 = vector.broadcast %153 : vector<8x1xf32> to vector<8x8xf32>
    %155 = arith.subf %151, %154 : vector<8x8xf32>
    %156 = math.exp %155 : vector<8x8xf32>
    %cst_45 = arith.constant dense<0.000000e+00> : vector<8xf32>
    %157 = vector.multi_reduction <add>, %156, %cst_45 [1] : vector<8x8xf32> to vector<8xf32>
    %158 = vector.shape_cast %157 : vector<8xf32> to vector<8x1xf32>
    %159 = vector.broadcast %158 : vector<8x1xf32> to vector<8x8xf32>
    %160 = arith.divf %156, %159 : vector<8x8xf32>
    %161 = arith.truncf %160 : vector<8x8xf32> to vector<8x8xbf16>
    %cst_46 = arith.constant dense<0.000000e+00> : vector<8x8xf32>
    %162 = tpu.matmul %161, %146, %cst_46 {dimension_numbers = #tpu.dot_dimension_numbers<[1], [0], [0], [1], [0, 0, 1, 1], [], []>} : vector<8x8xbf16>, vector<8x8xbf16>, vector<8x8xf32> -> vector<8x8xf32>
    %163 = vector.extract_strided_slice %30 {offsets = [8, 16], sizes = [8, 8], strides = [1, 1]} : vector<16x32xbf16> to vector<8x8xbf16>
    %164 = vector.extract_strided_slice %31 {offsets = [8, 16], sizes = [8, 8], strides = [1, 1]} : vector<16x32xbf16> to vector<8x8xbf16>
    %165 = vector.extract_strided_slice %32 {offsets = [8, 16], sizes = [8, 8], strides = [1, 1]} : vector<16x32xbf16> to vector<8x8xbf16>
    "tpu.trace_start"() <{level = 10 : i32, message = "qd,kd->qk"}> : () -> ()
    %cst_47 = arith.constant dense<0.000000e+00> : vector<8x8xf32>
    %166 = tpu.matmul %163, %164, %cst_47 {dimension_numbers = #tpu.dot_dimension_numbers<[1], [1], [0], [0], [0, 0, 1, 0], [], []>} : vector<8x8xbf16>, vector<8x8xbf16>, vector<8x8xf32> -> vector<8x8xf32>
    "tpu.trace_stop"() : () -> ()
    %cst_48 = arith.constant 0.353553385 : f32
    %167 = vector.broadcast %cst_48 : f32 to vector<8x8xf32>
    %168 = arith.mulf %166, %167 : vector<8x8xf32>
    %169 = vector.broadcast %124 : vector<1x8xf32> to vector<8x8xf32>
    %170 = arith.addf %168, %169 : vector<8x8xf32>
    %cst_49 = arith.constant dense<0xFF800000> : vector<8xf32>
    %171 = vector.multi_reduction <maximumf>, %170, %cst_49 [1] : vector<8x8xf32> to vector<8xf32>
    %172 = vector.shape_cast %171 : vector<8xf32> to vector<8x1xf32>
    %173 = vector.broadcast %172 : vector<8x1xf32> to vector<8x8xf32>
    %174 = arith.subf %170, %173 : vector<8x8xf32>
    %175 = math.exp %174 : vector<8x8xf32>
    %cst_50 = arith.constant dense<0.000000e+00> : vector<8xf32>
    %176 = vector.multi_reduction <add>, %175, %cst_50 [1] : vector<8x8xf32> to vector<8xf32>
    %177 = vector.shape_cast %176 : vector<8xf32> to vector<8x1xf32>
    %178 = vector.broadcast %177 : vector<8x1xf32> to vector<8x8xf32>
    %179 = arith.divf %175, %178 : vector<8x8xf32>
    %180 = arith.truncf %179 : vector<8x8xf32> to vector<8x8xbf16>
    %cst_51 = arith.constant dense<0.000000e+00> : vector<8x8xf32>
    %181 = tpu.matmul %180, %165, %cst_51 {dimension_numbers = #tpu.dot_dimension_numbers<[1], [0], [0], [1], [0, 0, 1, 1], [], []>} : vector<8x8xbf16>, vector<8x8xbf16>, vector<8x8xf32> -> vector<8x8xf32>
    %182 = vector.extract_strided_slice %30 {offsets = [8, 24], sizes = [8, 8], strides = [1, 1]} : vector<16x32xbf16> to vector<8x8xbf16>
    %183 = vector.extract_strided_slice %31 {offsets = [8, 24], sizes = [8, 8], strides = [1, 1]} : vector<16x32xbf16> to vector<8x8xbf16>
    %184 = vector.extract_strided_slice %32 {offsets = [8, 24], sizes = [8, 8], strides = [1, 1]} : vector<16x32xbf16> to vector<8x8xbf16>
    "tpu.trace_start"() <{level = 10 : i32, message = "qd,kd->qk"}> : () -> ()
    %cst_52 = arith.constant dense<0.000000e+00> : vector<8x8xf32>
    %185 = tpu.matmul %182, %183, %cst_52 {dimension_numbers = #tpu.dot_dimension_numbers<[1], [1], [0], [0], [0, 0, 1, 0], [], []>} : vector<8x8xbf16>, vector<8x8xbf16>, vector<8x8xf32> -> vector<8x8xf32>
    "tpu.trace_stop"() : () -> ()
    %cst_53 = arith.constant 0.353553385 : f32
    %186 = vector.broadcast %cst_53 : f32 to vector<8x8xf32>
    %187 = arith.mulf %185, %186 : vector<8x8xf32>
    %188 = vector.broadcast %124 : vector<1x8xf32> to vector<8x8xf32>
    %189 = arith.addf %187, %188 : vector<8x8xf32>
    %cst_54 = arith.constant dense<0xFF800000> : vector<8xf32>
    %190 = vector.multi_reduction <maximumf>, %189, %cst_54 [1] : vector<8x8xf32> to vector<8xf32>
    %191 = vector.shape_cast %190 : vector<8xf32> to vector<8x1xf32>
    %192 = vector.broadcast %191 : vector<8x1xf32> to vector<8x8xf32>
    %193 = arith.subf %189, %192 : vector<8x8xf32>
    %194 = math.exp %193 : vector<8x8xf32>
    %cst_55 = arith.constant dense<0.000000e+00> : vector<8xf32>
    %195 = vector.multi_reduction <add>, %194, %cst_55 [1] : vector<8x8xf32> to vector<8xf32>
    %196 = vector.shape_cast %195 : vector<8xf32> to vector<8x1xf32>
    %197 = vector.broadcast %196 : vector<8x1xf32> to vector<8x8xf32>
    %198 = arith.divf %194, %197 : vector<8x8xf32>
    %199 = arith.truncf %198 : vector<8x8xf32> to vector<8x8xbf16>
    %cst_56 = arith.constant dense<0.000000e+00> : vector<8x8xf32>
    %200 = tpu.matmul %199, %184, %cst_56 {dimension_numbers = #tpu.dot_dimension_numbers<[1], [0], [0], [1], [0, 0, 1, 1], [], []>} : vector<8x8xbf16>, vector<8x8xbf16>, vector<8x8xf32> -> vector<8x8xf32>
    %201 = tpu.concatenate %143, %162, %181, %200 in 1 : vector<8x8xf32>, vector<8x8xf32>, vector<8x8xf32>, vector<8x8xf32> -> vector<8x32xf32>
    %202 = tpu.concatenate %141, %160, %179, %198 in 1 : vector<8x8xf32>, vector<8x8xf32>, vector<8x8xf32>, vector<8x8xf32> -> vector<8x32xf32>
    %203 = tpu.concatenate %116, %201 in 0 : vector<8x32xf32>, vector<8x32xf32> -> vector<16x32xf32>
    %204 = tpu.concatenate %117, %202 in 0 : vector<8x32xf32>, vector<8x32xf32> -> vector<16x32xf32>
    %205 = vector.extract_strided_slice %204 {offsets = [0, 0], sizes = [1, 32], strides = [1, 1]} : vector<16x32xf32> to vector<1x32xf32>
    %206 = vector.extract_strided_slice %204 {offsets = [1, 0], sizes = [1, 32], strides = [1, 1]} : vector<16x32xf32> to vector<1x32xf32>
    %207 = vector.extract_strided_slice %204 {offsets = [2, 0], sizes = [1, 32], strides = [1, 1]} : vector<16x32xf32> to vector<1x32xf32>
    %208 = vector.extract_strided_slice %204 {offsets = [3, 0], sizes = [1, 32], strides = [1, 1]} : vector<16x32xf32> to vector<1x32xf32>
    %209 = vector.extract_strided_slice %204 {offsets = [4, 0], sizes = [1, 32], strides = [1, 1]} : vector<16x32xf32> to vector<1x32xf32>
    %210 = vector.extract_strided_slice %204 {offsets = [5, 0], sizes = [1, 32], strides = [1, 1]} : vector<16x32xf32> to vector<1x32xf32>
    %211 = vector.extract_strided_slice %204 {offsets = [6, 0], sizes = [1, 32], strides = [1, 1]} : vector<16x32xf32> to vector<1x32xf32>
    %212 = vector.extract_strided_slice %204 {offsets = [7, 0], sizes = [1, 32], strides = [1, 1]} : vector<16x32xf32> to vector<1x32xf32>
    %213 = tpu.concatenate %205, %206, %207, %208, %209, %210, %211, %212 in 1 : vector<1x32xf32>, vector<1x32xf32>, vector<1x32xf32>, vector<1x32xf32>, vector<1x32xf32>, vector<1x32xf32>, vector<1x32xf32>, vector<1x32xf32> -> vector<1x256xf32>
    %214 = vector.extract_strided_slice %204 {offsets = [8, 0], sizes = [1, 32], strides = [1, 1]} : vector<16x32xf32> to vector<1x32xf32>
    %215 = vector.extract_strided_slice %204 {offsets = [9, 0], sizes = [1, 32], strides = [1, 1]} : vector<16x32xf32> to vector<1x32xf32>
    %216 = vector.extract_strided_slice %204 {offsets = [10, 0], sizes = [1, 32], strides = [1, 1]} : vector<16x32xf32> to vector<1x32xf32>
    %217 = vector.extract_strided_slice %204 {offsets = [11, 0], sizes = [1, 32], strides = [1, 1]} : vector<16x32xf32> to vector<1x32xf32>
    %218 = vector.extract_strided_slice %204 {offsets = [12, 0], sizes = [1, 32], strides = [1, 1]} : vector<16x32xf32> to vector<1x32xf32>
    %219 = vector.extract_strided_slice %204 {offsets = [13, 0], sizes = [1, 32], strides = [1, 1]} : vector<16x32xf32> to vector<1x32xf32>
    %220 = vector.extract_strided_slice %204 {offsets = [14, 0], sizes = [1, 32], strides = [1, 1]} : vector<16x32xf32> to vector<1x32xf32>
    %221 = vector.extract_strided_slice %204 {offsets = [15, 0], sizes = [1, 32], strides = [1, 1]} : vector<16x32xf32> to vector<1x32xf32>
    %222 = tpu.concatenate %214, %215, %216, %217, %218, %219, %220, %221 in 1 : vector<1x32xf32>, vector<1x32xf32>, vector<1x32xf32>, vector<1x32xf32>, vector<1x32xf32>, vector<1x32xf32>, vector<1x32xf32>, vector<1x32xf32> -> vector<1x256xf32>
    %223 = tpu.concatenate %213, %222 in 0 : vector<1x256xf32>, vector<1x256xf32> -> vector<2x256xf32>
    %224 = arith.truncf %223 : vector<2x256xf32> to vector<2x256xbf16>
    %c0_57 = arith.constant 0 : index
    %c0_58 = arith.constant 0 : index
    %c0_59 = arith.constant 0 : index
    %225 = vector.load %arg21[%c0_57, %c0_58, %c0_59] : memref<1x2x256xbf16, #tpu.memory_space<vmem>>, vector<1x2x256xbf16>
    %226 = vector.shape_cast %225 : vector<1x2x256xbf16> to vector<2x256xbf16>
    %227 = vector.shape_cast %224 : vector<2x256xbf16> to vector<1x2x256xbf16>
    tpu.vector_store %arg21[%c0_57, %c0_58, %c0_59], %227 {strides = array<i32>} : memref<1x2x256xbf16, #tpu.memory_space<vmem>>, vector<1x2x256xbf16>,
    %228 = arith.truncf %203 : vector<16x32xf32> to vector<16x32xbf16>
    %c0_60 = arith.constant 0 : index
    %c0_61 = arith.constant 0 : index
    %c0_62 = arith.constant 0 : index
    %229 = vector.load %arg10[%c0_60, %c0_61, %c0_62] : memref<1x32x32xbf16, #tpu.memory_space<vmem>>, vector<1x32x32xbf16>
    %230 = vector.shape_cast %229 : vector<1x32x32xbf16> to vector<32x32xbf16>
    %cst_63 = arith.constant dense<0.000000e+00> : vector<16x32xf32>
    %231 = tpu.matmul %228, %230, %cst_63 {dimension_numbers = #tpu.dot_dimension_numbers<[1], [0], [0], [1], [0, 0, 1, 1], [], []>} : vector<16x32xbf16>, vector<32x32xbf16>, vector<16x32xf32> -> vector<16x32xf32>
    %c0_64 = arith.constant 0 : index
    %c0_65 = arith.constant 0 : index
    %c0_66 = arith.constant 0 : index
    %232 = vector.load %arg11[%c0_64, %c0_65, %c0_66] : memref<1x1x32xf32, #tpu.memory_space<vmem>>, vector<1x1x32xf32>
    %233 = vector.shape_cast %232 : vector<1x1x32xf32> to vector<1x32xf32>
    %234 = vector.broadcast %233 : vector<1x32xf32> to vector<16x32xf32>
    %235 = arith.addf %231, %234 : vector<16x32xf32>
    %236 = arith.addf %235, %3 : vector<16x32xf32>
    %c0_67 = arith.constant 0 : index
    %c0_68 = arith.constant 0 : index
    %c0_69 = arith.constant 0 : index
    %237 = vector.load %arg12[%c0_67, %c0_68, %c0_69] : memref<1x1x32xf32, #tpu.memory_space<vmem>>, vector<1x1x32xf32>
    %238 = vector.shape_cast %237 : vector<1x1x32xf32> to vector<1x32xf32>
    %c0_70 = arith.constant 0 : index
    %c0_71 = arith.constant 0 : index
    %c0_72 = arith.constant 0 : index
    %239 = vector.load %arg13[%c0_70, %c0_71, %c0_72] : memref<1x1x32xf32, #tpu.memory_space<vmem>>, vector<1x1x32xf32>
    %240 = vector.shape_cast %239 : vector<1x1x32xf32> to vector<1x32xf32>
    %cst_73 = arith.constant dense<0.000000e+00> : vector<16xf32>
    %241 = vector.multi_reduction <add>, %236, %cst_73 [1] : vector<16x32xf32> to vector<16xf32>
    %242 = vector.shape_cast %241 : vector<16xf32> to vector<16x1xf32>
    %cst_74 = arith.constant 3.200000e+01 : f32
    %243 = vector.broadcast %cst_74 : f32 to vector<16x1xf32>
    %244 = arith.divf %242, %243 : vector<16x1xf32>
    %245 = vector.broadcast %244 : vector<16x1xf32> to vector<16x32xf32>
    %246 = arith.subf %236, %245 : vector<16x32xf32>
    %247 = arith.mulf %246, %246 : vector<16x32xf32>
    %cst_75 = arith.constant dense<0.000000e+00> : vector<16xf32>
    %248 = vector.multi_reduction <add>, %247, %cst_75 [1] : vector<16x32xf32> to vector<16xf32>
    %249 = vector.shape_cast %248 : vector<16xf32> to vector<16x1xf32>
    %cst_76 = arith.constant 3.200000e+01 : f32
    %250 = vector.broadcast %cst_76 : f32 to vector<16x1xf32>
    %251 = arith.divf %249, %250 : vector<16x1xf32>
    %252 = vector.broadcast %244 : vector<16x1xf32> to vector<16x32xf32>
    %253 = arith.subf %236, %252 : vector<16x32xf32>
    %cst_77 = arith.constant 9.99999996E-13 : f32
    %254 = vector.broadcast %cst_77 : f32 to vector<16x1xf32>
    %255 = arith.addf %251, %254 : vector<16x1xf32>
    %256 = math.rsqrt %255 : vector<16x1xf32>
    %257 = vector.broadcast %256 : vector<16x1xf32> to vector<16x32xf32>
    %258 = arith.mulf %253, %257 : vector<16x32xf32>
    %259 = vector.broadcast %238 : vector<1x32xf32> to vector<16x32xf32>
    %260 = arith.mulf %258, %259 : vector<16x32xf32>
    %261 = vector.broadcast %240 : vector<1x32xf32> to vector<16x32xf32>
    %262 = arith.addf %260, %261 : vector<16x32xf32>
    %263 = arith.truncf %262 : vector<16x32xf32> to vector<16x32xbf16>
    %c0_78 = arith.constant 0 : index
    %c0_79 = arith.constant 0 : index
    %c0_80 = arith.constant 0 : index
    %264 = vector.load %arg14[%c0_78, %c0_79, %c0_80] : memref<1x32x64xbf16, #tpu.memory_space<vmem>>, vector<1x32x64xbf16>
    %265 = vector.shape_cast %264 : vector<1x32x64xbf16> to vector<32x64xbf16>
    %cst_81 = arith.constant dense<0.000000e+00> : vector<16x64xf32>
    %266 = tpu.matmul %263, %265, %cst_81 {dimension_numbers = #tpu.dot_dimension_numbers<[1], [0], [0], [1], [0, 0, 1, 1], [], []>} : vector<16x32xbf16>, vector<32x64xbf16>, vector<16x64xf32> -> vector<16x64xf32>
    %c0_82 = arith.constant 0 : index
    %c0_83 = arith.constant 0 : index
    %c0_84 = arith.constant 0 : index
    %267 = vector.load %arg15[%c0_82, %c0_83, %c0_84] : memref<1x1x64xf32, #tpu.memory_space<vmem>>, vector<1x1x64xf32>
    %268 = vector.shape_cast %267 : vector<1x1x64xf32> to vector<1x64xf32>
    %269 = vector.broadcast %268 : vector<1x64xf32> to vector<16x64xf32>
    %270 = arith.addf %266, %269 : vector<16x64xf32>
    %271 = arith.mulf %270, %270 : vector<16x64xf32>
    %272 = arith.mulf %270, %271 : vector<16x64xf32>
    %cst_85 = arith.constant 4.471500e-02 : f32
    %273 = vector.broadcast %cst_85 : f32 to vector<16x64xf32>
    %274 = arith.mulf %273, %272 : vector<16x64xf32>
    %275 = arith.addf %270, %274 : vector<16x64xf32>
    %cst_86 = arith.constant 0.797884583 : f32
    %276 = vector.broadcast %cst_86 : f32 to vector<16x64xf32>
    %277 = arith.mulf %276, %275 : vector<16x64xf32>
    %278 = math.tanh %277 : vector<16x64xf32>
    %cst_87 = arith.constant 1.000000e+00 : f32
    %279 = vector.broadcast %cst_87 : f32 to vector<16x64xf32>
    %280 = arith.addf %279, %278 : vector<16x64xf32>
    %cst_88 = arith.constant 5.000000e-01 : f32
    %281 = vector.broadcast %cst_88 : f32 to vector<16x64xf32>
    %282 = arith.mulf %281, %280 : vector<16x64xf32>
    %283 = arith.mulf %270, %282 : vector<16x64xf32>
    %284 = arith.truncf %283 : vector<16x64xf32> to vector<16x64xbf16>
    %c0_89 = arith.constant 0 : index
    %c0_90 = arith.constant 0 : index
    %c0_91 = arith.constant 0 : index
    %285 = vector.load %arg16[%c0_89, %c0_90, %c0_91] : memref<1x64x32xbf16, #tpu.memory_space<vmem>>, vector<1x64x32xbf16>
    %286 = vector.shape_cast %285 : vector<1x64x32xbf16> to vector<64x32xbf16>
    %cst_92 = arith.constant dense<0.000000e+00> : vector<16x32xf32>
    %287 = tpu.matmul %284, %286, %cst_92 {dimension_numbers = #tpu.dot_dimension_numbers<[1], [0], [0], [1], [0, 0, 1, 1], [], []>} : vector<16x64xbf16>, vector<64x32xbf16>, vector<16x32xf32> -> vector<16x32xf32>
    %c0_93 = arith.constant 0 : index
    %c0_94 = arith.constant 0 : index
    %c0_95 = arith.constant 0 : index
    %288 = vector.load %arg17[%c0_93, %c0_94, %c0_95] : memref<1x1x32xf32, #tpu.memory_space<vmem>>, vector<1x1x32xf32>
    %289 = vector.shape_cast %288 : vector<1x1x32xf32> to vector<1x32xf32>
    %290 = vector.broadcast %289 : vector<1x32xf32> to vector<16x32xf32>
    %291 = arith.addf %287, %290 : vector<16x32xf32>
    %292 = arith.addf %291, %262 : vector<16x32xf32>
    %c0_96 = arith.constant 0 : index
    %c0_97 = arith.constant 0 : index
    %c0_98 = arith.constant 0 : index
    %293 = vector.load %arg18[%c0_96, %c0_97, %c0_98] : memref<1x1x32xf32, #tpu.memory_space<vmem>>, vector<1x1x32xf32>
    %294 = vector.shape_cast %293 : vector<1x1x32xf32> to vector<1x32xf32>
    %c0_99 = arith.constant 0 : index
    %c0_100 = arith.constant 0 : index
    %c0_101 = arith.constant 0 : index
    %295 = vector.load %arg19[%c0_99, %c0_100, %c0_101] : memref<1x1x32xf32, #tpu.memory_space<vmem>>, vector<1x1x32xf32>
    %296 = vector.shape_cast %295 : vector<1x1x32xf32> to vector<1x32xf32>
    %cst_102 = arith.constant dense<0.000000e+00> : vector<16xf32>
    %297 = vector.multi_reduction <add>, %292, %cst_102 [1] : vector<16x32xf32> to vector<16xf32>
    %298 = vector.shape_cast %297 : vector<16xf32> to vector<16x1xf32>
    %cst_103 = arith.constant 3.200000e+01 : f32
    %299 = vector.broadcast %cst_103 : f32 to vector<16x1xf32>
    %300 = arith.divf %298, %299 : vector<16x1xf32>
    %301 = vector.broadcast %300 : vector<16x1xf32> to vector<16x32xf32>
    %302 = arith.subf %292, %301 : vector<16x32xf32>
    %303 = arith.mulf %302, %302 : vector<16x32xf32>
    %cst_104 = arith.constant dense<0.000000e+00> : vector<16xf32>
    %304 = vector.multi_reduction <add>, %303, %cst_104 [1] : vector<16x32xf32> to vector<16xf32>
    %305 = vector.shape_cast %304 : vector<16xf32> to vector<16x1xf32>
    %cst_105 = arith.constant 3.200000e+01 : f32
    %306 = vector.broadcast %cst_105 : f32 to vector<16x1xf32>
    %307 = arith.divf %305, %306 : vector<16x1xf32>
    %308 = vector.broadcast %300 : vector<16x1xf32> to vector<16x32xf32>
    %309 = arith.subf %292, %308 : vector<16x32xf32>
    %cst_106 = arith.constant 9.99999996E-13 : f32
    %310 = vector.broadcast %cst_106 : f32 to vector<16x1xf32>
    %311 = arith.addf %307, %310 : vector<16x1xf32>
    %312 = math.rsqrt %311 : vector<16x1xf32>
    %313 = vector.broadcast %312 : vector<16x1xf32> to vector<16x32xf32>
    %314 = arith.mulf %309, %313 : vector<16x32xf32>
    %315 = vector.broadcast %294 : vector<1x32xf32> to vector<16x32xf32>
    %316 = arith.mulf %314, %315 : vector<16x32xf32>
    %317 = vector.broadcast %296 : vector<1x32xf32> to vector<16x32xf32>
    %318 = arith.addf %316, %317 : vector<16x32xf32>
    %c0_107 = arith.constant 0 : index
    %c0_108 = arith.constant 0 : index
    %319 = vector.load %arg22[%c0_107, %c0_108] : memref<16x32xf32, #tpu.memory_space<vmem>>, vector<16x32xf32>
    tpu.vector_store %arg22[%c0_107, %c0_108], %318 {strides = array<i32>} : memref<16x32xf32, #tpu.memory_space<vmem>>, vector<16x32xf32>,
    %c0_i32_109 = arith.constant 0 : i32
    %320 = arith.cmpi sge, %arg0, %c0_i32_109 : i32
    %321 = arith.extui %320 : i1 to i32
    %c0_i32_110 = arith.constant 0 : i32
    %322 = arith.cmpi ne, %321, %c0_i32_110 : i32
    scf.if %322 {
      %c0_112 = arith.constant 0 : index
      %c0_113 = arith.constant 0 : index
      %326 = vector.load %arg23[%c0_112, %c0_113] : memref<16x32xf32, #tpu.memory_space<vmem>>, vector<16x32xf32>
      %327 = arith.addf %326, %318 : vector<16x32xf32>
      %c0_114 = arith.constant 0 : index
      %c0_115 = arith.constant 0 : index
      %328 = vector.load %arg23[%c0_114, %c0_115] : memref<16x32xf32, #tpu.memory_space<vmem>>, vector<16x32xf32>
      tpu.vector_store %arg23[%c0_114, %c0_115], %327 {strides = array<i32>} : memref<16x32xf32, #tpu.memory_space<vmem>>, vector<16x32xf32>,
    } else {
    }
    %c3_i32 = arith.constant 3 : i32
    %323 = arith.cmpi eq, %arg0, %c3_i32 : i32
    %324 = arith.extui %323 : i1 to i32
    %c0_i32_111 = arith.constant 0 : i32
    %325 = arith.cmpi ne, %324, %c0_i32_111 : i32
    scf.if %325 {
      %c0_112 = arith.constant 0 : index
      %c0_113 = arith.constant 0 : index
      %326 = vector.load %arg23[%c0_112, %c0_113] : memref<16x32xf32, #tpu.memory_space<vmem>>, vector<16x32xf32>
      %cst_114 = arith.constant 2.500000e-01 : f32
      %327 = vector.broadcast %cst_114 : f32 to vector<16x32xf32>
      %328 = arith.mulf %327, %326 : vector<16x32xf32>
      %329 = vector.extract_strided_slice %328 {offsets = [0, 0], sizes = [1, 32], strides = [1, 1]} : vector<16x32xf32> to vector<1x32xf32>
      %330 = vector.extract_strided_slice %328 {offsets = [1, 0], sizes = [1, 32], strides = [1, 1]} : vector<16x32xf32> to vector<1x32xf32>
      %331 = vector.extract_strided_slice %328 {offsets = [2, 0], sizes = [1, 32], strides = [1, 1]} : vector<16x32xf32> to vector<1x32xf32>
      %332 = vector.extract_strided_slice %328 {offsets = [3, 0], sizes = [1, 32], strides = [1, 1]} : vector<16x32xf32> to vector<1x32xf32>
      %333 = vector.extract_strided_slice %328 {offsets = [4, 0], sizes = [1, 32], strides = [1, 1]} : vector<16x32xf32> to vector<1x32xf32>
      %334 = vector.extract_strided_slice %328 {offsets = [5, 0], sizes = [1, 32], strides = [1, 1]} : vector<16x32xf32> to vector<1x32xf32>
      %335 = vector.extract_strided_slice %328 {offsets = [6, 0], sizes = [1, 32], strides = [1, 1]} : vector<16x32xf32> to vector<1x32xf32>
      %336 = vector.extract_strided_slice %328 {offsets = [7, 0], sizes = [1, 32], strides = [1, 1]} : vector<16x32xf32> to vector<1x32xf32>
      %337 = tpu.concatenate %329, %330, %331, %332, %333, %334, %335, %336 in 1 : vector<1x32xf32>, vector<1x32xf32>, vector<1x32xf32>, vector<1x32xf32>, vector<1x32xf32>, vector<1x32xf32>, vector<1x32xf32>, vector<1x32xf32> -> vector<1x256xf32>
      %338 = vector.extract_strided_slice %328 {offsets = [8, 0], sizes = [1, 32], strides = [1, 1]} : vector<16x32xf32> to vector<1x32xf32>
      %339 = vector.extract_strided_slice %328 {offsets = [9, 0], sizes = [1, 32], strides = [1, 1]} : vector<16x32xf32> to vector<1x32xf32>
      %340 = vector.extract_strided_slice %328 {offsets = [10, 0], sizes = [1, 32], strides = [1, 1]} : vector<16x32xf32> to vector<1x32xf32>
      %341 = vector.extract_strided_slice %328 {offsets = [11, 0], sizes = [1, 32], strides = [1, 1]} : vector<16x32xf32> to vector<1x32xf32>
      %342 = vector.extract_strided_slice %328 {offsets = [12, 0], sizes = [1, 32], strides = [1, 1]} : vector<16x32xf32> to vector<1x32xf32>
      %343 = vector.extract_strided_slice %328 {offsets = [13, 0], sizes = [1, 32], strides = [1, 1]} : vector<16x32xf32> to vector<1x32xf32>
      %344 = vector.extract_strided_slice %328 {offsets = [14, 0], sizes = [1, 32], strides = [1, 1]} : vector<16x32xf32> to vector<1x32xf32>
      %345 = vector.extract_strided_slice %328 {offsets = [15, 0], sizes = [1, 32], strides = [1, 1]} : vector<16x32xf32> to vector<1x32xf32>
      %346 = tpu.concatenate %338, %339, %340, %341, %342, %343, %344, %345 in 1 : vector<1x32xf32>, vector<1x32xf32>, vector<1x32xf32>, vector<1x32xf32>, vector<1x32xf32>, vector<1x32xf32>, vector<1x32xf32>, vector<1x32xf32> -> vector<1x256xf32>
      %347 = tpu.concatenate %337, %346 in 0 : vector<1x256xf32>, vector<1x256xf32> -> vector<2x256xf32>
      %c0_115 = arith.constant 0 : index
      %c0_116 = arith.constant 0 : index
      %348 = vector.load %arg20[%c0_115, %c0_116] : memref<2x256xf32, #tpu.memory_space<vmem>>, vector<2x256xf32>
      tpu.vector_store %arg20[%c0_115, %c0_116], %347 {strides = array<i32>} : memref<2x256xf32, #tpu.memory_space<vmem>>, vector<2x256xf32>,
    } else {
    }
    return
  }
  func.func @transform_0(%arg0: i32, %arg1: memref<16xi32, #tpu.memory_space<smem>>, %arg2: memref<2xi32, #tpu.memory_space<smem>>) -> (i32, i32) {
    %c0_i32 = arith.constant 0 : i32
    %c0_i32_0 = arith.constant 0 : i32
    %c0_i32_1 = arith.constant 0 : i32
    return %c0_i32, %c0_i32_0 : i32, i32
  }
  func.func @transform_1(%arg0: i32, %arg1: memref<16xi32, #tpu.memory_space<smem>>, %arg2: memref<2xi32, #tpu.memory_space<smem>>) -> (i32, i32) {
    %c0_i32 = arith.constant 0 : i32
    %c0_i32_0 = arith.constant 0 : i32
    %c0_i32_1 = arith.constant 0 : i32
    return %c0_i32, %c0_i32_0 : i32, i32
  }
  func.func @transform_2(%arg0: i32, %arg1: memref<16xi32, #tpu.memory_space<smem>>, %arg2: memref<2xi32, #tpu.memory_space<smem>>) -> (i32, i32) {
    %c0_i32 = arith.constant 0 : i32
    %c0_i32_0 = arith.constant 0 : i32
    %c0_i32_1 = arith.constant 0 : i32
    return %c0_i32, %c0_i32_0 : i32, i32
  }
  func.func @transform_3(%arg0: i32, %arg1: memref<16xi32, #tpu.memory_space<smem>>, %arg2: memref<2xi32, #tpu.memory_space<smem>>) -> (i32, i32) {
    %c0_i32 = arith.constant 0 : i32
    %c0_i32_0 = arith.constant 0 : i32
    %c0_i32_1 = arith.constant 0 : i32
    return %c0_i32, %c0_i32_0 : i32, i32
  }
  func.func @transform_4(%arg0: i32, %arg1: memref<16xi32, #tpu.memory_space<smem>>, %arg2: memref<2xi32, #tpu.memory_space<smem>>) -> (i32, i32) {
    %c0_i32 = arith.constant 0 : i32
    %c0_i32_0 = arith.constant 0 : i32
    %c0_i32_1 = arith.constant 0 : i32
    return %c0_i32, %c0_i32_0 : i32, i32
  }
  func.func @transform_5(%arg0: i32, %arg1: memref<16xi32, #tpu.memory_space<smem>>, %arg2: memref<2xi32, #tpu.memory_space<smem>>) -> (i32, i32, i32, i32) {
    %c0_i32 = arith.constant 0 : i32
    %c0_i32_0 = arith.constant 0 : i32
    %c0_i32_1 = arith.constant 0 : i32
    %c0_i32_2 = arith.constant 0 : i32
    return %arg0, %c0_i32, %c0_i32_0, %c0_i32_1 : i32, i32, i32, i32
  }
  func.func @transform_6(%arg0: i32, %arg1: memref<16xi32, #tpu.memory_space<smem>>, %arg2: memref<2xi32, #tpu.memory_space<smem>>) -> (i32, i32, i32, i32) {
    %c0_i32 = arith.constant 0 : i32
    %c0_i32_0 = arith.constant 0 : i32
    %c0_i32_1 = arith.constant 0 : i32
    %c0_i32_2 = arith.constant 0 : i32
    return %arg0, %c0_i32, %c0_i32_0, %c0_i32_1 : i32, i32, i32, i32
  }
  func.func @transform_7(%arg0: i32, %arg1: memref<16xi32, #tpu.memory_space<smem>>, %arg2: memref<2xi32, #tpu.memory_space<smem>>) -> (i32, i32, i32) {
    %c0_i32 = arith.constant 0 : i32
    %c0_i32_0 = arith.constant 0 : i32
    %c0_i32_1 = arith.constant 0 : i32
    return %arg0, %c0_i32, %c0_i32_0 : i32, i32, i32
  }
  func.func @transform_8(%arg0: i32, %arg1: memref<16xi32, #tpu.memory_space<smem>>, %arg2: memref<2xi32, #tpu.memory_space<smem>>) -> (i32, i32, i32) {
    %c0_i32 = arith.constant 0 : i32
    %c0_i32_0 = arith.constant 0 : i32
    %c0_i32_1 = arith.constant 0 : i32
    return %arg0, %c0_i32, %c0_i32_0 : i32, i32, i32
  }
  func.func @transform_9(%arg0: i32, %arg1: memref<16xi32, #tpu.memory_space<smem>>, %arg2: memref<2xi32, #tpu.memory_space<smem>>) -> (i32, i32, i32) {
    %c0_i32 = arith.constant 0 : i32
    %c0_i32_0 = arith.constant 0 : i32
    %c0_i32_1 = arith.constant 0 : i32
    return %arg0, %c0_i32, %c0_i32_0 : i32, i32, i32
  }
  func.func @transform_10(%arg0: i32, %arg1: memref<16xi32, #tpu.memory_space<smem>>, %arg2: memref<2xi32, #tpu.memory_space<smem>>) -> (i32, i32, i32) {
    %c0_i32 = arith.constant 0 : i32
    %c0_i32_0 = arith.constant 0 : i32
    %c0_i32_1 = arith.constant 0 : i32
    return %arg0, %c0_i32, %c0_i32_0 : i32, i32, i32
  }
  func.func @transform_11(%arg0: i32, %arg1: memref<16xi32, #tpu.memory_space<smem>>, %arg2: memref<2xi32, #tpu.memory_space<smem>>) -> (i32, i32, i32) {
    %c0_i32 = arith.constant 0 : i32
    %c0_i32_0 = arith.constant 0 : i32
    %c0_i32_1 = arith.constant 0 : i32
    return %arg0, %c0_i32, %c0_i32_0 : i32, i32, i32
  }
  func.func @transform_12(%arg0: i32, %arg1: memref<16xi32, #tpu.memory_space<smem>>, %arg2: memref<2xi32, #tpu.memory_space<smem>>) -> (i32, i32, i32) {
    %c0_i32 = arith.constant 0 : i32
    %c0_i32_0 = arith.constant 0 : i32
    %c0_i32_1 = arith.constant 0 : i32
    return %arg0, %c0_i32, %c0_i32_0 : i32, i32, i32
  }
  func.func @transform_13(%arg0: i32, %arg1: memref<16xi32, #tpu.memory_space<smem>>, %arg2: memref<2xi32, #tpu.memory_space<smem>>) -> (i32, i32, i32) {
    %c0_i32 = arith.constant 0 : i32
    %c0_i32_0 = arith.constant 0 : i32
    %c0_i32_1 = arith.constant 0 : i32
    return %arg0, %c0_i32, %c0_i32_0 : i32, i32, i32
  }
  func.func @transform_14(%arg0: i32, %arg1: memref<16xi32, #tpu.memory_space<smem>>, %arg2: memref<2xi32, #tpu.memory_space<smem>>) -> (i32, i32, i32) {
    %c0_i32 = arith.constant 0 : i32
    %c0_i32_0 = arith.constant 0 : i32
    %c0_i32_1 = arith.constant 0 : i32
    return %arg0, %c0_i32, %c0_i32_0 : i32, i32, i32
  }
  func.func @transform_15(%arg0: i32, %arg1: memref<16xi32, #tpu.memory_space<smem>>, %arg2: memref<2xi32, #tpu.memory_space<smem>>) -> (i32, i32, i32) {
    %c0_i32 = arith.constant 0 : i32
    %c0_i32_0 = arith.constant 0 : i32
    %c0_i32_1 = arith.constant 0 : i32
    return %arg0, %c0_i32, %c0_i32_0 : i32, i32, i32
  }
  func.func @transform_16(%arg0: i32, %arg1: memref<16xi32, #tpu.memory_space<smem>>, %arg2: memref<2xi32, #tpu.memory_space<smem>>) -> (i32, i32, i32) {
    %c0_i32 = arith.constant 0 : i32
    %c0_i32_0 = arith.constant 0 : i32
    %c0_i32_1 = arith.constant 0 : i32
    return %arg0, %c0_i32, %c0_i32_0 : i32, i32, i32
  }
  func.func @transform_17(%arg0: i32, %arg1: memref<16xi32, #tpu.memory_space<smem>>, %arg2: memref<2xi32, #tpu.memory_space<smem>>) -> (i32, i32) {
    %c0_i32 = arith.constant 0 : i32
    %c0_i32_0 = arith.constant 0 : i32
    %c0_i32_1 = arith.constant 0 : i32
    return %c0_i32, %c0_i32_0 : i32, i32
  }
  func.func @transform_18(%arg0: i32, %arg1: memref<16xi32, #tpu.memory_space<smem>>, %arg2: memref<2xi32, #tpu.memory_space<smem>>) -> (i32, i32, i32) {
    %c0_i32 = arith.constant 0 : i32
    %c0_i32_0 = arith.constant 0 : i32
    %c0_i32_1 = arith.constant 0 : i32
    return %arg0, %c0_i32, %c0_i32_0 : i32, i32, i32
  }
}

</mosaic_0001>

<llo_original>
// kernel: bert_embedding_forward.1
$region0: #{bert_embedding_forward.1}
  #allocation0 [shape = 'u32[]', space=smem, size = 0x4, offset = 0x4, fixed_abs, tag = 'smem constant byte address 0x4 - core index']
  #allocation1 [shape = 'u32[72,128]{1,0:T(1,128)}', space=vmem, size = 0x9000, scoped, tag = 'internal scratch']
  #allocation2 [shape = 'f32[16,32]{1,0:T(8,128)}', space=vmem, size = 0x2000, scoped, tag = 'scratch operand']
  #allocation3 [shape = 'f32[16,32]{1,0:T(8,128)}', space=vmem, size = 0x2000, scoped, tag = 'scratch operand']
  #allocation4 [shape = 's32[1]{0}', space=sflag, size = 0x4, scoped, tag = 'scoped memory for bert_embedding_forward.1']
  #allocation5 [shape = 'u8[512]{0}', space=smem, size = 0x200, scoped, tag = 'prefetched SMEM operand 0']
  #allocation6 [shape = 'u8[512]{0}', space=smem, size = 0x200, scoped, tag = 'prefetched SMEM operand 1']
  %s0 = inlined_call_operand.vmem [shape: s32[16], index: 0, kind: input, shape index: {}]
  %s1 = inlined_call_operand.vmem [shape: s32[2], index: 1, kind: input, shape index: {}]
  %s2 = inlined_call_operand.hbm [shape: f32[100,32], index: 2, kind: input, shape index: {}]
  %s3 = inlined_call_operand.vmem [shape: f32[16,32], index: 3, kind: input, shape index: {}]
  %s4 = inlined_call_operand.vmem [shape: f32[2,32], index: 4, kind: input, shape index: {}]
  %s5 = inlined_call_operand.vmem [shape: f32[1,32], index: 5, kind: input, shape index: {}]
  %s6 = inlined_call_operand.vmem [shape: f32[1,32], index: 6, kind: input, shape index: {}]
  %s7 = inlined_call_operand.hbm [shape: bf16[4,3,32,32], index: 7, kind: input, shape index: {}]
  %s8 = inlined_call_operand.vmem [shape: f32[4,3,1,32], index: 8, kind: input, shape index: {}]
  %s9 = inlined_call_operand.hbm [shape: bf16[4,32,32], index: 9, kind: input, shape index: {}]
  %s10 = inlined_call_operand.vmem [shape: f32[4,1,32], index: 10, kind: input, shape index: {}, may-alias: {10,12,16,18}]
  %s11 = inlined_call_operand.vmem [shape: f32[4,1,32], index: 11, kind: input, shape index: {}, may-alias: {11,17}]
  %s12 = inlined_call_operand.vmem [shape: f32[4,1,32], index: 12, kind: input, shape index: {}, may-alias: {10,12,16,18}]
  %s13 = inlined_call_operand.hbm [shape: bf16[4,32,64], index: 13, kind: input, shape index: {}]
  %s14 = inlined_call_operand.vmem [shape: f32[4,1,64], index: 14, kind: input, shape index: {}]
  %s15 = inlined_call_operand.hbm [shape: bf16[4,64,32], index: 15, kind: input, shape index: {}]
  %s16 = inlined_call_operand.vmem [shape: f32[4,1,32], index: 16, kind: input, shape index: {}, may-alias: {10,12,16,18}]
  %s17 = inlined_call_operand.vmem [shape: f32[4,1,32], index: 17, kind: input, shape index: {}, may-alias: {11,17}]
  %s18 = inlined_call_operand.vmem [shape: f32[4,1,32], index: 18, kind: input, shape index: {}, may-alias: {10,12,16,18}]
  %s19 = inlined_call_operand.vmem [shape: f32[2,256], index: 19, kind: output, shape index: {0}]
  %s20 = inlined_call_operand.vmem [shape: bf16[4,2,256], index: 20, kind: output, shape index: {1}]
  %21 = xla_tuple %s19, %s20
  %s22 = sld [smem:[#allocation0]]
  $region141: #{bert_embedding_forward.1} parent=0
    _
  %s24 = ssub.s32 1, %s22
  %s25 = scalar_select 0, %s24, %s22
  %s27 = sshll.u32 %s0, 4
  %s28 = int_to_ptr.vmem [resolvable:$true] %s27
  %30 = dma.vmem_to_smem %s28, 16, [#allocation5], [#allocation4]
  %s32 = sshll.u32 %s1, 4
  %s33 = int_to_ptr.vmem [resolvable:$true] %s32
  %35 = dma.vmem_to_smem %s33, 16, [#allocation6], [#allocation4]
  %37 = dma.done [#allocation4], 32
  %38 = sfence
  $region1: #{bert_embedding_forward.1} parent=0
    #allocation7 [shape = 'u8[53248]{0}', space=vmem, size = 0xd000, scoped, tag = 'input window, operand 2, single buffered']
    #allocation8 [shape = 's32[2]{0}', space=sflag, size = 0x8, scoped, tag = 'scoped memory for bert_embedding_forward.1']
    #allocation9 [shape = 'u8[49152]{0}', space=vmem, size = 0xc000, scoped, tag = 'input window, operand 7']
    #allocation10 [shape = 's32[2]{0}', space=sflag, size = 0x8, scoped, tag = 'scoped memory for bert_embedding_forward.1']
    #allocation11 [shape = 'u8[16384]{0}', space=vmem, size = 0x4000, scoped, tag = 'input window, operand 9']
    #allocation12 [shape = 'u8[16384]{0}', space=vmem, size = 0x4000, scoped, tag = 'input window, operand 13']
    #allocation13 [shape = 's32[2]{0}', space=sflag, size = 0x8, scoped, tag = 'scoped memory for bert_embedding_forward.1']
    #allocation14 [shape = 'u8[32768]{0}', space=vmem, size = 0x8000, scoped, tag = 'input window, operand 15']
    %39 = vsyncpa [#allocation8], 0
    %40 = vsyncpa [#allocation10], 0
    %s41 = scalar_lea.sflag [#allocation10], 1
    %42 = vsyncpa %s41, 0
    %43 = vsyncpa [#allocation13], 0
    %s44 = scalar_lea.sflag [#allocation13], 1
    %45 = vsyncpa %s44, 0
    loop: start=0, step=1, limit=6
    $region2: #{bert_embedding_forward.1} parent=1 // loop_pre_header
      _
    $region3: #{bert_embedding_forward.1} parent=1 // loop_header
      %s47 = sphi 0, %s51
      %p48 = scmp.ge.s32.totalorder %s47, 6
      %s55 = sphi 0, %s55
      %s57 = sphi 0, %s55
      %s58 = sphi 0, %s57
      %s72 = sphi 0, %s58
      %s76 = sphi 0, %s76
      %s78 = sphi 0, %s76
      %s79 = sphi 0, %s78
      %s93 = sphi 0, %s79
      %s97 = sphi 0, %s97
      %s99 = sphi 0, %s97
      %s100 = sphi 0, %s99
      %s114 = sphi 0, %s100
      %s118 = sphi 0, %s118
      %s120 = sphi 0, %s118
      %s121 = sphi 0, %s120
      %s135 = sphi 0, %s121
      %s139 = sphi 0, %s139
      %s141 = sphi 0, %s139
      %s142 = sphi 0, %s141
      %s156 = sphi 0, %s142
      %s162 = sphi 0, %s164
      %s165 = sphi 0, %s162
      %s166 = sphi 0, %s165
      %s182 = sphi 0, %s166
      %s188 = sphi 0, %s190
      %s191 = sphi 0, %s188
      %s192 = sphi 0, %s191
      %s208 = sphi 0, %s192
      %s214 = sphi 0, %s216
      %s217 = sphi 0, %s214
      %s218 = sphi 0, %s217
      %s234 = sphi 0, %s218
      %s240 = sphi 0, %s242
      %s243 = sphi 0, %s240
      %s244 = sphi 0, %s243
      %s260 = sphi 0, %s244
      %s266 = sphi 0, %s268
      %s269 = sphi 0, %s266
      %s270 = sphi 0, %s269
      %s286 = sphi 0, %s270
      %s292 = sphi 0, %s294
      %s295 = sphi 0, %s292
      %s296 = sphi 0, %s295
      %s312 = sphi 0, %s296
      %s318 = sphi 0, %s320
      %s321 = sphi 0, %s318
      %s322 = sphi 0, %s321
      %s338 = sphi 0, %s322
      %s344 = sphi 0, %s346
      %s347 = sphi 0, %s344
      %s348 = sphi 0, %s347
      %s364 = sphi 0, %s348
      %s370 = sphi 0, %s372
      %s373 = sphi 0, %s370
      %s374 = sphi 0, %s373
      %s390 = sphi 0, %s374
      %s396 = sphi 0, %s398
      %s399 = sphi 0, %s396
      %s400 = sphi 0, %s399
      %s416 = sphi 0, %s400
      %s422 = sphi 0, %s424
      %s425 = sphi 0, %s422
      %s426 = sphi 0, %s425
      %s442 = sphi 0, %s426
      %s448 = sphi 0, %s450
      %s451 = sphi 0, %s448
      %s452 = sphi 0, %s451
      %s468 = sphi 0, %s452
      %s472 = sphi 0, %s472
      %s474 = sphi 0, %s472
      %s475 = sphi 0, %s474
      %s489 = sphi 0, %s475
      %s495 = sphi 0, %s497
      %s498 = sphi 0, %s495
      %s499 = sphi 0, %s498
      %s515 = sphi 0, %s499
    $region4: #{bert_embedding_forward.1} parent=1 // loop_header_branch
      %50 = sbr.rel (%p48) target = $region8
    $region5: #{bert_embedding_forward.1} parent=1 // loop_body
      %s52 = ssub.s32 %s47, 1
      %s53 = ssub.s32 %s47, 2
      %s54 = sadd.s32 %s47, 1
      %s56 = sadd.s32 %s55, 1
      %p59 = scmp.eq.s32.totalorder %s47, 3
      %p60 = scmp.ne.s32.totalorder %s55, %s57
      %p61 = scmp.eq.s32.totalorder %s47, 0
      %p62 = por %p60, %p61
      %p63 = scmp.ne.s32.totalorder %s55, %s57
      %p64 = scmp.eq.s32.totalorder %s52, 3
      %p65 = por %p63, %p64
      %p66 = scmp.ne.s32.totalorder %s57, %s58
      %p67 = scmp.eq.s32.totalorder %s52, 0
      %p68 = por %p66, %p67
      %p69 = scmp.ne.s32.totalorder %s57, %s58
      %p70 = scmp.eq.s32.totalorder %s53, 3
      %p71 = por %p69, %p70
      %p73 = scmp.ne.s32.totalorder %s58, %s72
      %p74 = scmp.eq.s32.totalorder %s53, 0
      %p75 = por %p73, %p74
      %s77 = sadd.s32 %s76, 1
      %p80 = scmp.eq.s32.totalorder %s47, 3
      %p81 = scmp.ne.s32.totalorder %s76, %s78
      %p82 = scmp.eq.s32.totalorder %s47, 0
      %p83 = por %p81, %p82
      %p84 = scmp.ne.s32.totalorder %s76, %s78
      %p85 = scmp.eq.s32.totalorder %s52, 3
      %p86 = por %p84, %p85
      %p87 = scmp.ne.s32.totalorder %s78, %s79
      %p88 = scmp.eq.s32.totalorder %s52, 0
      %p89 = por %p87, %p88
      %p90 = scmp.ne.s32.totalorder %s78, %s79
      %p91 = scmp.eq.s32.totalorder %s53, 3
      %p92 = por %p90, %p91
      %p94 = scmp.ne.s32.totalorder %s79, %s93
      %p95 = scmp.eq.s32.totalorder %s53, 0
      %p96 = por %p94, %p95
      %s98 = sadd.s32 %s97, 1
      %p101 = scmp.eq.s32.totalorder %s47, 3
      %p102 = scmp.ne.s32.totalorder %s97, %s99
      %p103 = scmp.eq.s32.totalorder %s47, 0
      %p104 = por %p102, %p103
      %p105 = scmp.ne.s32.totalorder %s97, %s99
      %p106 = scmp.eq.s32.totalorder %s52, 3
      %p107 = por %p105, %p106
      %p108 = scmp.ne.s32.totalorder %s99, %s100
      %p109 = scmp.eq.s32.totalorder %s52, 0
      %p110 = por %p108, %p109
      %p111 = scmp.ne.s32.totalorder %s99, %s100
      %p112 = scmp.eq.s32.totalorder %s53, 3
      %p113 = por %p111, %p112
      %p115 = scmp.ne.s32.totalorder %s100, %s114
      %p116 = scmp.eq.s32.totalorder %s53, 0
      %p117 = por %p115, %p116
      %s119 = sadd.s32 %s118, 1
      %p122 = scmp.eq.s32.totalorder %s47, 3
      %p123 = scmp.ne.s32.totalorder %s118, %s120
      %p124 = scmp.eq.s32.totalorder %s47, 0
      %p125 = por %p123, %p124
      %p126 = scmp.ne.s32.totalorder %s118, %s120
      %p127 = scmp.eq.s32.totalorder %s52, 3
      %p128 = por %p126, %p127
      %p129 = scmp.ne.s32.totalorder %s120, %s121
      %p130 = scmp.eq.s32.totalorder %s52, 0
      %p131 = por %p129, %p130
      %p132 = scmp.ne.s32.totalorder %s120, %s121
      %p133 = scmp.eq.s32.totalorder %s53, 3
      %p134 = por %p132, %p133
      %p136 = scmp.ne.s32.totalorder %s121, %s135
      %p137 = scmp.eq.s32.totalorder %s53, 0
      %p138 = por %p136, %p137
      %s140 = sadd.s32 %s139, 1
      %p143 = scmp.eq.s32.totalorder %s47, 3
      %p144 = scmp.ne.s32.totalorder %s139, %s141
      %p145 = scmp.eq.s32.totalorder %s47, 0
      %p146 = por %p144, %p145
      %p147 = scmp.ne.s32.totalorder %s139, %s141
      %p148 = scmp.eq.s32.totalorder %s52, 3
      %p149 = por %p147, %p148
      %p150 = scmp.ne.s32.totalorder %s141, %s142
      %p151 = scmp.eq.s32.totalorder %s52, 0
      %p152 = por %p150, %p151
      %p153 = scmp.ne.s32.totalorder %s141, %s142
      %p154 = scmp.eq.s32.totalorder %s53, 3
      %p155 = por %p153, %p154
      %p157 = scmp.ne.s32.totalorder %s142, %s156
      %p158 = scmp.eq.s32.totalorder %s53, 0
      %p159 = por %p157, %p158
      %s160 = ssub.s32 %s47, %s54
      %p161 = scmp.eq.s32.totalorder %s160, 0
      %s163 = sadd.s32 %s162, 1
      %s164 = scalar_select %p161, %s162, %s163
      %p167 = pneg %p161
      %p168 = scmp.eq.s32.totalorder %s47, 3
      %p169 = por %p167, %p168
      %p170 = scmp.ne.s32.totalorder %s162, %s165
      %p171 = scmp.eq.s32.totalorder %s47, 0
      %p172 = por %p170, %p171
      %p173 = scmp.ne.s32.totalorder %s162, %s165
      %p174 = scmp.eq.s32.totalorder %s52, 3
      %p175 = por %p173, %p174
      %p176 = scmp.ne.s32.totalorder %s165, %s166
      %p177 = scmp.eq.s32.totalorder %s52, 0
      %p178 = por %p176, %p177
      %p179 = scmp.ne.s32.totalorder %s165, %s166
      %p180 = scmp.eq.s32.totalorder %s53, 3
      %p181 = por %p179, %p180
      %p183 = scmp.ne.s32.totalorder %s166, %s182
      %p184 = scmp.eq.s32.totalorder %s53, 0
      %p185 = por %p183, %p184
      %s186 = ssub.s32 %s47, %s54
      %p187 = scmp.eq.s32.totalorder %s186, 0
      %s189 = sadd.s32 %s188, 1
      %s190 = scalar_select %p187, %s188, %s189
      %p193 = pneg %p187
      %p194 = scmp.eq.s32.totalorder %s47, 3
      %p195 = por %p193, %p194
      %p196 = scmp.ne.s32.totalorder %s188, %s191
      %p197 = scmp.eq.s32.totalorder %s47, 0
      %p198 = por %p196, %p197
      %p199 = scmp.ne.s32.totalorder %s188, %s191
      %p200 = scmp.eq.s32.totalorder %s52, 3
      %p201 = por %p199, %p200
      %p202 = scmp.ne.s32.totalorder %s191, %s192
      %p203 = scmp.eq.s32.totalorder %s52, 0
      %p204 = por %p202, %p203
      %p205 = scmp.ne.s32.totalorder %s191, %s192
      %p206 = scmp.eq.s32.totalorder %s53, 3
      %p207 = por %p205, %p206
      %p209 = scmp.ne.s32.totalorder %s192, %s208
      %p210 = scmp.eq.s32.totalorder %s53, 0
      %p211 = por %p209, %p210
      %s212 = ssub.s32 %s47, %s54
      %p213 = scmp.eq.s32.totalorder %s212, 0
      %s215 = sadd.s32 %s214, 1
      %s216 = scalar_select %p213, %s214, %s215
      %p219 = pneg %p213
      %p220 = scmp.eq.s32.totalorder %s47, 3
      %p221 = por %p219, %p220
      %p222 = scmp.ne.s32.totalorder %s214, %s217
      %p223 = scmp.eq.s32.totalorder %s47, 0
      %p224 = por %p222, %p223
      %p225 = scmp.ne.s32.totalorder %s214, %s217
      %p226 = scmp.eq.s32.totalorder %s52, 3
      %p227 = por %p225, %p226
      %p228 = scmp.ne.s32.totalorder %s217, %s218
      %p229 = scmp.eq.s32.totalorder %s52, 0
      %p230 = por %p228, %p229
      %p231 = scmp.ne.s32.totalorder %s217, %s218
      %p232 = scmp.eq.s32.totalorder %s53, 3
      %p233 = por %p231, %p232
      %p235 = scmp.ne.s32.totalorder %s218, %s234
      %p236 = scmp.eq.s32.totalorder %s53, 0
      %p237 = por %p235, %p236
      %s238 = ssub.s32 %s47, %s54
      %p239 = scmp.eq.s32.totalorder %s238, 0
      %s241 = sadd.s32 %s240, 1
      %s242 = scalar_select %p239, %s240, %s241
      %p245 = pneg %p239
      %p246 = scmp.eq.s32.totalorder %s47, 3
      %p247 = por %p245, %p246
      %p248 = scmp.ne.s32.totalorder %s240, %s243
      %p249 = scmp.eq.s32.totalorder %s47, 0
      %p250 = por %p248, %p249
      %p251 = scmp.ne.s32.totalorder %s240, %s243
      %p252 = scmp.eq.s32.totalorder %s52, 3
      %p253 = por %p251, %p252
      %p254 = scmp.ne.s32.totalorder %s243, %s244
      %p255 = scmp.eq.s32.totalorder %s52, 0
      %p256 = por %p254, %p255
      %p257 = scmp.ne.s32.totalorder %s243, %s244
      %p258 = scmp.eq.s32.totalorder %s53, 3
      %p259 = por %p257, %p258
      %p261 = scmp.ne.s32.totalorder %s244, %s260
      %p262 = scmp.eq.s32.totalorder %s53, 0
      %p263 = por %p261, %p262
      %s264 = ssub.s32 %s47, %s54
      %p265 = scmp.eq.s32.totalorder %s264, 0
      %s267 = sadd.s32 %s266, 1
      %s268 = scalar_select %p265, %s266, %s267
      %p271 = pneg %p265
      %p272 = scmp.eq.s32.totalorder %s47, 3
      %p273 = por %p271, %p272
      %p274 = scmp.ne.s32.totalorder %s266, %s269
      %p275 = scmp.eq.s32.totalorder %s47, 0
      %p276 = por %p274, %p275
      %p277 = scmp.ne.s32.totalorder %s266, %s269
      %p278 = scmp.eq.s32.totalorder %s52, 3
      %p279 = por %p277, %p278
      %p280 = scmp.ne.s32.totalorder %s269, %s270
      %p281 = scmp.eq.s32.totalorder %s52, 0
      %p282 = por %p280, %p281
      %p283 = scmp.ne.s32.totalorder %s269, %s270
      %p284 = scmp.eq.s32.totalorder %s53, 3
      %p285 = por %p283, %p284
      %p287 = scmp.ne.s32.totalorder %s270, %s286
      %p288 = scmp.eq.s32.totalorder %s53, 0
      %p289 = por %p287, %p288
      %s290 = ssub.s32 %s47, %s54
      %p291 = scmp.eq.s32.totalorder %s290, 0
      %s293 = sadd.s32 %s292, 1
      %s294 = scalar_select %p291, %s292, %s293
      %p297 = pneg %p291
      %p298 = scmp.eq.s32.totalorder %s47, 3
      %p299 = por %p297, %p298
      %p300 = scmp.ne.s32.totalorder %s292, %s295
      %p301 = scmp.eq.s32.totalorder %s47, 0
      %p302 = por %p300, %p301
      %p303 = scmp.ne.s32.totalorder %s292, %s295
      %p304 = scmp.eq.s32.totalorder %s52, 3
      %p305 = por %p303, %p304
      %p306 = scmp.ne.s32.totalorder %s295, %s296
      %p307 = scmp.eq.s32.totalorder %s52, 0
      %p308 = por %p306, %p307
      %p309 = scmp.ne.s32.totalorder %s295, %s296
      %p310 = scmp.eq.s32.totalorder %s53, 3
      %p311 = por %p309, %p310
      %p313 = scmp.ne.s32.totalorder %s296, %s312
      %p314 = scmp.eq.s32.totalorder %s53, 0
      %p315 = por %p313, %p314
      %s316 = ssub.s32 %s47, %s54
      %p317 = scmp.eq.s32.totalorder %s316, 0
      %s319 = sadd.s32 %s318, 1
      %s320 = scalar_select %p317, %s318, %s319
      %p323 = pneg %p317
      %p324 = scmp.eq.s32.totalorder %s47, 3
      %p325 = por %p323, %p324
      %p326 = scmp.ne.s32.totalorder %s318, %s321
      %p327 = scmp.eq.s32.totalorder %s47, 0
      %p328 = por %p326, %p327
      %p329 = scmp.ne.s32.totalorder %s318, %s321
      %p330 = scmp.eq.s32.totalorder %s52, 3
      %p331 = por %p329, %p330
      %p332 = scmp.ne.s32.totalorder %s321, %s322
      %p333 = scmp.eq.s32.totalorder %s52, 0
      %p334 = por %p332, %p333
      %p335 = scmp.ne.s32.totalorder %s321, %s322
      %p336 = scmp.eq.s32.totalorder %s53, 3
      %p337 = por %p335, %p336
      %p339 = scmp.ne.s32.totalorder %s322, %s338
      %p340 = scmp.eq.s32.totalorder %s53, 0
      %p341 = por %p339, %p340
      %s342 = ssub.s32 %s47, %s54
      %p343 = scmp.eq.s32.totalorder %s342, 0
      %s345 = sadd.s32 %s344, 1
      %s346 = scalar_select %p343, %s344, %s345
      %p349 = pneg %p343
      %p350 = scmp.eq.s32.totalorder %s47, 3
      %p351 = por %p349, %p350
      %p352 = scmp.ne.s32.totalorder %s344, %s347
      %p353 = scmp.eq.s32.totalorder %s47, 0
      %p354 = por %p352, %p353
      %p355 = scmp.ne.s32.totalorder %s344, %s347
      %p356 = scmp.eq.s32.totalorder %s52, 3
      %p357 = por %p355, %p356
      %p358 = scmp.ne.s32.totalorder %s347, %s348
      %p359 = scmp.eq.s32.totalorder %s52, 0
      %p360 = por %p358, %p359
      %p361 = scmp.ne.s32.totalorder %s347, %s348
      %p362 = scmp.eq.s32.totalorder %s53, 3
      %p363 = por %p361, %p362
      %p365 = scmp.ne.s32.totalorder %s348, %s364
      %p366 = scmp.eq.s32.totalorder %s53, 0
      %p367 = por %p365, %p366
      %s368 = ssub.s32 %s47, %s54
      %p369 = scmp.eq.s32.totalorder %s368, 0
      %s371 = sadd.s32 %s370, 1
      %s372 = scalar_select %p369, %s370, %s371
      %p375 = pneg %p369
      %p376 = scmp.eq.s32.totalorder %s47, 3
      %p377 = por %p375, %p376
      %p378 = scmp.ne.s32.totalorder %s370, %s373
      %p379 = scmp.eq.s32.totalorder %s47, 0
      %p380 = por %p378, %p379
      %p381 = scmp.ne.s32.totalorder %s370, %s373
      %p382 = scmp.eq.s32.totalorder %s52, 3
      %p383 = por %p381, %p382
      %p384 = scmp.ne.s32.totalorder %s373, %s374
      %p385 = scmp.eq.s32.totalorder %s52, 0
      %p386 = por %p384, %p385
      %p387 = scmp.ne.s32.totalorder %s373, %s374
      %p388 = scmp.eq.s32.totalorder %s53, 3
      %p389 = por %p387, %p388
      %p391 = scmp.ne.s32.totalorder %s374, %s390
      %p392 = scmp.eq.s32.totalorder %s53, 0
      %p393 = por %p391, %p392
      %s394 = ssub.s32 %s47, %s54
      %p395 = scmp.eq.s32.totalorder %s394, 0
      %s397 = sadd.s32 %s396, 1
      %s398 = scalar_select %p395, %s396, %s397
      %p401 = pneg %p395
      %p402 = scmp.eq.s32.totalorder %s47, 3
      %p403 = por %p401, %p402
      %p404 = scmp.ne.s32.totalorder %s396, %s399
      %p405 = scmp.eq.s32.totalorder %s47, 0
      %p406 = por %p404, %p405
      %p407 = scmp.ne.s32.totalorder %s396, %s399
      %p408 = scmp.eq.s32.totalorder %s52, 3
      %p409 = por %p407, %p408
      %p410 = scmp.ne.s32.totalorder %s399, %s400
      %p411 = scmp.eq.s32.totalorder %s52, 0
      %p412 = por %p410, %p411
      %p413 = scmp.ne.s32.totalorder %s399, %s400
      %p414 = scmp.eq.s32.totalorder %s53, 3
      %p415 = por %p413, %p414
      %p417 = scmp.ne.s32.totalorder %s400, %s416
      %p418 = scmp.eq.s32.totalorder %s53, 0
      %p419 = por %p417, %p418
      %s420 = ssub.s32 %s47, %s54
      %p421 = scmp.eq.s32.totalorder %s420, 0
      %s423 = sadd.s32 %s422, 1
      %s424 = scalar_select %p421, %s422, %s423
      %p427 = pneg %p421
      %p428 = scmp.eq.s32.totalorder %s47, 3
      %p429 = por %p427, %p428
      %p430 = scmp.ne.s32.totalorder %s422, %s425
      %p431 = scmp.eq.s32.totalorder %s47, 0
      %p432 = por %p430, %p431
      %p433 = scmp.ne.s32.totalorder %s422, %s425
      %p434 = scmp.eq.s32.totalorder %s52, 3
      %p435 = por %p433, %p434
      %p436 = scmp.ne.s32.totalorder %s425, %s426
      %p437 = scmp.eq.s32.totalorder %s52, 0
      %p438 = por %p436, %p437
      %p439 = scmp.ne.s32.totalorder %s425, %s426
      %p440 = scmp.eq.s32.totalorder %s53, 3
      %p441 = por %p439, %p440
      %p443 = scmp.ne.s32.totalorder %s426, %s442
      %p444 = scmp.eq.s32.totalorder %s53, 0
      %p445 = por %p443, %p444
      %s446 = ssub.s32 %s47, %s54
      %p447 = scmp.eq.s32.totalorder %s446, 0
      %s449 = sadd.s32 %s448, 1
      %s450 = scalar_select %p447, %s448, %s449
      %p453 = pneg %p447
      %p454 = scmp.eq.s32.totalorder %s47, 3
      %p455 = por %p453, %p454
      %p456 = scmp.ne.s32.totalorder %s448, %s451
      %p457 = scmp.eq.s32.totalorder %s47, 0
      %p458 = por %p456, %p457
      %p459 = scmp.ne.s32.totalorder %s448, %s451
      %p460 = scmp.eq.s32.totalorder %s52, 3
      %p461 = por %p459, %p460
      %p462 = scmp.ne.s32.totalorder %s451, %s452
      %p463 = scmp.eq.s32.totalorder %s52, 0
      %p464 = por %p462, %p463
      %p465 = scmp.ne.s32.totalorder %s451, %s452
      %p466 = scmp.eq.s32.totalorder %s53, 3
      %p467 = por %p465, %p466
      %p469 = scmp.ne.s32.totalorder %s452, %s468
      %p470 = scmp.eq.s32.totalorder %s53, 0
      %p471 = por %p469, %p470
      %s473 = sadd.s32 %s472, 1
      %p476 = scmp.eq.s32.totalorder %s47, 3
      %p477 = scmp.ne.s32.totalorder %s472, %s474
      %p478 = scmp.eq.s32.totalorder %s47, 0
      %p479 = por %p477, %p478
      %p480 = scmp.ne.s32.totalorder %s472, %s474
      %p481 = scmp.eq.s32.totalorder %s52, 3
      %p482 = por %p480, %p481
      %p483 = scmp.ne.s32.totalorder %s474, %s475
      %p484 = scmp.eq.s32.totalorder %s52, 0
      %p485 = por %p483, %p484
      %p486 = scmp.ne.s32.totalorder %s474, %s475
      %p487 = scmp.eq.s32.totalorder %s53, 3
      %p488 = por %p486, %p487
      %p490 = scmp.ne.s32.totalorder %s475, %s489
      %p491 = scmp.eq.s32.totalorder %s53, 0
      %p492 = por %p490, %p491
      %s493 = ssub.s32 %s47, %s54
      %p494 = scmp.eq.s32.totalorder %s493, 0
      %s496 = sadd.s32 %s495, 1
      %s497 = scalar_select %p494, %s495, %s496
      %p500 = pneg %p494
      %p501 = scmp.eq.s32.totalorder %s47, 3
      %p502 = por %p500, %p501
      %p503 = scmp.ne.s32.totalorder %s495, %s498
      %p504 = scmp.eq.s32.totalorder %s47, 0
      %p505 = por %p503, %p504
      %p506 = scmp.ne.s32.totalorder %s495, %s498
      %p507 = scmp.eq.s32.totalorder %s52, 3
      %p508 = por %p506, %p507
      %p509 = scmp.ne.s32.totalorder %s498, %s499
      %p510 = scmp.eq.s32.totalorder %s52, 0
      %p511 = por %p509, %p510
      %p512 = scmp.ne.s32.totalorder %s498, %s499
      %p513 = scmp.eq.s32.totalorder %s53, 3
      %p514 = por %p512, %p513
      %p516 = scmp.ne.s32.totalorder %s499, %s515
      %p517 = scmp.eq.s32.totalorder %s53, 0
      %p518 = por %p516, %p517
      %p519 = scmp.le.s32.totalorder 1, %s47
      %p520 = scmp.lt.s32.totalorder %s47, 5
      %p521 = pnand %p519, %p520
      %p522 = pneg %p521
      // Predicated region
      $region9: #{bert_embedding_forward.1} parent=5 // pred_check
        _
      $region10: #{bert_embedding_forward.1} parent=5 // pred_check_branch
        %524 = sbr.rel (%p521) target = $region12
      $region11: #{bert_embedding_forward.1} parent=5 // pred_region
        %s525 = ssub.s32 %s47, 1
        // Predicated region
        $region13: #{bert_embedding_forward.1} parent=11 // pred_check
          %p526 = pneg %p68
        $region14: #{bert_embedding_forward.1} parent=11 // pred_check_branch
          %528 = sbr.rel (%p526) target = $region16
        $region15: #{bert_embedding_forward.1} parent=11 // pred_region
          %530 = vsyncadd [#allocation8], 0
          %s531 = sshll.u32 %s2, 4
          %s532 = int_to_ptr.hbm [resolvable:$true] %s531
          %s533 = sshll.u32 [#allocation7], 4
          %s534 = int_to_ptr.vmem [resolvable:$true] %s533
          %539 = dma.hbm_to_vmem [thread:$0]  %s532, 1664, %s534, [#allocation8], 128, 128, 8
        $region16: #{bert_embedding_forward.1} parent=11 // pred_fallthru
          _
        // Predicated region
        $region17: #{bert_embedding_forward.1} parent=11 // pred_check
          %p540 = pneg %p89
        $region18: #{bert_embedding_forward.1} parent=11 // pred_check_branch
          %542 = sbr.rel (%p540) target = $region20
        $region19: #{bert_embedding_forward.1} parent=11 // pred_region
          _
        $region20: #{bert_embedding_forward.1} parent=11 // pred_fallthru
          _
        // Predicated region
        $region21: #{bert_embedding_forward.1} parent=11 // pred_check
          %p543 = pneg %p110
        $region22: #{bert_embedding_forward.1} parent=11 // pred_check_branch
          %545 = sbr.rel (%p543) target = $region24
        $region23: #{bert_embedding_forward.1} parent=11 // pred_region
          _
        $region24: #{bert_embedding_forward.1} parent=11 // pred_fallthru
          _
        // Predicated region
        $region25: #{bert_embedding_forward.1} parent=11 // pred_check
          %p546 = pneg %p131
        $region26: #{bert_embedding_forward.1} parent=11 // pred_check_branch
          %548 = sbr.rel (%p546) target = $region28
        $region27: #{bert_embedding_forward.1} parent=11 // pred_region
          _
        $region28: #{bert_embedding_forward.1} parent=11 // pred_fallthru
          _
        // Predicated region
        $region29: #{bert_embedding_forward.1} parent=11 // pred_check
          %p549 = pneg %p152
        $region30: #{bert_embedding_forward.1} parent=11 // pred_check_branch
          %551 = sbr.rel (%p549) target = $region32
        $region31: #{bert_embedding_forward.1} parent=11 // pred_region
          _
        $region32: #{bert_embedding_forward.1} parent=11 // pred_fallthru
          _
      $region12: #{bert_embedding_forward.1} parent=5 // pred_fallthru
        _
      %p552 = scmp.lt.s32.totalorder %s47, 4
      // Predicated region
      $region33: #{bert_embedding_forward.1} parent=5 // pred_check
        %p553 = pneg %p552
      $region34: #{bert_embedding_forward.1} parent=5 // pred_check_branch
        %555 = sbr.rel (%p553) target = $region36
      $region35: #{bert_embedding_forward.1} parent=5 // pred_region
        // Predicated region
        $region37: #{bert_embedding_forward.1} parent=35 // pred_check
          %p556 = pneg %p172
        $region38: #{bert_embedding_forward.1} parent=35 // pred_check_branch
          %558 = sbr.rel (%p556) target = $region40
        $region39: #{bert_embedding_forward.1} parent=35 // pred_region
          %s559 = sand.u32 %s47, 1
          %s560 = scalar_lea.sflag [#allocation10], %s559
          %s561 = sand.u32 %s162, 1
          %s562 = smul.addr %s561, 48
          %s563 = scalar_lea.vmem [#allocation9], %s562
          %565 = vsyncadd %s560, 0
          %s566 = smul.addr %s47, 12
          %s567 = smul.addr %s566, 4
          %s568 = scalar_lea.hbm %s7, %s567
          %s569 = sshll.u32 %s568, 4
          %s570 = int_to_ptr.hbm [resolvable:$true] %s569
          %s571 = sshll.u32 %s563, 4
          %s572 = int_to_ptr.vmem [resolvable:$true] %s571
          %577 = dma.hbm_to_vmem [thread:$0]  %s570, 768, %s572, %s560, 64, 64, 4
        $region40: #{bert_embedding_forward.1} parent=35 // pred_fallthru
          _
        // Predicated region
        $region41: #{bert_embedding_forward.1} parent=35 // pred_check
          %p578 = pneg %p198
        $region42: #{bert_embedding_forward.1} parent=35 // pred_check_branch
          %580 = sbr.rel (%p578) target = $region44
        $region43: #{bert_embedding_forward.1} parent=35 // pred_region
          %p581 = scmp.lt.s32.totalorder %s47, 3
          %s582 = scalar_select %p581, %s47, 3
          %s583 = smul.addr %s582, 3
          %s584 = scalar_lea.vmem %s8, %s583
        $region44: #{bert_embedding_forward.1} parent=35 // pred_fallthru
          _
        // Predicated region
        $region45: #{bert_embedding_forward.1} parent=35 // pred_check
          %p585 = pneg %p224
        $region46: #{bert_embedding_forward.1} parent=35 // pred_check_branch
          %587 = sbr.rel (%p585) target = $region48
        $region47: #{bert_embedding_forward.1} parent=35 // pred_region
          %s588 = sand.u32 %s47, 1
          %s589 = scalar_lea.sflag [#allocation10], %s588
          %s590 = sand.u32 %s214, 1
          %s591 = smul.addr %s590, 16
          %s592 = scalar_lea.vmem [#allocation11], %s591
          %594 = vsyncadd %s589, 0
          %s595 = smul.addr %s47, 4
          %s596 = smul.addr %s595, 4
          %s597 = scalar_lea.hbm %s9, %s596
          %s598 = sshll.u32 %s597, 4
          %s599 = int_to_ptr.hbm [resolvable:$true] %s598
          %s600 = sshll.u32 %s592, 4
          %s601 = int_to_ptr.vmem [resolvable:$true] %s600
          %606 = dma.hbm_to_vmem [thread:$0]  %s599, 256, %s601, %s589, 64, 64, 4
        $region48: #{bert_embedding_forward.1} parent=35 // pred_fallthru
          _
        // Predicated region
        $region49: #{bert_embedding_forward.1} parent=35 // pred_check
          %p607 = pneg %p250
        $region50: #{bert_embedding_forward.1} parent=35 // pred_check_branch
          %609 = sbr.rel (%p607) target = $region52
        $region51: #{bert_embedding_forward.1} parent=35 // pred_region
          %p610 = scmp.lt.s32.totalorder %s47, 3
          %s611 = scalar_select %p610, %s47, 3
          %s612 = scalar_lea.vmem %s10, %s611
        $region52: #{bert_embedding_forward.1} parent=35 // pred_fallthru
          _
        // Predicated region
        $region53: #{bert_embedding_forward.1} parent=35 // pred_check
          %p613 = pneg %p276
        $region54: #{bert_embedding_forward.1} parent=35 // pred_check_branch
          %615 = sbr.rel (%p613) target = $region56
        $region55: #{bert_embedding_forward.1} parent=35 // pred_region
          %p616 = scmp.lt.s32.totalorder %s47, 3
          %s617 = scalar_select %p616, %s47, 3
          %s618 = scalar_lea.vmem %s11, %s617
        $region56: #{bert_embedding_forward.1} parent=35 // pred_fallthru
          _
        // Predicated region
        $region57: #{bert_embedding_forward.1} parent=35 // pred_check
          %p619 = pneg %p302
        $region58: #{bert_embedding_forward.1} parent=35 // pred_check_branch
          %621 = sbr.rel (%p619) target = $region60
        $region59: #{bert_embedding_forward.1} parent=35 // pred_region
          %p622 = scmp.lt.s32.totalorder %s47, 3
          %s623 = scalar_select %p622, %s47, 3
          %s624 = scalar_lea.vmem %s12, %s623
        $region60: #{bert_embedding_forward.1} parent=35 // pred_fallthru
          _
        // Predicated region
        $region61: #{bert_embedding_forward.1} parent=35 // pred_check
          %p625 = pneg %p328
        $region62: #{bert_embedding_forward.1} parent=35 // pred_check_branch
          %627 = sbr.rel (%p625) target = $region64
        $region63: #{bert_embedding_forward.1} parent=35 // pred_region
          %s628 = sand.u32 %s47, 1
          %s629 = scalar_lea.sflag [#allocation13], %s628
          %s630 = sand.u32 %s318, 1
          %s631 = smul.addr %s630, 16
          %s632 = scalar_lea.vmem [#allocation12], %s631
          %634 = vsyncadd %s629, 0
          %s635 = smul.addr %s47, 4
          %s636 = smul.addr %s635, 4
          %s637 = scalar_lea.hbm %s13, %s636
          %s638 = sshll.u32 %s637, 4
          %s639 = int_to_ptr.hbm [resolvable:$true] %s638
          %s640 = sshll.u32 %s632, 4
          %s641 = int_to_ptr.vmem [resolvable:$true] %s640
          %646 = dma.hbm_to_vmem [thread:$0]  %s639, 256, %s641, %s629, 64, 64, 4
        $region64: #{bert_embedding_forward.1} parent=35 // pred_fallthru
          _
        // Predicated region
        $region65: #{bert_embedding_forward.1} parent=35 // pred_check
          %p647 = pneg %p354
        $region66: #{bert_embedding_forward.1} parent=35 // pred_check_branch
          %649 = sbr.rel (%p647) target = $region68
        $region67: #{bert_embedding_forward.1} parent=35 // pred_region
          %p650 = scmp.lt.s32.totalorder %s47, 3
          %s651 = scalar_select %p650, %s47, 3
          %s652 = scalar_lea.vmem %s14, %s651
        $region68: #{bert_embedding_forward.1} parent=35 // pred_fallthru
          _
        // Predicated region
        $region69: #{bert_embedding_forward.1} parent=35 // pred_check
          %p653 = pneg %p380
        $region70: #{bert_embedding_forward.1} parent=35 // pred_check_branch
          %655 = sbr.rel (%p653) target = $region72
        $region71: #{bert_embedding_forward.1} parent=35 // pred_region
          %s656 = sand.u32 %s47, 1
          %s657 = scalar_lea.sflag [#allocation13], %s656
          %s658 = sand.u32 %s370, 1
          %s659 = smul.addr %s658, 32
          %s660 = scalar_lea.vmem [#allocation14], %s659
          %662 = vsyncadd %s657, 0
          %s663 = smul.addr %s47, 8
          %s664 = smul.addr %s663, 4
          %s665 = scalar_lea.hbm %s15, %s664
          %s666 = sshll.u32 %s665, 4
          %s667 = int_to_ptr.hbm [resolvable:$true] %s666
          %s668 = sshll.u32 %s660, 4
          %s669 = int_to_ptr.vmem [resolvable:$true] %s668
          %674 = dma.hbm_to_vmem [thread:$0]  %s667, 512, %s669, %s657, 64, 64, 4
        $region72: #{bert_embedding_forward.1} parent=35 // pred_fallthru
          _
        // Predicated region
        $region73: #{bert_embedding_forward.1} parent=35 // pred_check
          %p675 = pneg %p406
        $region74: #{bert_embedding_forward.1} parent=35 // pred_check_branch
          %677 = sbr.rel (%p675) target = $region76
        $region75: #{bert_embedding_forward.1} parent=35 // pred_region
          %p678 = scmp.lt.s32.totalorder %s47, 3
          %s679 = scalar_select %p678, %s47, 3
          %s680 = scalar_lea.vmem %s16, %s679
        $region76: #{bert_embedding_forward.1} parent=35 // pred_fallthru
          _
        // Predicated region
        $region77: #{bert_embedding_forward.1} parent=35 // pred_check
          %p681 = pneg %p432
        $region78: #{bert_embedding_forward.1} parent=35 // pred_check_branch
          %683 = sbr.rel (%p681) target = $region80
        $region79: #{bert_embedding_forward.1} parent=35 // pred_region
          %p684 = scmp.lt.s32.totalorder %s47, 3
          %s685 = scalar_select %p684, %s47, 3
          %s686 = scalar_lea.vmem %s17, %s685
        $region80: #{bert_embedding_forward.1} parent=35 // pred_fallthru
          _
        // Predicated region
        $region81: #{bert_embedding_forward.1} parent=35 // pred_check
          %p687 = pneg %p458
        $region82: #{bert_embedding_forward.1} parent=35 // pred_check_branch
          %689 = sbr.rel (%p687) target = $region84
        $region83: #{bert_embedding_forward.1} parent=35 // pred_region
          %p690 = scmp.lt.s32.totalorder %s47, 3
          %s691 = scalar_select %p690, %s47, 3
          %s692 = scalar_lea.vmem %s18, %s691
        $region84: #{bert_embedding_forward.1} parent=35 // pred_fallthru
          _
      $region36: #{bert_embedding_forward.1} parent=5 // pred_fallthru
        _
      %p693 = scmp.le.s32.totalorder 1, %s47
      %p694 = scmp.lt.s32.totalorder %s47, 5
      %p695 = pnand %p693, %p694
      %p696 = pneg %p695
      // Predicated region
      $region85: #{bert_embedding_forward.1} parent=5 // pred_check
        _
      $region86: #{bert_embedding_forward.1} parent=5 // pred_check_branch
        %698 = sbr.rel (%p695) target = $region88
      $region87: #{bert_embedding_forward.1} parent=5 // pred_region
        %s699 = ssub.s32 %s47, 1
        // Predicated region
        $region89: #{bert_embedding_forward.1} parent=87 // pred_check
          %p700 = pneg %p68
        $region90: #{bert_embedding_forward.1} parent=87 // pred_check_branch
          %702 = sbr.rel (%p700) target = $region92
        $region91: #{bert_embedding_forward.1} parent=87 // pred_region
          %704 = dma.done [#allocation8], 1664
        $region92: #{bert_embedding_forward.1} parent=87 // pred_fallthru
          _
        %s705 = sand.u32 %s52, 1
        %s706 = scalar_lea.sflag [#allocation10], %s705
        %s707 = sand.u32 %s165, 1
        %s708 = smul.addr %s707, 48
        %s709 = scalar_lea.vmem [#allocation9], %s708
        // Predicated region
        $region93: #{bert_embedding_forward.1} parent=87 // pred_check
          %p710 = pneg %p178
        $region94: #{bert_embedding_forward.1} parent=87 // pred_check_branch
          %712 = sbr.rel (%p710) target = $region96
        $region95: #{bert_embedding_forward.1} parent=87 // pred_region
          %714 = dma.done %s706, 768
        $region96: #{bert_embedding_forward.1} parent=87 // pred_fallthru
          _
        %s715 = sand.u32 %s52, 1
        %s716 = scalar_lea.sflag [#allocation10], %s715
        %s717 = sand.u32 %s217, 1
        %s718 = smul.addr %s717, 16
        %s719 = scalar_lea.vmem [#allocation11], %s718
        // Predicated region
        $region97: #{bert_embedding_forward.1} parent=87 // pred_check
          %p720 = pneg %p230
        $region98: #{bert_embedding_forward.1} parent=87 // pred_check_branch
          %722 = sbr.rel (%p720) target = $region100
        $region99: #{bert_embedding_forward.1} parent=87 // pred_region
          %724 = dma.done %s716, 256
        $region100: #{bert_embedding_forward.1} parent=87 // pred_fallthru
          _
        %s725 = sand.u32 %s52, 1
        %s726 = scalar_lea.sflag [#allocation13], %s725
        %s727 = sand.u32 %s321, 1
        %s728 = smul.addr %s727, 16
        %s729 = scalar_lea.vmem [#allocation12], %s728
        // Predicated region
        $region101: #{bert_embedding_forward.1} parent=87 // pred_check
          %p730 = pneg %p334
        $region102: #{bert_embedding_forward.1} parent=87 // pred_check_branch
          %732 = sbr.rel (%p730) target = $region104
        $region103: #{bert_embedding_forward.1} parent=87 // pred_region
          %734 = dma.done %s726, 256
        $region104: #{bert_embedding_forward.1} parent=87 // pred_fallthru
          _
        %s735 = sand.u32 %s52, 1
        %s736 = scalar_lea.sflag [#allocation13], %s735
        %s737 = sand.u32 %s373, 1
        %s738 = smul.addr %s737, 32
        %s739 = scalar_lea.vmem [#allocation14], %s738
        // Predicated region
        $region105: #{bert_embedding_forward.1} parent=87 // pred_check
          %p740 = pneg %p386
        $region106: #{bert_embedding_forward.1} parent=87 // pred_check_branch
          %742 = sbr.rel (%p740) target = $region108
        $region107: #{bert_embedding_forward.1} parent=87 // pred_region
          %744 = dma.done %s736, 512
        $region108: #{bert_embedding_forward.1} parent=87 // pred_fallthru
          _
        %p745 = pneg %p68
        %p746 = pneg %p65
        %p747 = pneg %p89
        %p748 = pneg %p86
        %p749 = pneg %p110
        %p750 = pneg %p107
        %p751 = pneg %p131
        %p752 = pneg %p128
        %p753 = pneg %p152
        %p754 = pneg %p149
        %s755 = sand.u32 %s52, 1
        %s756 = scalar_lea.sflag [#allocation10], %s755
        %s757 = sand.u32 %s165, 1
        %s758 = smul.addr %s757, 48
        %s759 = scalar_lea.vmem [#allocation9], %s758
        %p760 = pneg %p178
        %p761 = pneg %p175
        %p762 = scmp.lt.s32.totalorder %s52, 3
        %s763 = scalar_select %p762, %s52, 3
        %s764 = smul.addr %s763, 3
        %s765 = scalar_lea.vmem %s8, %s764
        %p766 = pneg %p204
        %p767 = pneg %p201
        %s768 = sand.u32 %s52, 1
        %s769 = scalar_lea.sflag [#allocation10], %s768
        %s770 = sand.u32 %s217, 1
        %s771 = smul.addr %s770, 16
        %s772 = scalar_lea.vmem [#allocation11], %s771
        %p773 = pneg %p230
        %p774 = pneg %p227
        %p775 = scmp.lt.s32.totalorder %s52, 3
        %s776 = scalar_select %p775, %s52, 3
        %s777 = scalar_lea.vmem %s10, %s776
        %p778 = pneg %p256
        %p779 = pneg %p253
        %p780 = scmp.lt.s32.totalorder %s52, 3
        %s781 = scalar_select %p780, %s52, 3
        %s782 = scalar_lea.vmem %s11, %s781
        %p783 = pneg %p282
        %p784 = pneg %p279
        %p785 = scmp.lt.s32.totalorder %s52, 3
        %s786 = scalar_select %p785, %s52, 3
        %s787 = scalar_lea.vmem %s12, %s786
        %p788 = pneg %p308
        %p789 = pneg %p305
        %s790 = sand.u32 %s52, 1
        %s791 = scalar_lea.sflag [#allocation13], %s790
        %s792 = sand.u32 %s321, 1
        %s793 = smul.addr %s792, 16
        %s794 = scalar_lea.vmem [#allocation12], %s793
        %p795 = pneg %p334
        %p796 = pneg %p331
        %p797 = scmp.lt.s32.totalorder %s52, 3
        %s798 = scalar_select %p797, %s52, 3
        %s799 = scalar_lea.vmem %s14, %s798
        %p800 = pneg %p360
        %p801 = pneg %p357
        %s802 = sand.u32 %s52, 1
        %s803 = scalar_lea.sflag [#allocation13], %s802
        %s804 = sand.u32 %s373, 1
        %s805 = smul.addr %s804, 32
        %s806 = scalar_lea.vmem [#allocation14], %s805
        %p807 = pneg %p386
        %p808 = pneg %p383
        %p809 = scmp.lt.s32.totalorder %s52, 3
        %s810 = scalar_select %p809, %s52, 3
        %s811 = scalar_lea.vmem %s16, %s810
        %p812 = pneg %p412
        %p813 = pneg %p409
        %p814 = scmp.lt.s32.totalorder %s52, 3
        %s815 = scalar_select %p814, %s52, 3
        %s816 = scalar_lea.vmem %s17, %s815
        %p817 = pneg %p438
        %p818 = pneg %p435
        %p819 = scmp.lt.s32.totalorder %s52, 3
        %s820 = scalar_select %p819, %s52, 3
        %s821 = scalar_lea.vmem %s18, %s820
        %p822 = pneg %p464
        %p823 = pneg %p461
        %p824 = pneg %p485
        %p825 = pneg %p482
        %p826 = pneg %p511
        %p827 = pneg %p508
        %p828 = scmp.lt.s32.totalorder %s52, 3
        %s829 = scalar_select %p828, %s52, 3
        %s830 = smul.addr %s829, 2
        %s831 = scalar_lea.vmem %s20, %s830
        %p832 = scmp.lt.s32.totalorder %s52, 3
        %s833 = scalar_select %p832, %s52, 3
        %s834 = smul.addr %s833, 3
        %s835 = scalar_lea.vmem %s8, %s834
        %p836 = scmp.lt.s32.totalorder %s52, 3
        %s837 = scalar_select %p836, %s52, 3
        %s838 = scalar_lea.vmem %s10, %s837
        %p839 = scmp.lt.s32.totalorder %s52, 3
        %s840 = scalar_select %p839, %s52, 3
        %s841 = scalar_lea.vmem %s11, %s840
        %p842 = scmp.lt.s32.totalorder %s52, 3
        %s843 = scalar_select %p842, %s52, 3
        %s844 = scalar_lea.vmem %s12, %s843
        %p845 = scmp.lt.s32.totalorder %s52, 3
        %s846 = scalar_select %p845, %s52, 3
        %s847 = scalar_lea.vmem %s14, %s846
        %p848 = scmp.lt.s32.totalorder %s52, 3
        %s849 = scalar_select %p848, %s52, 3
        %s850 = scalar_lea.vmem %s16, %s849
        %p851 = scmp.lt.s32.totalorder %s52, 3
        %s852 = scalar_select %p851, %s52, 3
        %s853 = scalar_lea.vmem %s17, %s852
        %p854 = scmp.lt.s32.totalorder %s52, 3
        %s855 = scalar_select %p854, %s52, 3
        %s856 = scalar_lea.vmem %s18, %s855
        %p857 = scmp.lt.s32.totalorder %s52, 3
        %s858 = scalar_select %p857, %s52, 3
        %s859 = smul.addr %s858, 2
        %s860 = scalar_lea.vmem %s20, %s859
        %p862 = scmp.eq.s32.totalorder %s52, 0
        // Predicated region
        $region109: #{bert_embedding_forward.1} parent=87 // pred_check
          %p863 = pneg %p862
        $region110: #{bert_embedding_forward.1} parent=87 // pred_check_branch
          %865 = sbr.rel (%p863) target = $region112
        $region111: #{bert_embedding_forward.1} parent=87 // pred_region
          %s866 = sld [smem:[#allocation5]]
          %s867 = scalar_lea.vmem [#allocation7], %s866
          %v868 = vld [vmem:[%s867] sm:$0x1]
          %s869 = sld [smem:[#allocation5 + $0x1]]
          %s870 = scalar_lea.vmem [#allocation7], %s869
          %v871 = vld [vmem:[%s870] sm:$0x1]
          %s872 = sld [smem:[#allocation5 + $0x2]]
          %s873 = scalar_lea.vmem [#allocation7], %s872
          %v874 = vld [vmem:[%s873] sm:$0x1]
          %s875 = sld [smem:[#allocation5 + $0x3]]
          %s876 = scalar_lea.vmem [#allocation7], %s875
          %v877 = vld [vmem:[%s876] sm:$0x1]
          %s878 = sld [smem:[#allocation5 + $0x4]]
          %s879 = scalar_lea.vmem [#allocation7], %s878
          %v880 = vld [vmem:[%s879] sm:$0x1]
          %s881 = sld [smem:[#allocation5 + $0x5]]
          %s882 = scalar_lea.vmem [#allocation7], %s881
          %v883 = vld [vmem:[%s882] sm:$0x1]
          %s884 = sld [smem:[#allocation5 + $0x6]]
          %s885 = scalar_lea.vmem [#allocation7], %s884
          %v886 = vld [vmem:[%s885] sm:$0x1]
          %s887 = sld [smem:[#allocation5 + $0x7]]
          %s888 = scalar_lea.vmem [#allocation7], %s887
          %v889 = vld [vmem:[%s888] sm:$0x1]
          %s890 = sld [smem:[#allocation5 + $0x8]]
          %s891 = scalar_lea.vmem [#allocation7], %s890
          %v892 = vld [vmem:[%s891] sm:$0x1]
          %s893 = sld [smem:[#allocation5 + $0x9]]
          %s894 = scalar_lea.vmem [#allocation7], %s893
          %v895 = vld [vmem:[%s894] sm:$0x1]
          %s896 = sld [smem:[#allocation5 + $0xa]]
          %s897 = scalar_lea.vmem [#allocation7], %s896
          %v898 = vld [vmem:[%s897] sm:$0x1]
          %s899 = sld [smem:[#allocation5 + $0xb]]
          %s900 = scalar_lea.vmem [#allocation7], %s899
          %v901 = vld [vmem:[%s900] sm:$0x1]
          %s902 = sld [smem:[#allocation5 + $0xc]]
          %s903 = scalar_lea.vmem [#allocation7], %s902
          %v904 = vld [vmem:[%s903] sm:$0x1]
          %s905 = sld [smem:[#allocation5 + $0xd]]
          %s906 = scalar_lea.vmem [#allocation7], %s905
          %v907 = vld [vmem:[%s906] sm:$0x1]
          %s908 = sld [smem:[#allocation5 + $0xe]]
          %s909 = scalar_lea.vmem [#allocation7], %s908
          %v910 = vld [vmem:[%s909] sm:$0x1]
          %s911 = sld [smem:[#allocation5 + $0xf]]
          %s912 = scalar_lea.vmem [#allocation7], %s911
          %v913 = vld [vmem:[%s912] sm:$0x1]
          %v915 = vrot.slane %v871, 7
          %v918 = vrot.slane %v874, 6
          %v921 = vrot.slane %v877, 5
          %v924 = vrot.slane %v880, 4
          %v927 = vrot.slane %v883, 3
          %v930 = vrot.slane %v886, 2
          %v933 = vrot.slane %v889, 1
          %v936 = vrot.slane %v895, 7
          %v939 = vrot.slane %v898, 6
          %v942 = vrot.slane %v901, 5
          %v945 = vrot.slane %v904, 4
          %v948 = vrot.slane %v907, 3
          %v951 = vrot.slane %v910, 2
          %v954 = vrot.slane %v913, 1
          %vm956 = vcmask 1040384
          %v957 = vsel %vm956, %v868, %v915
          %vm958 = vcmask 1041408
          %v959 = vsel %vm958, %v957, %v918
          %vm960 = vcmask 1042432
          %v961 = vsel %vm960, %v959, %v921
          %vm962 = vcmask 1043456
          %v963 = vsel %vm962, %v961, %v924
          %vm964 = vcmask 1044480
          %v965 = vsel %vm964, %v963, %v927
          %vm966 = vcmask 1045504
          %v967 = vsel %vm966, %v965, %v930
          %vm968 = vcmask 1046528
          %v969 = vsel %vm968, %v967, %v933
          %v970 = vsel %vm956, %v892, %v936
          %v971 = vsel %vm958, %v970, %v939
          %v972 = vsel %vm960, %v971, %v942
          %v973 = vsel %vm962, %v972, %v945
          %v974 = vsel %vm964, %v973, %v948
          %v975 = vsel %vm966, %v974, %v951
          %v976 = vsel %vm968, %v975, %v954
          %v977 = vld [vmem:[%s3] sm:$0xff]
          %v978 = vadd.f32 %v969, %v977
          %v979 = vadd.f32 %v976, %v977
          %v980 = vld [vmem:[%s4] sm:$0x1]
          %v981 = vperm.slane %v980, 0
          %v982 = vadd.f32 %v978, %v981
          %v983 = vadd.f32 %v979, %v981
          %v984 = vld [vmem:[%s5] sm:$0x1]
          %v985 = vld [vmem:[%s6] sm:$0x1]
          %vm986 = vcmask 261120
          %v987 = vsel %vm986, %v982, 0.0
          %988 = vadd.xlane.f32.xlu0 %v987
          %v989 = vpop.xlane.xlu0 %988
          %v990 = vsel %vm986, %v983, 0.0
          %991 = vadd.xlane.f32.xlu0 %v990
          %v992 = vpop.xlane.xlu0 %991
          %v993 = vrcp.pop 32.0
          %v994 = vmul.f32 32.0, %v993
          %v995 = vsub.f32 1.0, %v994
          %v996 = vmul.f32 %v993, %v995
          %v997 = vadd.f32 %v993, %v996
          %vm998 = vweird.f32 %v993
          %v999 = vsel %vm998, %v993, %v997
          %v1000 = vmul.f32 %v989, %v999
          %v1001 = vmul.f32 %v992, %v999
          %v1002 = vsub.f32 %v982, %v1000
          %v1003 = vsub.f32 %v983, %v1001
          %v1004 = vmul.f32 %v1002, %v1002
          %v1005 = vmul.f32 %v1003, %v1003
          %v1006 = vsel %vm986, %v1004, 0.0
          %1007 = vadd.xlane.f32.xlu0 %v1006
          %v1008 = vpop.xlane.xlu0 %1007
          %v1009 = vsel %vm986, %v1005, 0.0
          %1010 = vadd.xlane.f32.xlu0 %v1009
          %v1011 = vpop.xlane.xlu0 %1010
          %v1012 = vmul.f32 %v1008, %v999
          %v1013 = vmul.f32 %v1011, %v999
          %v1014 = vadd.f32 %v1012, 1e-12
          %v1015 = vadd.f32 %v1013, 1e-12
          %v1016 = vrsqrt.pop %v1014
          %v1017 = vmul.f32 %v1016, %v1014
          %v1018 = vmul.f32 %v1017, %v1016
          %v1019 = vmul.f32 0.5, %v1018
          %v1020 = vsub.f32 1.5, %v1019
          %v1021 = vmul.f32 %v1016, %v1020
          %vm1022 = vweird.f32 %v1014
          %vm1023 = vweird.f32 %v1016
          %vm1024 = vmor %vm1022, %vm1023
          %v1025 = vsel %vm1024, %v1016, %v1021
          %v1026 = vrsqrt.pop %v1015
          %v1027 = vmul.f32 %v1026, %v1015
          %v1028 = vmul.f32 %v1027, %v1026
          %v1029 = vmul.f32 0.5, %v1028
          %v1030 = vsub.f32 1.5, %v1029
          %v1031 = vmul.f32 %v1026, %v1030
          %vm1032 = vweird.f32 %v1015
          %vm1033 = vweird.f32 %v1026
          %vm1034 = vmor %vm1032, %vm1033
          %v1035 = vsel %vm1034, %v1026, %v1031
          %v1036 = vmul.f32 %v1002, %v1025
          %v1037 = vmul.f32 %v1003, %v1035
          %v1039 = vperm.slane %v984, 0
          %v1041 = vmul.f32 %v1036, %v1039
          %v1042 = vmul.f32 %v1037, %v1039
          %v1044 = vperm.slane %v985, 0
          %v1046 = vadd.f32 %v1041, %v1044
          %v1047 = vadd.f32 %v1042, %v1044
          %1048 = vst.msk [vmem:[#allocation2] sm:$0xff] %vm986, %v1046
          %1049 = vst.msk [vmem:[#allocation2 + $0x8] sm:$0xff] %vm986, %v1047
          %1050 = vst.msk [vmem:[#allocation3] sm:$0xff] %vm986, 0.0
          %1051 = vst.msk [vmem:[#allocation3 + $0x8] sm:$0xff] %vm986, 0.0
        $region112: #{bert_embedding_forward.1} parent=87 // pred_fallthru
          _
        %v1052 = vld [vmem:[#allocation2] sm:$0xff]
        %v1053 = vld [vmem:[#allocation2 + $0x8] sm:$0xff]
        %v1054 = vld [vmem:[%s709] sm:$0xf]
        %v1055 = vld [vmem:[%s709 + $0x4] sm:$0xf]
        %v1056 = vld [vmem:[%s709 + $0x8] sm:$0xf]
        %v1057 = vld [vmem:[%s709 + $0xc] sm:$0xf]
        %v1058 = vld [vmem:[%s709 + $0x10] sm:$0xf]
        %v1059 = vld [vmem:[%s709 + $0x14] sm:$0xf]
        %v1060 = vld [vmem:[%s709 + $0x18] sm:$0xf]
        %v1061 = vld [vmem:[%s709 + $0x1c] sm:$0xf]
        %v1062 = vld [vmem:[%s709 + $0x20] sm:$0xf]
        %v1063 = vld [vmem:[%s709 + $0x24] sm:$0xf]
        %v1064 = vld [vmem:[%s709 + $0x28] sm:$0xf]
        %v1065 = vld [vmem:[%s709 + $0x2c] sm:$0xf]
        %v1066 = vld [vmem:[%s835] sm:$0x1]
        %v1067 = vld [vmem:[%s835 + $0x1] sm:$0x1]
        %v1068 = vld [vmem:[%s835 + $0x2] sm:$0x1]
        %v1069 = vpack.c.bf16 %v1053, %v1052
        %v1071 = vperm.slane %v1066, 0
        %v1077 = vunpack.c.l.b16 %v1054
        %v1078 = vunpack.c.l.b16 %v1055
        %v1079 = vunpack.c.l.b16 %v1056
        %v1080 = vunpack.c.l.b16 %v1057
        %v1081 = vpack.c.b16 %v1078, %v1077
        %v1082 = vpack.c.b16 %v1080, %v1079
        %vm1085 = vcmask 261120
        %v1087 = vsel %vm1085, %v1069, 0
        %1089 = vmatpush.bf16.msra.mxu0 0
        %1090 = vmatpush.bf16.msra.mxu0 0
        %1091 = vmatpush.bf16.msra.mxu0 0
        %1092 = vmatpush.bf16.msra.mxu0 0
        %1093 = vmatpush.bf16.msra.mxu0 0
        %1094 = vmatpush.bf16.msra.mxu0 0
        %1095 = vmatpush.bf16.msra.mxu0 %v1082
        %1096 = vmatpush.bf16.msra.mxu0 %v1081
        %1097 = vmatmul.bf16.gmra.mxu0 %v1087
        %v1098 = vpop.f32.mrf.mxu0
        %v1099 = vadd.f32 %v1071, %v1098
        %v1100 = vpop.f32.mrf.mxu0
        %v1101 = vadd.f32 %v1071, %v1100
        %1102 = vdwg.mxu0
        %v1104 = vperm.slane %v1067, 0
        %v1110 = vunpack.c.l.b16 %v1058
        %v1111 = vunpack.c.l.b16 %v1059
        %v1112 = vunpack.c.l.b16 %v1060
        %v1113 = vunpack.c.l.b16 %v1061
        %v1114 = vpack.c.b16 %v1111, %v1110
        %v1115 = vpack.c.b16 %v1113, %v1112
        %1118 = vmatpush.bf16.msra.mxu0 0
        %1119 = vmatpush.bf16.msra.mxu0 0
        %1120 = vmatpush.bf16.msra.mxu0 0
        %1121 = vmatpush.bf16.msra.mxu0 0
        %1122 = vmatpush.bf16.msra.mxu0 0
        %1123 = vmatpush.bf16.msra.mxu0 0
        %1124 = vmatpush.bf16.msra.mxu0 %v1115
        %1125 = vmatpush.bf16.msra.mxu0 %v1114
        %1126 = vmatmul.bf16.gmra.mxu0 %v1087
        %v1127 = vpop.f32.mrf.mxu0
        %v1128 = vadd.f32 %v1104, %v1127
        %v1129 = vpop.f32.mrf.mxu0
        %v1130 = vadd.f32 %v1104, %v1129
        %1131 = vdwg.mxu0
        %v1133 = vperm.slane %v1068, 0
        %v1139 = vunpack.c.l.b16 %v1062
        %v1140 = vunpack.c.l.b16 %v1063
        %v1141 = vunpack.c.l.b16 %v1064
        %v1142 = vunpack.c.l.b16 %v1065
        %v1143 = vpack.c.b16 %v1140, %v1139
        %v1144 = vpack.c.b16 %v1142, %v1141
        %1147 = vmatpush.bf16.msra.mxu0 0
        %1148 = vmatpush.bf16.msra.mxu0 0
        %1149 = vmatpush.bf16.msra.mxu0 0
        %1150 = vmatpush.bf16.msra.mxu0 0
        %1151 = vmatpush.bf16.msra.mxu0 0
        %1152 = vmatpush.bf16.msra.mxu0 0
        %1153 = vmatpush.bf16.msra.mxu0 %v1144
        %1154 = vmatpush.bf16.msra.mxu0 %v1143
        %1155 = vmatmul.bf16.gmra.mxu0 %v1087
        %v1156 = vpop.f32.mrf.mxu0
        %v1157 = vadd.f32 %v1133, %v1156
        %v1158 = vpop.f32.mrf.mxu0
        %v1159 = vadd.f32 %v1133, %v1158
        %1160 = vdwg.mxu0
        %v1161 = vpack.c.bf16 %v1099, %v1099
        %v1162 = vpack.c.bf16 %v1101, %v1101
        %v1163 = vpack.c.bf16 %v1128, %v1128
        %v1164 = vpack.c.bf16 %v1130, %v1130
        %v1165 = vpack.c.bf16 %v1157, %v1157
        %v1166 = vpack.c.bf16 %v1159, %v1159
        %v1167 = vlaneseq
        %v1168 = vand.u32 %v1167, 127
        %s1169 = sld [smem:[#allocation6]]
        %v1170 = vstv %s1169
        %vm1171 = vcmp.lt.s32.totalorder %v1168, %v1170
        %v1172 = vsel %vm1171, 0.0, -1e+09
        %vm1173 = vcmask 64512
        %v1175 = vsel %vm1173, %v1161, 0
        %v1178 = vsel %vm1173, %v1163, 0
        %1180 = vmatpush.bf16.xpose.msra.mxu0 0
        %1181 = vmatpush.bf16.xpose.msra.mxu0 0
        %1182 = vmatpush.bf16.xpose.msra.mxu0 0
        %1183 = vmatpush.bf16.xpose.msra.mxu0 0
        %1184 = vmatpush.bf16.xpose.msra.mxu0 0
        %1185 = vmatpush.bf16.xpose.msra.mxu0 0
        %1186 = vmatpush.bf16.xpose.msra.mxu0 0
        %1187 = vmatpush.bf16.xpose.msra.mxu0 %v1178
        %1188 = vmatmul.bf16.gmra.mxu0 %v1175
        %v1189 = vpop.f32.mrf.mxu0
        %v1190 = vadd.f32 0.0, %v1189
        %v1191 = vpop.f32.mrf.mxu0
        %1192 = vdwg.mxu0
        %v1193 = vmul.f32 %v1190, 0.35355338
        %v1194 = vadd.f32 %v1193, %v1172
        %v1195 = vsel %vm1173, %v1194, -inf
        %1196 = vmax.xlane.f32.xlu0 %v1195
        %v1197 = vpop.xlane.xlu0 %1196
        %v1198 = vsub.f32 %v1194, %v1197
        %v1199 = vmul.f32 %v1198, 1.442695
        %v1200 = vpow.pop %v1199
        %v1201 = vsel %vm1173, %v1200, 0.0
        %1202 = vadd.xlane.f32.xlu0 %v1201
        %v1203 = vpop.xlane.xlu0 %1202
        %v1204 = vrcp.pop %v1203
        %v1205 = vmul.f32 %v1203, %v1204
        %v1206 = vsub.f32 1.0, %v1205
        %v1207 = vmul.f32 %v1204, %v1206
        %v1208 = vadd.f32 %v1204, %v1207
        %vm1209 = vweird.f32 %v1203
        %vm1210 = vweird.f32 %v1204
        %vm1211 = vmor %vm1209, %vm1210
        %v1212 = vsel %vm1211, %v1204, %v1208
        %v1213 = vand.u32 2147483647, %v1203
        %vm1214 = vcmp.eq.f32.partialorder %v1213, 8.507059e+37
        %v1215 = vand.u32 %v1203, 2147483648
        %v1216 = vor.u32 1.1754944e-38, %v1215
        %v1217 = vsel %vm1214, %v1216, %v1212
        %v1218 = vmul.f32 %v1200, %v1217
        %v1219 = vpack.c.bf16 %v1218, %v1218
        %v1221 = vsel %vm1173, %v1219, 0
        %vm1223 = vcmask 1043456
        %v1225 = vsel %vm1223, %v1165, 0
        %1227 = vmatpush.bf16.msra.mxu0 0
        %1228 = vmatpush.bf16.msra.mxu0 0
        %1229 = vmatpush.bf16.msra.mxu0 0
        %1230 = vmatpush.bf16.msra.mxu0 0
        %1231 = vmatpush.bf16.msra.mxu0 0
        %1232 = vmatpush.bf16.msra.mxu0 0
        %1233 = vmatpush.bf16.msra.mxu0 0
        %1234 = vmatpush.bf16.msra.mxu0 %v1225
        %1235 = vmatmul.bf16.gmra.mxu0 %v1221
        %v1236 = vpop.f32.mrf.mxu0
        %v1237 = vadd.f32 0.0, %v1236
        %v1238 = vpop.f32.mrf.mxu0
        %1239 = vdwg.mxu0
        %v1241 = vunpack.c.l.b16 %v1161
        %v1242 = vpack.c.b16 %v1241, %v1241
        %1243 = vrot.lane.b32.xlu0 %v1242, 120
        %v1244 = vpop.permute.xlu0 %1243
        %v1246 = vunpack.c.l.b16 %v1163
        %v1247 = vpack.c.b16 %v1246, %v1246
        %1248 = vrot.lane.b32.xlu0 %v1247, 120
        %v1249 = vpop.permute.xlu0 %1248
        %v1251 = vsel %vm1173, %v1244, 0
        %v1254 = vsel %vm1173, %v1249, 0
        %1256 = vmatpush.bf16.xpose.msra.mxu0 0
        %1257 = vmatpush.bf16.xpose.msra.mxu0 0
        %1258 = vmatpush.bf16.xpose.msra.mxu0 0
        %1259 = vmatpush.bf16.xpose.msra.mxu0 0
        %1260 = vmatpush.bf16.xpose.msra.mxu0 0
        %1261 = vmatpush.bf16.xpose.msra.mxu0 0
        %1262 = vmatpush.bf16.xpose.msra.mxu0 0
        %1263 = vmatpush.bf16.xpose.msra.mxu0 %v1254
        %1264 = vmatmul.bf16.gmra.mxu0 %v1251
        %v1265 = vpop.f32.mrf.mxu0
        %v1266 = vadd.f32 0.0, %v1265
        %v1267 = vpop.f32.mrf.mxu0
        %1268 = vdwg.mxu0
        %v1269 = vmul.f32 %v1266, 0.35355338
        %v1270 = vadd.f32 %v1269, %v1172
        %v1271 = vsel %vm1173, %v1270, -inf
        %1272 = vmax.xlane.f32.xlu0 %v1271
        %v1273 = vpop.xlane.xlu0 %1272
        %v1274 = vsub.f32 %v1270, %v1273
        %v1275 = vmul.f32 %v1274, 1.442695
        %v1276 = vpow.pop %v1275
        %v1277 = vsel %vm1173, %v1276, 0.0
        %1278 = vadd.xlane.f32.xlu0 %v1277
        %v1279 = vpop.xlane.xlu0 %1278
        %v1280 = vrcp.pop %v1279
        %v1281 = vmul.f32 %v1279, %v1280
        %v1282 = vsub.f32 1.0, %v1281
        %v1283 = vmul.f32 %v1280, %v1282
        %v1284 = vadd.f32 %v1280, %v1283
        %vm1285 = vweird.f32 %v1279
        %vm1286 = vweird.f32 %v1280
        %vm1287 = vmor %vm1285, %vm1286
        %v1288 = vsel %vm1287, %v1280, %v1284
        %v1289 = vand.u32 2147483647, %v1279
        %vm1290 = vcmp.eq.f32.partialorder %v1289, 8.507059e+37
        %v1291 = vand.u32 %v1279, 2147483648
        %v1292 = vor.u32 1.1754944e-38, %v1291
        %v1293 = vsel %vm1290, %v1292, %v1288
        %v1294 = vmul.f32 %v1276, %v1293
        %v1295 = vpack.c.bf16 %v1294, %v1294
        %v1297 = vunpack.c.l.b16 %v1165
        %v1298 = vpack.c.b16 %v1297, %v1297
        %1299 = vrot.lane.b32.xlu0 %v1298, 120
        %v1300 = vpop.permute.xlu0 %1299
        %v1302 = vsel %vm1173, %v1295, 0
        %v1305 = vsel %vm1223, %v1300, 0
        %1307 = vmatpush.bf16.msra.mxu0 0
        %1308 = vmatpush.bf16.msra.mxu0 0
        %1309 = vmatpush.bf16.msra.mxu0 0
        %1310 = vmatpush.bf16.msra.mxu0 0
        %1311 = vmatpush.bf16.msra.mxu0 0
        %1312 = vmatpush.bf16.msra.mxu0 0
        %1313 = vmatpush.bf16.msra.mxu0 0
        %1314 = vmatpush.bf16.msra.mxu0 %v1305
        %1315 = vmatmul.bf16.gmra.mxu0 %v1302
        %v1316 = vpop.f32.mrf.mxu0
        %v1317 = vadd.f32 0.0, %v1316
        %v1318 = vpop.f32.mrf.mxu0
        %1319 = vdwg.mxu0
        %1320 = vrot.lane.b32.xlu0 %v1242, 112
        %v1321 = vpop.permute.xlu0 %1320
        %1322 = vrot.lane.b32.xlu0 %v1247, 112
        %v1323 = vpop.permute.xlu0 %1322
        %v1325 = vsel %vm1173, %v1321, 0
        %v1328 = vsel %vm1173, %v1323, 0
        %1330 = vmatpush.bf16.xpose.msra.mxu0 0
        %1331 = vmatpush.bf16.xpose.msra.mxu0 0
        %1332 = vmatpush.bf16.xpose.msra.mxu0 0
        %1333 = vmatpush.bf16.xpose.msra.mxu0 0
        %1334 = vmatpush.bf16.xpose.msra.mxu0 0
        %1335 = vmatpush.bf16.xpose.msra.mxu0 0
        %1336 = vmatpush.bf16.xpose.msra.mxu0 0
        %1337 = vmatpush.bf16.xpose.msra.mxu0 %v1328
        %1338 = vmatmul.bf16.gmra.mxu0 %v1325
        %v1339 = vpop.f32.mrf.mxu0
        %v1340 = vadd.f32 0.0, %v1339
        %v1341 = vpop.f32.mrf.mxu0
        %1342 = vdwg.mxu0
        %v1343 = vmul.f32 %v1340, 0.35355338
        %v1344 = vadd.f32 %v1343, %v1172
        %v1345 = vsel %vm1173, %v1344, -inf
        %1346 = vmax.xlane.f32.xlu0 %v1345
        %v1347 = vpop.xlane.xlu0 %1346
        %v1348 = vsub.f32 %v1344, %v1347
        %v1349 = vmul.f32 %v1348, 1.442695
        %v1350 = vpow.pop %v1349
        %v1351 = vsel %vm1173, %v1350, 0.0
        %1352 = vadd.xlane.f32.xlu0 %v1351
        %v1353 = vpop.xlane.xlu0 %1352
        %v1354 = vrcp.pop %v1353
        %v1355 = vmul.f32 %v1353, %v1354
        %v1356 = vsub.f32 1.0, %v1355
        %v1357 = vmul.f32 %v1354, %v1356
        %v1358 = vadd.f32 %v1354, %v1357
        %vm1359 = vweird.f32 %v1353
        %vm1360 = vweird.f32 %v1354
        %vm1361 = vmor %vm1359, %vm1360
        %v1362 = vsel %vm1361, %v1354, %v1358
        %v1363 = vand.u32 2147483647, %v1353
        %vm1364 = vcmp.eq.f32.partialorder %v1363, 8.507059e+37
        %v1365 = vand.u32 %v1353, 2147483648
        %v1366 = vor.u32 1.1754944e-38, %v1365
        %v1367 = vsel %vm1364, %v1366, %v1362
        %v1368 = vmul.f32 %v1350, %v1367
        %v1369 = vpack.c.bf16 %v1368, %v1368
        %1370 = vrot.lane.b32.xlu0 %v1298, 112
        %v1371 = vpop.permute.xlu0 %1370
        %v1373 = vsel %vm1173, %v1369, 0
        %v1376 = vsel %vm1223, %v1371, 0
        %1378 = vmatpush.bf16.msra.mxu0 0
        %1379 = vmatpush.bf16.msra.mxu0 0
        %1380 = vmatpush.bf16.msra.mxu0 0
        %1381 = vmatpush.bf16.msra.mxu0 0
        %1382 = vmatpush.bf16.msra.mxu0 0
        %1383 = vmatpush.bf16.msra.mxu0 0
        %1384 = vmatpush.bf16.msra.mxu0 0
        %1385 = vmatpush.bf16.msra.mxu0 %v1376
        %1386 = vmatmul.bf16.gmra.mxu0 %v1373
        %v1387 = vpop.f32.mrf.mxu0
        %v1388 = vadd.f32 0.0, %v1387
        %v1389 = vpop.f32.mrf.mxu0
        %1390 = vdwg.mxu0
        %1391 = vrot.lane.b32.xlu0 %v1242, 104
        %v1392 = vpop.permute.xlu0 %1391
        %1393 = vrot.lane.b32.xlu0 %v1247, 104
        %v1394 = vpop.permute.xlu0 %1393
        %v1396 = vsel %vm1173, %v1392, 0
        %v1399 = vsel %vm1173, %v1394, 0
        %1401 = vmatpush.bf16.xpose.msra.mxu0 0
        %1402 = vmatpush.bf16.xpose.msra.mxu0 0
        %1403 = vmatpush.bf16.xpose.msra.mxu0 0
        %1404 = vmatpush.bf16.xpose.msra.mxu0 0
        %1405 = vmatpush.bf16.xpose.msra.mxu0 0
        %1406 = vmatpush.bf16.xpose.msra.mxu0 0
        %1407 = vmatpush.bf16.xpose.msra.mxu0 0
        %1408 = vmatpush.bf16.xpose.msra.mxu0 %v1399
        %1409 = vmatmul.bf16.gmra.mxu0 %v1396
        %v1410 = vpop.f32.mrf.mxu0
        %v1411 = vadd.f32 0.0, %v1410
        %v1412 = vpop.f32.mrf.mxu0
        %1413 = vdwg.mxu0
        %v1414 = vmul.f32 %v1411, 0.35355338
        %v1415 = vadd.f32 %v1414, %v1172
        %v1416 = vsel %vm1173, %v1415, -inf
        %1417 = vmax.xlane.f32.xlu0 %v1416
        %v1418 = vpop.xlane.xlu0 %1417
        %v1419 = vsub.f32 %v1415, %v1418
        %v1420 = vmul.f32 %v1419, 1.442695
        %v1421 = vpow.pop %v1420
        %v1422 = vsel %vm1173, %v1421, 0.0
        %1423 = vadd.xlane.f32.xlu0 %v1422
        %v1424 = vpop.xlane.xlu0 %1423
        %v1425 = vrcp.pop %v1424
        %v1426 = vmul.f32 %v1424, %v1425
        %v1427 = vsub.f32 1.0, %v1426
        %v1428 = vmul.f32 %v1425, %v1427
        %v1429 = vadd.f32 %v1425, %v1428
        %vm1430 = vweird.f32 %v1424
        %vm1431 = vweird.f32 %v1425
        %vm1432 = vmor %vm1430, %vm1431
        %v1433 = vsel %vm1432, %v1425, %v1429
        %v1434 = vand.u32 2147483647, %v1424
        %vm1435 = vcmp.eq.f32.partialorder %v1434, 8.507059e+37
        %v1436 = vand.u32 %v1424, 2147483648
        %v1437 = vor.u32 1.1754944e-38, %v1436
        %v1438 = vsel %vm1435, %v1437, %v1433
        %v1439 = vmul.f32 %v1421, %v1438
        %v1440 = vpack.c.bf16 %v1439, %v1439
        %1441 = vrot.lane.b32.xlu0 %v1298, 104
        %v1442 = vpop.permute.xlu0 %1441
        %v1444 = vsel %vm1173, %v1440, 0
        %v1447 = vsel %vm1223, %v1442, 0
        %1449 = vmatpush.bf16.msra.mxu0 0
        %1450 = vmatpush.bf16.msra.mxu0 0
        %1451 = vmatpush.bf16.msra.mxu0 0
        %1452 = vmatpush.bf16.msra.mxu0 0
        %1453 = vmatpush.bf16.msra.mxu0 0
        %1454 = vmatpush.bf16.msra.mxu0 0
        %1455 = vmatpush.bf16.msra.mxu0 0
        %1456 = vmatpush.bf16.msra.mxu0 %v1447
        %1457 = vmatmul.bf16.gmra.mxu0 %v1444
        %v1458 = vpop.f32.mrf.mxu0
        %v1459 = vadd.f32 0.0, %v1458
        %v1460 = vpop.f32.mrf.mxu0
        %1461 = vdwg.mxu0
        %1463 = vrot.lane.b32.xlu0 %v1317, 8
        %v1464 = vpop.permute.xlu0 %1463
        %1467 = vrot.lane.b32.xlu0 %v1388, 16
        %v1468 = vpop.permute.xlu0 %1467
        %1471 = vrot.lane.b32.xlu0 %v1459, 24
        %v1472 = vpop.permute.xlu0 %1471
        %v1474 = vsel %vm1173, %v1237, %v1464
        %vm1475 = vcmask 130048
        %v1476 = vsel %vm1475, %v1474, %v1468
        %vm1477 = vcmask 195584
        %v1478 = vsel %vm1477, %v1476, %v1472
        %1480 = vrot.lane.b32.xlu0 %v1294, 8
        %v1481 = vpop.permute.xlu0 %1480
        %1484 = vrot.lane.b32.xlu0 %v1368, 16
        %v1485 = vpop.permute.xlu0 %1484
        %1488 = vrot.lane.b32.xlu0 %v1439, 24
        %v1489 = vpop.permute.xlu0 %1488
        %v1491 = vsel %vm1173, %v1218, %v1481
        %v1492 = vsel %vm1475, %v1491, %v1485
        %v1493 = vsel %vm1477, %v1492, %v1489
        %s1494 = sld [smem:[#allocation6 + $0x1]]
        %v1495 = vstv %s1494
        %vm1496 = vcmp.lt.s32.totalorder %v1168, %v1495
        %v1497 = vsel %vm1496, 0.0, -1e+09
        %v1499 = vsel %vm1173, %v1162, 0
        %v1502 = vsel %vm1173, %v1164, 0
        %1504 = vmatpush.bf16.xpose.msra.mxu0 0
        %1505 = vmatpush.bf16.xpose.msra.mxu0 0
        %1506 = vmatpush.bf16.xpose.msra.mxu0 0
        %1507 = vmatpush.bf16.xpose.msra.mxu0 0
        %1508 = vmatpush.bf16.xpose.msra.mxu0 0
        %1509 = vmatpush.bf16.xpose.msra.mxu0 0
        %1510 = vmatpush.bf16.xpose.msra.mxu0 0
        %1511 = vmatpush.bf16.xpose.msra.mxu0 %v1502
        %1512 = vmatmul.bf16.gmra.mxu0 %v1499
        %v1513 = vpop.f32.mrf.mxu0
        %v1514 = vadd.f32 0.0, %v1513
        %v1515 = vpop.f32.mrf.mxu0
        %1516 = vdwg.mxu0
        %v1517 = vmul.f32 %v1514, 0.35355338
        %v1518 = vadd.f32 %v1517, %v1497
        %v1519 = vsel %vm1173, %v1518, -inf
        %1520 = vmax.xlane.f32.xlu0 %v1519
        %v1521 = vpop.xlane.xlu0 %1520
        %v1522 = vsub.f32 %v1518, %v1521
        %v1523 = vmul.f32 %v1522, 1.442695
        %v1524 = vpow.pop %v1523
        %v1525 = vsel %vm1173, %v1524, 0.0
        %1526 = vadd.xlane.f32.xlu0 %v1525
        %v1527 = vpop.xlane.xlu0 %1526
        %v1528 = vrcp.pop %v1527
        %v1529 = vmul.f32 %v1527, %v1528
        %v1530 = vsub.f32 1.0, %v1529
        %v1531 = vmul.f32 %v1528, %v1530
        %v1532 = vadd.f32 %v1528, %v1531
        %vm1533 = vweird.f32 %v1527
        %vm1534 = vweird.f32 %v1528
        %vm1535 = vmor %vm1533, %vm1534
        %v1536 = vsel %vm1535, %v1528, %v1532
        %v1537 = vand.u32 2147483647, %v1527
        %vm1538 = vcmp.eq.f32.partialorder %v1537, 8.507059e+37
        %v1539 = vand.u32 %v1527, 2147483648
        %v1540 = vor.u32 1.1754944e-38, %v1539
        %v1541 = vsel %vm1538, %v1540, %v1536
        %v1542 = vmul.f32 %v1524, %v1541
        %v1543 = vpack.c.bf16 %v1542, %v1542
        %v1545 = vsel %vm1173, %v1543, 0
        %v1548 = vsel %vm1223, %v1166, 0
        %1550 = vmatpush.bf16.msra.mxu0 0
        %1551 = vmatpush.bf16.msra.mxu0 0
        %1552 = vmatpush.bf16.msra.mxu0 0
        %1553 = vmatpush.bf16.msra.mxu0 0
        %1554 = vmatpush.bf16.msra.mxu0 0
        %1555 = vmatpush.bf16.msra.mxu0 0
        %1556 = vmatpush.bf16.msra.mxu0 0
        %1557 = vmatpush.bf16.msra.mxu0 %v1548
        %1558 = vmatmul.bf16.gmra.mxu0 %v1545
        %v1559 = vpop.f32.mrf.mxu0
        %v1560 = vadd.f32 0.0, %v1559
        %v1561 = vpop.f32.mrf.mxu0
        %1562 = vdwg.mxu0
        %v1564 = vunpack.c.l.b16 %v1162
        %v1565 = vpack.c.b16 %v1564, %v1564
        %1566 = vrot.lane.b32.xlu0 %v1565, 120
        %v1567 = vpop.permute.xlu0 %1566
        %v1569 = vunpack.c.l.b16 %v1164
        %v1570 = vpack.c.b16 %v1569, %v1569
        %1571 = vrot.lane.b32.xlu0 %v1570, 120
        %v1572 = vpop.permute.xlu0 %1571
        %v1574 = vsel %vm1173, %v1567, 0
        %v1577 = vsel %vm1173, %v1572, 0
        %1579 = vmatpush.bf16.xpose.msra.mxu0 0
        %1580 = vmatpush.bf16.xpose.msra.mxu0 0
        %1581 = vmatpush.bf16.xpose.msra.mxu0 0
        %1582 = vmatpush.bf16.xpose.msra.mxu0 0
        %1583 = vmatpush.bf16.xpose.msra.mxu0 0
        %1584 = vmatpush.bf16.xpose.msra.mxu0 0
        %1585 = vmatpush.bf16.xpose.msra.mxu0 0
        %1586 = vmatpush.bf16.xpose.msra.mxu0 %v1577
        %1587 = vmatmul.bf16.gmra.mxu0 %v1574
        %v1588 = vpop.f32.mrf.mxu0
        %v1589 = vadd.f32 0.0, %v1588
        %v1590 = vpop.f32.mrf.mxu0
        %1591 = vdwg.mxu0
        %v1592 = vmul.f32 %v1589, 0.35355338
        %v1593 = vadd.f32 %v1592, %v1497
        %v1594 = vsel %vm1173, %v1593, -inf
        %1595 = vmax.xlane.f32.xlu0 %v1594
        %v1596 = vpop.xlane.xlu0 %1595
        %v1597 = vsub.f32 %v1593, %v1596
        %v1598 = vmul.f32 %v1597, 1.442695
        %v1599 = vpow.pop %v1598
        %v1600 = vsel %vm1173, %v1599, 0.0
        %1601 = vadd.xlane.f32.xlu0 %v1600
        %v1602 = vpop.xlane.xlu0 %1601
        %v1603 = vrcp.pop %v1602
        %v1604 = vmul.f32 %v1602, %v1603
        %v1605 = vsub.f32 1.0, %v1604
        %v1606 = vmul.f32 %v1603, %v1605
        %v1607 = vadd.f32 %v1603, %v1606
        %vm1608 = vweird.f32 %v1602
        %vm1609 = vweird.f32 %v1603
        %vm1610 = vmor %vm1608, %vm1609
        %v1611 = vsel %vm1610, %v1603, %v1607
        %v1612 = vand.u32 2147483647, %v1602
        %vm1613 = vcmp.eq.f32.partialorder %v1612, 8.507059e+37
        %v1614 = vand.u32 %v1602, 2147483648
        %v1615 = vor.u32 1.1754944e-38, %v1614
        %v1616 = vsel %vm1613, %v1615, %v1611
        %v1617 = vmul.f32 %v1599, %v1616
        %v1618 = vpack.c.bf16 %v1617, %v1617
        %v1620 = vunpack.c.l.b16 %v1166
        %v1621 = vpack.c.b16 %v1620, %v1620
        %1622 = vrot.lane.b32.xlu0 %v1621, 120
        %v1623 = vpop.permute.xlu0 %1622
        %v1625 = vsel %vm1173, %v1618, 0
        %v1628 = vsel %vm1223, %v1623, 0
        %1630 = vmatpush.bf16.msra.mxu0 0
        %1631 = vmatpush.bf16.msra.mxu0 0
        %1632 = vmatpush.bf16.msra.mxu0 0
        %1633 = vmatpush.bf16.msra.mxu0 0
        %1634 = vmatpush.bf16.msra.mxu0 0
        %1635 = vmatpush.bf16.msra.mxu0 0
        %1636 = vmatpush.bf16.msra.mxu0 0
        %1637 = vmatpush.bf16.msra.mxu0 %v1628
        %1638 = vmatmul.bf16.gmra.mxu0 %v1625
        %v1639 = vpop.f32.mrf.mxu0
        %v1640 = vadd.f32 0.0, %v1639
        %v1641 = vpop.f32.mrf.mxu0
        %1642 = vdwg.mxu0
        %1643 = vrot.lane.b32.xlu0 %v1565, 112
        %v1644 = vpop.permute.xlu0 %1643
        %1645 = vrot.lane.b32.xlu0 %v1570, 112
        %v1646 = vpop.permute.xlu0 %1645
        %v1648 = vsel %vm1173, %v1644, 0
        %v1651 = vsel %vm1173, %v1646, 0
        %1653 = vmatpush.bf16.xpose.msra.mxu0 0
        %1654 = vmatpush.bf16.xpose.msra.mxu0 0
        %1655 = vmatpush.bf16.xpose.msra.mxu0 0
        %1656 = vmatpush.bf16.xpose.msra.mxu0 0
        %1657 = vmatpush.bf16.xpose.msra.mxu0 0
        %1658 = vmatpush.bf16.xpose.msra.mxu0 0
        %1659 = vmatpush.bf16.xpose.msra.mxu0 0
        %1660 = vmatpush.bf16.xpose.msra.mxu0 %v1651
        %1661 = vmatmul.bf16.gmra.mxu0 %v1648
        %v1662 = vpop.f32.mrf.mxu0
        %v1663 = vadd.f32 0.0, %v1662
        %v1664 = vpop.f32.mrf.mxu0
        %1665 = vdwg.mxu0
        %v1666 = vmul.f32 %v1663, 0.35355338
        %v1667 = vadd.f32 %v1666, %v1497
        %v1668 = vsel %vm1173, %v1667, -inf
        %1669 = vmax.xlane.f32.xlu0 %v1668
        %v1670 = vpop.xlane.xlu0 %1669
        %v1671 = vsub.f32 %v1667, %v1670
        %v1672 = vmul.f32 %v1671, 1.442695
        %v1673 = vpow.pop %v1672
        %v1674 = vsel %vm1173, %v1673, 0.0
        %1675 = vadd.xlane.f32.xlu0 %v1674
        %v1676 = vpop.xlane.xlu0 %1675
        %v1677 = vrcp.pop %v1676
        %v1678 = vmul.f32 %v1676, %v1677
        %v1679 = vsub.f32 1.0, %v1678
        %v1680 = vmul.f32 %v1677, %v1679
        %v1681 = vadd.f32 %v1677, %v1680
        %vm1682 = vweird.f32 %v1676
        %vm1683 = vweird.f32 %v1677
        %vm1684 = vmor %vm1682, %vm1683
        %v1685 = vsel %vm1684, %v1677, %v1681
        %v1686 = vand.u32 2147483647, %v1676
        %vm1687 = vcmp.eq.f32.partialorder %v1686, 8.507059e+37
        %v1688 = vand.u32 %v1676, 2147483648
        %v1689 = vor.u32 1.1754944e-38, %v1688
        %v1690 = vsel %vm1687, %v1689, %v1685
        %v1691 = vmul.f32 %v1673, %v1690
        %v1692 = vpack.c.bf16 %v1691, %v1691
        %1693 = vrot.lane.b32.xlu0 %v1621, 112
        %v1694 = vpop.permute.xlu0 %1693
        %v1696 = vsel %vm1173, %v1692, 0
        %v1699 = vsel %vm1223, %v1694, 0
        %1701 = vmatpush.bf16.msra.mxu0 0
        %1702 = vmatpush.bf16.msra.mxu0 0
        %1703 = vmatpush.bf16.msra.mxu0 0
        %1704 = vmatpush.bf16.msra.mxu0 0
        %1705 = vmatpush.bf16.msra.mxu0 0
        %1706 = vmatpush.bf16.msra.mxu0 0
        %1707 = vmatpush.bf16.msra.mxu0 0
        %1708 = vmatpush.bf16.msra.mxu0 %v1699
        %1709 = vmatmul.bf16.gmra.mxu0 %v1696
        %v1710 = vpop.f32.mrf.mxu0
        %v1711 = vadd.f32 0.0, %v1710
        %v1712 = vpop.f32.mrf.mxu0
        %1713 = vdwg.mxu0
        %1714 = vrot.lane.b32.xlu0 %v1565, 104
        %v1715 = vpop.permute.xlu0 %1714
        %1716 = vrot.lane.b32.xlu0 %v1570, 104
        %v1717 = vpop.permute.xlu0 %1716
        %v1719 = vsel %vm1173, %v1715, 0
        %v1722 = vsel %vm1173, %v1717, 0
        %1724 = vmatpush.bf16.xpose.msra.mxu0 0
        %1725 = vmatpush.bf16.xpose.msra.mxu0 0
        %1726 = vmatpush.bf16.xpose.msra.mxu0 0
        %1727 = vmatpush.bf16.xpose.msra.mxu0 0
        %1728 = vmatpush.bf16.xpose.msra.mxu0 0
        %1729 = vmatpush.bf16.xpose.msra.mxu0 0
        %1730 = vmatpush.bf16.xpose.msra.mxu0 0
        %1731 = vmatpush.bf16.xpose.msra.mxu0 %v1722
        %1732 = vmatmul.bf16.gmra.mxu0 %v1719
        %v1733 = vpop.f32.mrf.mxu0
        %v1734 = vadd.f32 0.0, %v1733
        %v1735 = vpop.f32.mrf.mxu0
        %1736 = vdwg.mxu0
        %v1737 = vmul.f32 %v1734, 0.35355338
        %v1738 = vadd.f32 %v1737, %v1497
        %v1739 = vsel %vm1173, %v1738, -inf
        %1740 = vmax.xlane.f32.xlu0 %v1739
        %v1741 = vpop.xlane.xlu0 %1740
        %v1742 = vsub.f32 %v1738, %v1741
        %v1743 = vmul.f32 %v1742, 1.442695
        %v1744 = vpow.pop %v1743
        %v1745 = vsel %vm1173, %v1744, 0.0
        %1746 = vadd.xlane.f32.xlu0 %v1745
        %v1747 = vpop.xlane.xlu0 %1746
        %v1748 = vrcp.pop %v1747
        %v1749 = vmul.f32 %v1747, %v1748
        %v1750 = vsub.f32 1.0, %v1749
        %v1751 = vmul.f32 %v1748, %v1750
        %v1752 = vadd.f32 %v1748, %v1751
        %vm1753 = vweird.f32 %v1747
        %vm1754 = vweird.f32 %v1748
        %vm1755 = vmor %vm1753, %vm1754
        %v1756 = vsel %vm1755, %v1748, %v1752
        %v1757 = vand.u32 2147483647, %v1747
        %vm1758 = vcmp.eq.f32.partialorder %v1757, 8.507059e+37
        %v1759 = vand.u32 %v1747, 2147483648
        %v1760 = vor.u32 1.1754944e-38, %v1759
        %v1761 = vsel %vm1758, %v1760, %v1756
        %v1762 = vmul.f32 %v1744, %v1761
        %v1763 = vpack.c.bf16 %v1762, %v1762
        %1764 = vrot.lane.b32.xlu0 %v1621, 104
        %v1765 = vpop.permute.xlu0 %1764
        %v1767 = vsel %vm1173, %v1763, 0
        %v1770 = vsel %vm1223, %v1765, 0
        %1772 = vmatpush.bf16.msra.mxu0 0
        %1773 = vmatpush.bf16.msra.mxu0 0
        %1774 = vmatpush.bf16.msra.mxu0 0
        %1775 = vmatpush.bf16.msra.mxu0 0
        %1776 = vmatpush.bf16.msra.mxu0 0
        %1777 = vmatpush.bf16.msra.mxu0 0
        %1778 = vmatpush.bf16.msra.mxu0 0
        %1779 = vmatpush.bf16.msra.mxu0 %v1770
        %1780 = vmatmul.bf16.gmra.mxu0 %v1767
        %v1781 = vpop.f32.mrf.mxu0
        %v1782 = vadd.f32 0.0, %v1781
        %v1783 = vpop.f32.mrf.mxu0
        %1784 = vdwg.mxu0
        %1786 = vrot.lane.b32.xlu0 %v1640, 8
        %v1787 = vpop.permute.xlu0 %1786
        %1790 = vrot.lane.b32.xlu0 %v1711, 16
        %v1791 = vpop.permute.xlu0 %1790
        %1794 = vrot.lane.b32.xlu0 %v1782, 24
        %v1795 = vpop.permute.xlu0 %1794
        %v1797 = vsel %vm1173, %v1560, %v1787
        %v1798 = vsel %vm1475, %v1797, %v1791
        %v1799 = vsel %vm1477, %v1798, %v1795
        %1801 = vrot.lane.b32.xlu0 %v1617, 8
        %v1802 = vpop.permute.xlu0 %1801
        %1805 = vrot.lane.b32.xlu0 %v1691, 16
        %v1806 = vpop.permute.xlu0 %1805
        %1809 = vrot.lane.b32.xlu0 %v1762, 24
        %v1810 = vpop.permute.xlu0 %1809
        %v1812 = vsel %vm1173, %v1542, %v1802
        %v1813 = vsel %vm1475, %v1812, %v1806
        %v1814 = vsel %vm1477, %v1813, %v1810
        %v1816 = vrot.slane %v1493, 1
        %1817 = vrot.lane.b32.xlu0 %v1816, 32
        %v1818 = vpop.permute.xlu0 %1817
        %v1820 = vrot.slane %v1493, 2
        %1821 = vrot.lane.b32.xlu0 %v1820, 64
        %v1822 = vpop.permute.xlu0 %1821
        %v1824 = vrot.slane %v1493, 3
        %1825 = vrot.lane.b32.xlu0 %v1824, 96
        %v1826 = vpop.permute.xlu0 %1825
        %v1828 = vrot.slane %v1493, 4
        %v1830 = vrot.slane %v1493, 5
        %1831 = vrot.lane.b32.xlu0 %v1830, 32
        %v1832 = vpop.permute.xlu0 %1831
        %v1834 = vrot.slane %v1493, 6
        %1835 = vrot.lane.b32.xlu0 %v1834, 64
        %v1836 = vpop.permute.xlu0 %1835
        %v1838 = vrot.slane %v1493, 7
        %1839 = vrot.lane.b32.xlu0 %v1838, 96
        %v1840 = vpop.permute.xlu0 %1839
        %v1842 = vsel %vm1085, %v1493, %v1818
        %vm1843 = vcmask 523264
        %v1844 = vsel %vm1843, %v1842, %v1822
        %vm1845 = vcmask 785408
        %v1846 = vsel %vm1845, %v1844, %v1826
        %v1847 = vsel %vm1085, %v1828, %v1832
        %v1848 = vsel %vm1843, %v1847, %v1836
        %v1849 = vsel %vm1845, %v1848, %v1840
        %v1851 = vrot.slane %v1814, 1
        %1852 = vrot.lane.b32.xlu0 %v1851, 32
        %v1853 = vpop.permute.xlu0 %1852
        %v1855 = vrot.slane %v1814, 2
        %1856 = vrot.lane.b32.xlu0 %v1855, 64
        %v1857 = vpop.permute.xlu0 %1856
        %v1859 = vrot.slane %v1814, 3
        %1860 = vrot.lane.b32.xlu0 %v1859, 96
        %v1861 = vpop.permute.xlu0 %1860
        %v1863 = vrot.slane %v1814, 4
        %v1865 = vrot.slane %v1814, 5
        %1866 = vrot.lane.b32.xlu0 %v1865, 32
        %v1867 = vpop.permute.xlu0 %1866
        %v1869 = vrot.slane %v1814, 6
        %1870 = vrot.lane.b32.xlu0 %v1869, 64
        %v1871 = vpop.permute.xlu0 %1870
        %v1873 = vrot.slane %v1814, 7
        %1874 = vrot.lane.b32.xlu0 %v1873, 96
        %v1875 = vpop.permute.xlu0 %1874
        %v1877 = vsel %vm1085, %v1814, %v1853
        %v1878 = vsel %vm1843, %v1877, %v1857
        %v1879 = vsel %vm1845, %v1878, %v1861
        %v1880 = vsel %vm1085, %v1863, %v1867
        %v1881 = vsel %vm1843, %v1880, %v1871
        %v1882 = vsel %vm1845, %v1881, %v1875
        %v1885 = vrot.slane %v1879, 7
        %v1886 = vrot.slane %v1882, 7
        %vm1889 = vcmask 1040384
        %v1890 = vsel %vm1889, %v1846, %v1885
        %v1891 = vsel %vm1889, %v1849, %v1886
        %v1892 = vpack.c.bf16 %v1891, %v1890
        %v1894 = vrot.slane %v1892, 3
        %v1897 = vsel %vm1889, %v1892, %v1894
        %1899 = vst [vmem:[%s860] sm:$0x3] %v1897
        %v1900 = vpack.c.bf16 %v1799, %v1478
        %v1901 = vld [vmem:[%s719] sm:$0xf]
        %v1902 = vld [vmem:[%s719 + $0x4] sm:$0xf]
        %v1903 = vld [vmem:[%s719 + $0x8] sm:$0xf]
        %v1904 = vld [vmem:[%s719 + $0xc] sm:$0xf]
        %v1905 = vld [vmem:[%s838] sm:$0x1]
        %v1907 = vperm.slane %v1905, 0
        %v1913 = vunpack.c.l.b16 %v1901
        %v1914 = vunpack.c.l.b16 %v1902
        %v1915 = vunpack.c.l.b16 %v1903
        %v1916 = vunpack.c.l.b16 %v1904
        %v1917 = vpack.c.b16 %v1914, %v1913
        %v1918 = vpack.c.b16 %v1916, %v1915
        %v1922 = vsel %vm1085, %v1900, 0
        %1924 = vmatpush.bf16.msra.mxu0 0
        %1925 = vmatpush.bf16.msra.mxu0 0
        %1926 = vmatpush.bf16.msra.mxu0 0
        %1927 = vmatpush.bf16.msra.mxu0 0
        %1928 = vmatpush.bf16.msra.mxu0 0
        %1929 = vmatpush.bf16.msra.mxu0 0
        %1930 = vmatpush.bf16.msra.mxu0 %v1918
        %1931 = vmatpush.bf16.msra.mxu0 %v1917
        %1932 = vmatmul.bf16.gmra.mxu0 %v1922
        %v1933 = vpop.f32.mrf.mxu0
        %v1934 = vadd.f32 %v1907, %v1933
        %v1935 = vpop.f32.mrf.mxu0
        %v1936 = vadd.f32 %v1907, %v1935
        %1937 = vdwg.mxu0
        %v1938 = vadd.f32 %v1934, %v1052
        %v1939 = vadd.f32 %v1936, %v1053
        %v1940 = vld [vmem:[%s841] sm:$0x1]
        %v1941 = vld [vmem:[%s844] sm:$0x1]
        %v1942 = vsel %vm1085, %v1938, 0.0
        %1943 = vadd.xlane.f32.xlu0 %v1942
        %v1944 = vpop.xlane.xlu0 %1943
        %v1945 = vsel %vm1085, %v1939, 0.0
        %1946 = vadd.xlane.f32.xlu0 %v1945
        %v1947 = vpop.xlane.xlu0 %1946
        %v1948 = vrcp.pop 32.0
        %v1949 = vmul.f32 32.0, %v1948
        %v1950 = vsub.f32 1.0, %v1949
        %v1951 = vmul.f32 %v1948, %v1950
        %v1952 = vadd.f32 %v1948, %v1951
        %vm1953 = vweird.f32 %v1948
        %v1954 = vsel %vm1953, %v1948, %v1952
        %v1955 = vmul.f32 %v1944, %v1954
        %v1956 = vmul.f32 %v1947, %v1954
        %v1957 = vsub.f32 %v1938, %v1955
        %v1958 = vsub.f32 %v1939, %v1956
        %v1959 = vmul.f32 %v1957, %v1957
        %v1960 = vmul.f32 %v1958, %v1958
        %v1961 = vsel %vm1085, %v1959, 0.0
        %1962 = vadd.xlane.f32.xlu0 %v1961
        %v1963 = vpop.xlane.xlu0 %1962
        %v1964 = vsel %vm1085, %v1960, 0.0
        %1965 = vadd.xlane.f32.xlu0 %v1964
        %v1966 = vpop.xlane.xlu0 %1965
        %v1967 = vmul.f32 %v1963, %v1954
        %v1968 = vmul.f32 %v1966, %v1954
        %v1969 = vadd.f32 %v1967, 1e-12
        %v1970 = vadd.f32 %v1968, 1e-12
        %v1971 = vrsqrt.pop %v1969
        %v1972 = vmul.f32 %v1971, %v1969
        %v1973 = vmul.f32 %v1972, %v1971
        %v1974 = vmul.f32 0.5, %v1973
        %v1975 = vsub.f32 1.5, %v1974
        %v1976 = vmul.f32 %v1971, %v1975
        %vm1977 = vweird.f32 %v1969
        %vm1978 = vweird.f32 %v1971
        %vm1979 = vmor %vm1977, %vm1978
        %v1980 = vsel %vm1979, %v1971, %v1976
        %v1981 = vrsqrt.pop %v1970
        %v1982 = vmul.f32 %v1981, %v1970
        %v1983 = vmul.f32 %v1982, %v1981
        %v1984 = vmul.f32 0.5, %v1983
        %v1985 = vsub.f32 1.5, %v1984
        %v1986 = vmul.f32 %v1981, %v1985
        %vm1987 = vweird.f32 %v1970
        %vm1988 = vweird.f32 %v1981
        %vm1989 = vmor %vm1987, %vm1988
        %v1990 = vsel %vm1989, %v1981, %v1986
        %v1991 = vmul.f32 %v1957, %v1980
        %v1992 = vmul.f32 %v1958, %v1990
        %v1994 = vperm.slane %v1940, 0
        %v1996 = vmul.f32 %v1991, %v1994
        %v1997 = vmul.f32 %v1992, %v1994
        %v1999 = vperm.slane %v1941, 0
        %v2001 = vadd.f32 %v1996, %v1999
        %v2002 = vadd.f32 %v1997, %v1999
        %v2003 = vpack.c.bf16 %v2002, %v2001
        %v2004 = vld [vmem:[%s729] sm:$0xf]
        %v2005 = vld [vmem:[%s729 + $0x4] sm:$0xf]
        %v2006 = vld [vmem:[%s729 + $0x8] sm:$0xf]
        %v2007 = vld [vmem:[%s729 + $0xc] sm:$0xf]
        %v2008 = vld [vmem:[%s847] sm:$0x1]
        %v2010 = vperm.slane %v2008, 0
        %v2016 = vunpack.c.l.b16 %v2004
        %v2017 = vunpack.c.l.b16 %v2005
        %v2018 = vunpack.c.l.b16 %v2006
        %v2019 = vunpack.c.l.b16 %v2007
        %v2020 = vpack.c.b16 %v2017, %v2016
        %v2021 = vpack.c.b16 %v2019, %v2018
        %v2025 = vsel %vm1085, %v2003, 0
        %2027 = vmatpush.bf16.msra.mxu0 0
        %2028 = vmatpush.bf16.msra.mxu0 0
        %2029 = vmatpush.bf16.msra.mxu0 0
        %2030 = vmatpush.bf16.msra.mxu0 0
        %2031 = vmatpush.bf16.msra.mxu0 0
        %2032 = vmatpush.bf16.msra.mxu0 0
        %2033 = vmatpush.bf16.msra.mxu0 %v2021
        %2034 = vmatpush.bf16.msra.mxu0 %v2020
        %2035 = vmatmul.bf16.gmra.mxu0 %v2025
        %v2036 = vpop.f32.mrf.mxu0
        %v2037 = vadd.f32 %v2010, %v2036
        %v2038 = vpop.f32.mrf.mxu0
        %v2039 = vadd.f32 %v2010, %v2038
        %2040 = vdwg.mxu0
        %v2041 = vmul.f32 %v2037, %v2037
        %v2042 = vmul.f32 %v2039, %v2039
        %v2043 = vmul.f32 %v2037, %v2041
        %v2044 = vmul.f32 %v2039, %v2042
        %v2045 = vmul.f32 %v2043, 0.044715
        %v2046 = vmul.f32 %v2044, 0.044715
        %v2047 = vadd.f32 %v2037, %v2045
        %v2048 = vadd.f32 %v2039, %v2046
        %v2049 = vmul.f32 %v2047, 0.7978846
        %v2050 = vmul.f32 %v2048, 0.7978846
        %v2051 = vtanh.pop %v2049
        %v2052 = vtanh.pop %v2050
        %v2053 = vadd.f32 %v2051, 1.0
        %v2054 = vadd.f32 %v2052, 1.0
        %v2055 = vmul.f32 %v2053, 0.5
        %v2056 = vmul.f32 %v2054, 0.5
        %v2057 = vmul.f32 %v2037, %v2055
        %v2058 = vmul.f32 %v2039, %v2056
        %v2059 = vpack.c.bf16 %v2058, %v2057
        %v2060 = vld [vmem:[%s739] sm:$0xf]
        %v2061 = vld [vmem:[%s739 + $0x4] sm:$0xf]
        %v2062 = vld [vmem:[%s739 + $0x8] sm:$0xf]
        %v2063 = vld [vmem:[%s739 + $0xc] sm:$0xf]
        %v2064 = vld [vmem:[%s739 + $0x10] sm:$0xf]
        %v2065 = vld [vmem:[%s739 + $0x14] sm:$0xf]
        %v2066 = vld [vmem:[%s739 + $0x18] sm:$0xf]
        %v2067 = vld [vmem:[%s739 + $0x1c] sm:$0xf]
        %v2068 = vld [vmem:[%s850] sm:$0x1]
        %v2070 = vperm.slane %v2068, 0
        %v2080 = vunpack.c.l.b16 %v2060
        %v2081 = vunpack.c.l.b16 %v2061
        %v2082 = vunpack.c.l.b16 %v2062
        %v2083 = vunpack.c.l.b16 %v2063
        %v2084 = vunpack.c.l.b16 %v2064
        %v2085 = vunpack.c.l.b16 %v2065
        %v2086 = vunpack.c.l.b16 %v2066
        %v2087 = vunpack.c.l.b16 %v2067
        %v2088 = vpack.c.b16 %v2081, %v2080
        %v2089 = vpack.c.b16 %v2083, %v2082
        %v2090 = vpack.c.b16 %v2085, %v2084
        %v2091 = vpack.c.b16 %v2087, %v2086
        %v2097 = vsel %vm1843, %v2059, 0
        %2099 = vmatpush.bf16.msra.mxu0 0
        %2100 = vmatpush.bf16.msra.mxu0 0
        %2101 = vmatpush.bf16.msra.mxu0 0
        %2102 = vmatpush.bf16.msra.mxu0 0
        %2103 = vmatpush.bf16.msra.mxu0 %v2091
        %2104 = vmatpush.bf16.msra.mxu0 %v2090
        %2105 = vmatpush.bf16.msra.mxu0 %v2089
        %2106 = vmatpush.bf16.msra.mxu0 %v2088
        %2107 = vmatmul.bf16.gmra.mxu0 %v2097
        %v2108 = vpop.f32.mrf.mxu0
        %v2109 = vadd.f32 %v2070, %v2108
        %v2110 = vpop.f32.mrf.mxu0
        %v2111 = vadd.f32 %v2070, %v2110
        %2112 = vdwg.mxu0
        %v2113 = vadd.f32 %v2109, %v2001
        %v2114 = vadd.f32 %v2111, %v2002
        %v2115 = vld [vmem:[%s853] sm:$0x1]
        %v2116 = vld [vmem:[%s856] sm:$0x1]
        %v2117 = vsel %vm1085, %v2113, 0.0
        %2118 = vadd.xlane.f32.xlu0 %v2117
        %v2119 = vpop.xlane.xlu0 %2118
        %v2120 = vsel %vm1085, %v2114, 0.0
        %2121 = vadd.xlane.f32.xlu0 %v2120
        %v2122 = vpop.xlane.xlu0 %2121
        %v2123 = vmul.f32 %v2119, %v1954
        %v2124 = vmul.f32 %v2122, %v1954
        %v2125 = vsub.f32 %v2113, %v2123
        %v2126 = vsub.f32 %v2114, %v2124
        %v2127 = vmul.f32 %v2125, %v2125
        %v2128 = vmul.f32 %v2126, %v2126
        %v2129 = vsel %vm1085, %v2127, 0.0
        %2130 = vadd.xlane.f32.xlu0 %v2129
        %v2131 = vpop.xlane.xlu0 %2130
        %v2132 = vsel %vm1085, %v2128, 0.0
        %2133 = vadd.xlane.f32.xlu0 %v2132
        %v2134 = vpop.xlane.xlu0 %2133
        %v2135 = vmul.f32 %v2131, %v1954
        %v2136 = vmul.f32 %v2134, %v1954
        %v2137 = vadd.f32 %v2135, 1e-12
        %v2138 = vadd.f32 %v2136, 1e-12
        %v2139 = vrsqrt.pop %v2137
        %v2140 = vmul.f32 %v2139, %v2137
        %v2141 = vmul.f32 %v2140, %v2139
        %v2142 = vmul.f32 0.5, %v2141
        %v2143 = vsub.f32 1.5, %v2142
        %v2144 = vmul.f32 %v2139, %v2143
        %vm2145 = vweird.f32 %v2137
        %vm2146 = vweird.f32 %v2139
        %vm2147 = vmor %vm2145, %vm2146
        %v2148 = vsel %vm2147, %v2139, %v2144
        %v2149 = vrsqrt.pop %v2138
        %v2150 = vmul.f32 %v2149, %v2138
        %v2151 = vmul.f32 %v2150, %v2149
        %v2152 = vmul.f32 0.5, %v2151
        %v2153 = vsub.f32 1.5, %v2152
        %v2154 = vmul.f32 %v2149, %v2153
        %vm2155 = vweird.f32 %v2138
        %vm2156 = vweird.f32 %v2149
        %vm2157 = vmor %vm2155, %vm2156
        %v2158 = vsel %vm2157, %v2149, %v2154
        %v2159 = vmul.f32 %v2125, %v2148
        %v2160 = vmul.f32 %v2126, %v2158
        %v2162 = vperm.slane %v2115, 0
        %v2164 = vmul.f32 %v2159, %v2162
        %v2165 = vmul.f32 %v2160, %v2162
        %v2167 = vperm.slane %v2116, 0
        %v2169 = vadd.f32 %v2164, %v2167
        %v2170 = vadd.f32 %v2165, %v2167
        %2171 = vst.msk [vmem:[#allocation2] sm:$0xff] %vm1085, %v2169
        %2172 = vst.msk [vmem:[#allocation2 + $0x8] sm:$0xff] %vm1085, %v2170
        %p2173 = scmp.ge.s32.totalorder %s52, 0
        // Predicated region
        $region113: #{bert_embedding_forward.1} parent=87 // pred_check
          %p2174 = pneg %p2173
        $region114: #{bert_embedding_forward.1} parent=87 // pred_check_branch
          %2176 = sbr.rel (%p2174) target = $region116
        $region115: #{bert_embedding_forward.1} parent=87 // pred_region
          %v2177 = vld [vmem:[#allocation3] sm:$0xff]
          %v2178 = vld [vmem:[#allocation3 + $0x8] sm:$0xff]
          %v2179 = vadd.f32 %v2177, %v2169
          %v2180 = vadd.f32 %v2178, %v2170
          %2181 = vst.msk [vmem:[#allocation3] sm:$0xff] %vm1085, %v2179
          %2182 = vst.msk [vmem:[#allocation3 + $0x8] sm:$0xff] %vm1085, %v2180
        $region116: #{bert_embedding_forward.1} parent=87 // pred_fallthru
          _
        %p2183 = scmp.eq.s32.totalorder %s52, 3
        // Predicated region
        $region117: #{bert_embedding_forward.1} parent=87 // pred_check
          %p2184 = pneg %p2183
        $region118: #{bert_embedding_forward.1} parent=87 // pred_check_branch
          %2186 = sbr.rel (%p2184) target = $region120
        $region119: #{bert_embedding_forward.1} parent=87 // pred_region
          %v2187 = vld [vmem:[#allocation3] sm:$0xff]
          %v2188 = vld [vmem:[#allocation3 + $0x8] sm:$0xff]
          %v2189 = vmul.f32 %v2187, 0.25
          %v2190 = vmul.f32 %v2188, 0.25
          %v2192 = vrot.slane %v2189, 1
          %2193 = vrot.lane.b32.xlu0 %v2192, 32
          %v2194 = vpop.permute.xlu0 %2193
          %v2196 = vrot.slane %v2189, 2
          %2197 = vrot.lane.b32.xlu0 %v2196, 64
          %v2198 = vpop.permute.xlu0 %2197
          %v2200 = vrot.slane %v2189, 3
          %2201 = vrot.lane.b32.xlu0 %v2200, 96
          %v2202 = vpop.permute.xlu0 %2201
          %v2204 = vrot.slane %v2189, 4
          %v2206 = vrot.slane %v2189, 5
          %2207 = vrot.lane.b32.xlu0 %v2206, 32
          %v2208 = vpop.permute.xlu0 %2207
          %v2210 = vrot.slane %v2189, 6
          %2211 = vrot.lane.b32.xlu0 %v2210, 64
          %v2212 = vpop.permute.xlu0 %2211
          %v2214 = vrot.slane %v2189, 7
          %2215 = vrot.lane.b32.xlu0 %v2214, 96
          %v2216 = vpop.permute.xlu0 %2215
          %v2218 = vsel %vm1085, %v2189, %v2194
          %v2219 = vsel %vm1843, %v2218, %v2198
          %v2220 = vsel %vm1845, %v2219, %v2202
          %v2221 = vsel %vm1085, %v2204, %v2208
          %v2222 = vsel %vm1843, %v2221, %v2212
          %v2223 = vsel %vm1845, %v2222, %v2216
          %v2225 = vrot.slane %v2190, 1
          %2226 = vrot.lane.b32.xlu0 %v2225, 32
          %v2227 = vpop.permute.xlu0 %2226
          %v2229 = vrot.slane %v2190, 2
          %2230 = vrot.lane.b32.xlu0 %v2229, 64
          %v2231 = vpop.permute.xlu0 %2230
          %v2233 = vrot.slane %v2190, 3
          %2234 = vrot.lane.b32.xlu0 %v2233, 96
          %v2235 = vpop.permute.xlu0 %2234
          %v2237 = vrot.slane %v2190, 4
          %v2239 = vrot.slane %v2190, 5
          %2240 = vrot.lane.b32.xlu0 %v2239, 32
          %v2241 = vpop.permute.xlu0 %2240
          %v2243 = vrot.slane %v2190, 6
          %2244 = vrot.lane.b32.xlu0 %v2243, 64
          %v2245 = vpop.permute.xlu0 %2244
          %v2247 = vrot.slane %v2190, 7
          %2248 = vrot.lane.b32.xlu0 %v2247, 96
          %v2249 = vpop.permute.xlu0 %2248
          %v2251 = vsel %vm1085, %v2190, %v2227
          %v2252 = vsel %vm1843, %v2251, %v2231
          %v2253 = vsel %vm1845, %v2252, %v2235
          %v2254 = vsel %vm1085, %v2237, %v2241
          %v2255 = vsel %vm1843, %v2254, %v2245
          %v2256 = vsel %vm1845, %v2255, %v2249
          %v2259 = vrot.slane %v2253, 7
          %v2260 = vrot.slane %v2256, 7
          %v2263 = vsel %vm1889, %v2220, %v2259
          %v2264 = vsel %vm1889, %v2223, %v2260
          %v2267 = vrot.slane %v2264, 6
          %vm2268 = vcmask 1041408
          %v2269 = vsel %vm2268, %v2263, %v2267
          %2271 = vst [vmem:[%s19] sm:$0xf] %v2269
        $region120: #{bert_embedding_forward.1} parent=87 // pred_fallthru
          _
        %p2272 = scmp.lt.s32.totalorder %s52, 3
        %s2273 = scalar_select %p2272, %s52, 3
        %s2274 = smul.addr %s2273, 2
        %s2275 = scalar_lea.vmem %s20, %s2274
        // Predicated region
        $region121: #{bert_embedding_forward.1} parent=87 // pred_check
          %p2276 = pneg %p482
        $region122: #{bert_embedding_forward.1} parent=87 // pred_check_branch
          %2278 = sbr.rel (%p2276) target = $region124
        $region123: #{bert_embedding_forward.1} parent=87 // pred_region
          _
        $region124: #{bert_embedding_forward.1} parent=87 // pred_fallthru
          _
        // Predicated region
        $region125: #{bert_embedding_forward.1} parent=87 // pred_check
          %p2279 = pneg %p508
        $region126: #{bert_embedding_forward.1} parent=87 // pred_check_branch
          %2281 = sbr.rel (%p2279) target = $region128
        $region127: #{bert_embedding_forward.1} parent=87 // pred_region
          _
        $region128: #{bert_embedding_forward.1} parent=87 // pred_fallthru
          _
        // Predicated region
        $region129: #{bert_embedding_forward.1} parent=87 // pred_check
          %p2282 = pneg %p482
        $region130: #{bert_embedding_forward.1} parent=87 // pred_check_branch
          %2284 = sbr.rel (%p2282) target = $region132
        $region131: #{bert_embedding_forward.1} parent=87 // pred_region
          _
        $region132: #{bert_embedding_forward.1} parent=87 // pred_fallthru
          _
      $region88: #{bert_embedding_forward.1} parent=5 // pred_fallthru
        _
      %p2285 = scmp.le.s32.totalorder 2, %s47
      // Predicated region
      $region133: #{bert_embedding_forward.1} parent=5 // pred_check
        %p2286 = pneg %p2285
      $region134: #{bert_embedding_forward.1} parent=5 // pred_check_branch
        %2288 = sbr.rel (%p2286) target = $region136
      $region135: #{bert_embedding_forward.1} parent=5 // pred_region
        %s2289 = ssub.s32 %s47, 2
        // Predicated region
        $region137: #{bert_embedding_forward.1} parent=135 // pred_check
          %p2290 = pneg %p514
        $region138: #{bert_embedding_forward.1} parent=135 // pred_check_branch
          %2292 = sbr.rel (%p2290) target = $region140
        $region139: #{bert_embedding_forward.1} parent=135 // pred_region
          %p2293 = scmp.lt.s32.totalorder %s53, 3
          %s2294 = scalar_select %p2293, %s53, 3
          %s2295 = smul.addr %s2294, 2
          %s2296 = scalar_lea.vmem %s20, %s2295
        $region140: #{bert_embedding_forward.1} parent=135 // pred_fallthru
          _
      $region136: #{bert_embedding_forward.1} parent=5 // pred_fallthru
        _
    $region6: #{bert_embedding_forward.1} parent=1 // loop_footer
      %s51 = sadd.s32 1, %s47
    $region7: #{bert_embedding_forward.1} parent=1 // loop_footer_branch
      %46 = sbr.rel target = $region3
    $region8: #{bert_embedding_forward.1} parent=1 // loop_exit
      _
    %2297 = vsyncpa [#allocation8], 1
    %s2298 = scalar_lea.sflag [#allocation8], 1
    %2299 = vsyncpa %s2298, 1
    %2300 = vsyncpa [#allocation10], 1
    %s2301 = scalar_lea.sflag [#allocation10], 1
    %2302 = vsyncpa %s2301, 1
    %2303 = vsyncpa [#allocation13], 1
    %s2304 = scalar_lea.sflag [#allocation13], 1
    %2305 = vsyncpa %s2304, 1

</llo_original>
